<compile_context>
chip_gen: v7x
topology: tpu7x:2x2x1
jax: 0.10.0
libtpu: 0.0.40
codegen_flags: <defaults>
</compile_context>

<pallas_src>
import functools

import jax
import jax.numpy as jnp
from jax import lax
from jax.experimental import pallas as pl
from jax.experimental.pallas import tpu as pltpu


def _round_up(x, m):
    return (x + m - 1) // m * m


def _pick_tile(total, candidates):
    for c in candidates:
        if c <= total and total % c == 0:
            return c
    return total


def _make_recurrent_kernel(n_layers, t_chunk, seq_len, seq_pad):
    """Stacked tanh-RNN over one time chunk; hidden carried in VMEM scratch."""
    guard = seq_pad != seq_len  # only mask the carry when S was padded

    def kernel(emb_ref, h0_ref, *rest):
        # rest = [w_ih_0, w_hh_0, b_0, ..., w_ih_{L-1}, w_hh_{L-1}, b_{L-1},
        #         h_seq_ref, h_final_ref, h_carry_scratch]
        w_refs = rest[: 3 * n_layers]
        h_seq_ref = rest[3 * n_layers]
        h_final_ref = rest[3 * n_layers + 1]
        h_carry = rest[3 * n_layers + 2]

        c = pl.program_id(1)  # time-chunk axis ("arbitrary", innermost)

        @pl.when(c == 0)
        def _():
            h_carry[...] = h0_ref[...]

        b_grp = h_carry.shape[1]
        h_pad = h_carry.shape[2]

        # Hoist the (tiny) bias broadcasts out of the time loop: JAX does not
        # CSE broadcast_in_dim, so doing it per step would cost L VPU broadcasts
        # per timestep on the serial path.
        biases = [
            jnp.broadcast_to(w_refs[3 * l + 2][...], (b_grp, h_pad))
            for l in range(n_layers)
        ]

        def step(t, carry):
            x = emb_ref[t]  # (B_grp, E_pad)
            new_h = []
            for l in range(n_layers):
                # PyTorch nn.RNN: h_l = tanh(x @ W_ih^T + h @ W_hh^T + b_ih + b_hh)
                # Two back-to-back MXU pushes (no lane-offset concat); weight refs
                # are indexed per use so the unrolled loop keeps live ranges short.
                acc = (
                    jnp.dot(x, w_refs[3 * l][...],
                            preferred_element_type=jnp.float32)
                    + jnp.dot(carry[l], w_refs[3 * l + 1][...],
                              preferred_element_type=jnp.float32)
                    + biases[l]
                )
                h_new = jnp.tanh(acc).astype(h_seq_ref.dtype)
                new_h.append(h_new)
                x = h_new
            h_seq_ref[t] = x  # last-layer hidden at this (local) timestep
            if guard:
                # Padded timesteps must not advance the carried hidden state.
                valid = (c * t_chunk + t) < seq_len
                new_h = [jnp.where(valid, hn, ho) for hn, ho in zip(new_h, carry)]
            return tuple(new_h)

        h_init = tuple(h_carry[l] for l in range(n_layers))
        h_out = lax.fori_loop(0, t_chunk, step, h_init, unroll=min(8, t_chunk))
        for l in range(n_layers):
            h_carry[l] = h_out[l]

        @pl.when(c == pl.num_programs(1) - 1)
        def _():
            h_final_ref[...] = h_carry[...]

    return kernel


def _projection_kernel(h_ref, w_ref, b_ref, o_ref):
    # One lane-dense (TM, H) @ (H, TN) tile per grid step; f32 accumulate.
    o_ref[...] = (
        jnp.dot(h_ref[...], w_ref[...], preferred_element_type=jnp.float32)
        + b_ref[...]
    )


def rnn_decoder_forward(x_tokens, hidden, params, *,
                        compute_dtype=jnp.bfloat16, time_chunk=32):
    """Pallas forward. Returns (logits (S,B,V) f32, new_hidden (L,B,H) f32)."""
    # TODO(synk): fuse the embedding gather into the recurrent kernel via
    # PrefetchScalarGridSpec row-gather once E/S are large enough to matter.
    emb = params["embedding"][x_tokens].astype(compute_dtype)
    S, B, E = emb.shape
    L, _, H = hidden.shape
    V = params["w_out"].shape[1]
    f32 = jnp.float32
    isz = jnp.dtype(compute_dtype).itemsize

    # ---- lane/sublane padding: B -> 8 sublanes, E/H/V -> 128 lanes ----------
    B_pad = max(8, _round_up(B, 8))
    E_pad = _round_up(E, 128)
    H_pad = _round_up(H, 128)
    V_pad = _round_up(V, 128)

    # ---- time chunking (bounded VMEM, pipelined emb-in / h_seq-out) ---------
    T_c = max(1, min(time_chunk, S))
    n_chunks = -(-S // T_c)
    S_pad = n_chunks * T_c

    # ---- v7x: leading "parallel" batch-group axis for the 2nd TensorCore ----
    n_bgroups = 2 if (B_pad % 16 == 0) else 1
    B_grp = B_pad // n_bgroups

    emb_p = jnp.pad(emb, ((0, S_pad - S), (0, B_pad - B), (0, E_pad - E)))
    h0_p = jnp.pad(hidden.astype(compute_dtype),
                   ((0, 0), (0, B_pad - B), (0, H_pad - H)))

    weight_inputs, weight_specs = [], []
    for l in range(L):
        in_dim = E if l == 0 else H
        in_pad = E_pad if l == 0 else H_pad
        w_ih = jnp.pad(params["w_ih_t"][l],
                       ((0, in_pad - in_dim), (0, H_pad - H))).astype(compute_dtype)
        w_hh = jnp.pad(params["w_hh_t"][l],
                       ((0, H_pad - H), (0, H_pad - H))).astype(compute_dtype)
        b = jnp.pad(params["b"][l], ((0, 0), (0, H_pad - H))).astype(f32)
        for arr in (w_ih, w_hh, b):
            weight_inputs.append(arr)
            # Constant index_map -> weight stays VMEM-resident, DMA'd once.
            weight_specs.append(pl.BlockSpec(arr.shape, lambda g, c: (0, 0)))

    # ---- explicit VMEM budget (review: re-derive for v7x's 64 MiB) ----------
    rec_bytes = (
        2 * T_c * B_grp * (E_pad + H_pad) * isz       # double-buffered streamed blocks
        + 2 * L * B_grp * H_pad * isz                 # h0 + h_final resident
        + L * B_grp * H_pad * isz                     # carry scratch
        + sum(int(w.size) * w.dtype.itemsize for w in weight_inputs)
    )
    rec_vmem_limit = min(48 << 20, max(2 * rec_bytes + (2 << 20), 16 << 20))

    rec_kernel = _make_recurrent_kernel(L, T_c, S, S_pad)
    h_seq, h_final_p = pl.pallas_call(
        rec_kernel,
        grid=(n_bgroups, n_chunks),
        in_specs=[
            pl.BlockSpec((T_c, B_grp, E_pad), lambda g, c: (c, g, 0)),
            pl.BlockSpec((L, B_grp, H_pad), lambda g, c: (0, g, 0)),
            *weight_specs,
        ],
        out_specs=(
            pl.BlockSpec((T_c, B_grp, H_pad), lambda g, c: (c, g, 0)),
            pl.BlockSpec((L, B_grp, H_pad), lambda g, c: (0, g, 0)),
        ),
        out_shape=(
            jax.ShapeDtypeStruct((S_pad, B_pad, H_pad), compute_dtype),
            jax.ShapeDtypeStruct((L, B_pad, H_pad), compute_dtype),
        ),
        scratch_shapes=[pltpu.VMEM((L, B_grp, H_pad), compute_dtype)],
        compiler_params=pltpu.CompilerParams(
            dimension_semantics=("parallel", "arbitrary"),
            vmem_limit_bytes=int(rec_vmem_limit),
        ),
    )(emb_p, h0_p, *weight_inputs)

    # ---- vocab projection: tiled (rows x V) grid, both axes parallel --------
    w_out_p = jnp.pad(params["w_out"],
                      ((0, H_pad - H), (0, V_pad - V))).astype(compute_dtype)
    b_out_p = jnp.pad(params["b_out"], ((0, 0), (0, V_pad - V))).astype(f32)

    M_rows = S_pad * B_pad
    h2d = h_seq.reshape(M_rows, H_pad)
    TM = _pick_tile(M_rows, (512, 256, 128, 64, 32, 16, 8))
    TN = _pick_tile(V_pad, (1024, 512, 256, 128))

    proj_bytes = 2 * (TM * H_pad * isz + H_pad * TN * isz + TN * 4 + TM * TN * 4)
    proj_vmem_limit = min(48 << 20, max(2 * proj_bytes + (2 << 20), 16 << 20))

    logits_p = pl.pallas_call(
        _projection_kernel,
        grid=(M_rows // TM, V_pad // TN),
        in_specs=[
            pl.BlockSpec((TM, H_pad), lambda i, j: (i, 0)),
            pl.BlockSpec((H_pad, TN), lambda i, j: (0, j)),
            pl.BlockSpec((1, TN), lambda i, j: (0, j)),
        ],
        out_specs=pl.BlockSpec((TM, TN), lambda i, j: (i, j)),
        out_shape=jax.ShapeDtypeStruct((M_rows, V_pad), jnp.float32),
        compiler_params=pltpu.CompilerParams(
            dimension_semantics=("parallel", "parallel"),
            vmem_limit_bytes=int(proj_vmem_limit),
        ),
    )(h2d, w_out_p, b_out_p)

    logits = logits_p.reshape(S_pad, B_pad, V_pad)[:S, :B, :V]
    new_hidden = h_final_p[:, :B, :H].astype(jnp.float32)
    return logits, new_hidden


def reference_forward(x_tokens, hidden, params, compute_dtype=jnp.float32):
    """Pure-JAX reference (same math, same dtype policy) for correctness checks."""
    emb = params["embedding"][x_tokens].astype(compute_dtype)
    L = hidden.shape[0]
    h0 = hidden.astype(compute_dtype)

    def step(h, x_t):
        inp = x_t
        new_h = []
        for l in range(L):
            hl = jnp.tanh(
                jnp.dot(inp, params["w_ih_t"][l].astype(compute_dtype),
                        preferred_element_type=jnp.float32)
                + jnp.dot(h[l], params["w_hh_t"][l].astype(compute_dtype),
                          preferred_element_type=jnp.float32)
                + params["b"][l]
            ).astype(compute_dtype)
            new_h.append(hl)
            inp = hl
        h = jnp.stack(new_h)
        logits = (
            jnp.dot(inp, params["w_out"].astype(compute_dtype),
                    preferred_element_type=jnp.float32)
            + params["b_out"]
        )
        return h, logits

    h_final, logits = jax.lax.scan(step, h0, emb)
    return logits, h_final.astype(jnp.float32)


def init_params(key, vocab_size, n_embed, n_hidden, n_layers):
    """Deterministic parameter init (PyTorch-style uniform(-1/sqrt(H), 1/sqrt(H)))."""
    k = 1.0 / jnp.sqrt(jnp.float32(n_hidden))
    keys = jax.random.split(key, 3 + 4 * n_layers)
    ki = iter(range(len(keys)))

    embedding = jax.random.normal(keys[next(ki)], (vocab_size, n_embed), jnp.float32)

    w_ih_t, w_hh_t, biases = [], [], []
    for _ in range(n_layers):
        in_dim = n_embed if not w_ih_t else n_hidden
        w_ih = jax.random.uniform(keys[next(ki)], (n_hidden, in_dim), jnp.float32, -k, k)
        w_hh = jax.random.uniform(keys[next(ki)], (n_hidden, n_hidden), jnp.float32, -k, k)
        b_ih = jax.random.uniform(keys[next(ki)], (n_hidden,), jnp.float32, -k, k)
        b_hh = jax.random.uniform(keys[next(ki)], (n_hidden,), jnp.float32, -k, k)
        w_ih_t.append(w_ih.T)                              # pre-transpose for x @ W_ih^T
        w_hh_t.append(w_hh.T)                              # pre-transpose for h @ W_hh^T
        biases.append((b_ih + b_hh).reshape(1, n_hidden))  # fold the two biases

    w_out = jax.random.uniform(keys[next(ki)], (vocab_size, n_hidden), jnp.float32, -k, k)
    b_out = jax.random.uniform(keys[next(ki)], (vocab_size,), jnp.float32, -k, k)

    return {
        "embedding": embedding,
        "w_ih_t": w_ih_t,
        "w_hh_t": w_hh_t,
        "b": biases,
        "w_out": w_out.T,               # (nHidden, vocab)
        "b_out": b_out.reshape(1, -1),  # (1, vocab)
    }


def init_hidden(n_layers, batch_size, n_hidden):
    # matches RNNDecoder.init_hidden
    return jnp.zeros((n_layers, batch_size, n_hidden), dtype=jnp.float32)


if __name__ == "__main__":
    vocab_size, n_embed, n_hidden, n_layers = 64, 32, 32, 2
    batch, seq = 2, 8

    key = jax.random.PRNGKey(0)
    pkey, xkey = jax.random.split(key)
    params = init_params(pkey, vocab_size, n_embed, n_hidden, n_layers)

    x_tokens = jax.random.randint(xkey, (seq, batch), 0, vocab_size, dtype=jnp.int32)
    hidden = init_hidden(n_layers, batch, n_hidden)

    # 1) strict math check: f32 kernel path vs f32 reference
    fwd_f32 = jax.jit(functools.partial(rnn_decoder_forward, compute_dtype=jnp.float32))
    logits32, h32 = fwd_f32(x_tokens, hidden, params)
    jax.block_until_ready((logits32, h32))
    ref_logits, ref_h = reference_forward(x_tokens, hidden, params, jnp.float32)
    assert logits32.shape == (seq, batch, vocab_size)
    assert h32.shape == (n_layers, batch, n_hidden)
    assert jnp.allclose(logits32, ref_logits, atol=1e-4, rtol=1e-4)
    assert jnp.allclose(h32, ref_h, atol=1e-4, rtol=1e-4)

    # 2) default bf16 (MXU-native) path vs a reference with the same dtype policy
    fwd_bf16 = jax.jit(rnn_decoder_forward)
    logits_bf, h_bf = fwd_bf16(x_tokens, hidden, params)
    jax.block_until_ready((logits_bf, h_bf))
    ref_logits_bf, ref_h_bf = reference_forward(x_tokens, hidden, params, jnp.bfloat16)
    assert jnp.allclose(logits_bf, ref_logits_bf, atol=2e-2, rtol=2e-2)
    assert jnp.allclose(h_bf, ref_h_bf, atol=2e-2, rtol=2e-2)

    # TODO(synk): the module's `loss` (CrossEntropyLoss) is a training-time helper,
    # left in plain JAX / out of scope for the forward kernel.
    print("KERNEL_OK")
</pallas_src>

<mosaic_0001>
module attributes {stable_mosaic.version = 11 : i64} {
  func.func @_projection_kernel(%arg0: i32, %arg1: i32, %arg2: memref<64x128xf32, #tpu.memory_space<vmem>>, %arg3: memref<128x128xf32, #tpu.memory_space<vmem>>, %arg4: memref<1x128xf32, #tpu.memory_space<vmem>>, %arg5: memref<64x128xf32, #tpu.memory_space<vmem>>) attributes {dimension_semantics = [#tpu.dimension_semantics<parallel>, #tpu.dimension_semantics<parallel>], iteration_bounds = array<i64: 1, 1>, scalar_prefetch = 0 : i64, scratch_operands = 0 : i64, tpu.core_type = #tpu.core_type<tc>, window_params = [{transform_indices = @transform_0, window_bounds = array<i64: 64, 128>}, {transform_indices = @transform_1, window_bounds = array<i64: 128, 128>}, {transform_indices = @transform_2, window_bounds = array<i64: 1, 128>}, {transform_indices = @transform_3, window_bounds = array<i64: 64, 128>}]} {
    %c0 = arith.constant 0 : index
    %c0_0 = arith.constant 0 : index
    %0 = vector.load %arg2[%c0, %c0_0] : memref<64x128xf32, #tpu.memory_space<vmem>>, vector<64x128xf32>
    %c0_1 = arith.constant 0 : index
    %c0_2 = arith.constant 0 : index
    %1 = vector.load %arg3[%c0_1, %c0_2] : memref<128x128xf32, #tpu.memory_space<vmem>>, vector<128x128xf32>
    %cst = arith.constant dense<0.000000e+00> : vector<64x128xf32>
    %2 = tpu.matmul %0, %1, %cst {dimension_numbers = #tpu.dot_dimension_numbers<[1], [0], [0], [1], [0, 0, 1, 1], [], []>} : vector<64x128xf32>, vector<128x128xf32>, vector<64x128xf32> -> vector<64x128xf32>
    %c0_3 = arith.constant 0 : index
    %c0_4 = arith.constant 0 : index
    %3 = vector.load %arg4[%c0_3, %c0_4] : memref<1x128xf32, #tpu.memory_space<vmem>>, vector<1x128xf32>
    %4 = vector.broadcast %3 : vector<1x128xf32> to vector<64x128xf32>
    %5 = arith.addf %2, %4 : vector<64x128xf32>
    %c0_5 = arith.constant 0 : index
    %c0_6 = arith.constant 0 : index
    %6 = vector.load %arg5[%c0_5, %c0_6] : memref<64x128xf32, #tpu.memory_space<vmem>>, vector<64x128xf32>
    tpu.vector_store %arg5[%c0_5, %c0_6], %5 {strides = array<i32>} : memref<64x128xf32, #tpu.memory_space<vmem>>, vector<64x128xf32>,
    return
  }
  func.func @transform_0(%arg0: i32, %arg1: i32) -> (i32, i32) {
    %c0_i32 = arith.constant 0 : i32
    %c0_i32_0 = arith.constant 0 : i32
    return %arg0, %c0_i32 : i32, i32
  }
  func.func @transform_1(%arg0: i32, %arg1: i32) -> (i32, i32) {
    %c0_i32 = arith.constant 0 : i32
    %c0_i32_0 = arith.constant 0 : i32
    return %c0_i32, %arg1 : i32, i32
  }
  func.func @transform_2(%arg0: i32, %arg1: i32) -> (i32, i32) {
    %c0_i32 = arith.constant 0 : i32
    %c0_i32_0 = arith.constant 0 : i32
    return %c0_i32, %arg1 : i32, i32
  }
  func.func @transform_3(%arg0: i32, %arg1: i32) -> (i32, i32) {
    %c0_i32 = arith.constant 0 : i32
    return %arg0, %arg1 : i32, i32
  }
}

module attributes {stable_mosaic.version = 11 : i64} {
  func.func @kernel(%arg0: i32, %arg1: i32, %arg2: memref<8x8x128xf32, #tpu.memory_space<vmem>>, %arg3: memref<2x8x128xf32, #tpu.memory_space<vmem>>, %arg4: memref<128x128xf32, #tpu.memory_space<vmem>>, %arg5: memref<128x128xf32, #tpu.memory_space<vmem>>, %arg6: memref<1x128xf32, #tpu.memory_space<vmem>>, %arg7: memref<128x128xf32, #tpu.memory_space<vmem>>, %arg8: memref<128x128xf32, #tpu.memory_space<vmem>>, %arg9: memref<1x128xf32, #tpu.memory_space<vmem>>, %arg10: memref<8x8x128xf32, #tpu.memory_space<vmem>>, %arg11: memref<2x8x128xf32, #tpu.memory_space<vmem>>, %arg12: memref<2x8x128xf32, #tpu.memory_space<vmem>>) attributes {dimension_semantics = [#tpu.dimension_semantics<parallel>, #tpu.dimension_semantics<arbitrary>], iteration_bounds = array<i64: 1, 1>, scalar_prefetch = 0 : i64, scratch_operands = 1 : i64, tpu.core_type = #tpu.core_type<tc>, window_params = [{transform_indices = @transform_0, window_bounds = array<i64: 8, 8, 128>}, {transform_indices = @transform_1, window_bounds = array<i64: 2, 8, 128>}, {pipeline_mode = #tpu.pipeline_mode<synchronous>, transform_indices = @transform_2, window_bounds = array<i64: 128, 128>}, {pipeline_mode = #tpu.pipeline_mode<synchronous>, transform_indices = @transform_3, window_bounds = array<i64: 128, 128>}, {pipeline_mode = #tpu.pipeline_mode<synchronous>, transform_indices = @transform_4, window_bounds = array<i64: 1, 128>}, {pipeline_mode = #tpu.pipeline_mode<synchronous>, transform_indices = @transform_5, window_bounds = array<i64: 128, 128>}, {pipeline_mode = #tpu.pipeline_mode<synchronous>, transform_indices = @transform_6, window_bounds = array<i64: 128, 128>}, {pipeline_mode = #tpu.pipeline_mode<synchronous>, transform_indices = @transform_7, window_bounds = array<i64: 1, 128>}, {transform_indices = @transform_8, window_bounds = array<i64: 8, 8, 128>}, {transform_indices = @transform_9, window_bounds = array<i64: 2, 8, 128>}]} {
    %c0_i32 = arith.constant 0 : i32
    %0 = arith.cmpi eq, %arg1, %c0_i32 : i32
    %1 = arith.extui %0 : i1 to i32
    %c0_i32_0 = arith.constant 0 : i32
    %2 = arith.cmpi ne, %1, %c0_i32_0 : i32
    scf.if %2 {
      %c0_145 = arith.constant 0 : index
      %c0_146 = arith.constant 0 : index
      %c0_147 = arith.constant 0 : index
      %190 = vector.load %arg3[%c0_145, %c0_146, %c0_147] : memref<2x8x128xf32, #tpu.memory_space<vmem>>, vector<2x8x128xf32>
      %c0_148 = arith.constant 0 : index
      %c0_149 = arith.constant 0 : index
      %c0_150 = arith.constant 0 : index
      %191 = vector.load %arg12[%c0_148, %c0_149, %c0_150] : memref<2x8x128xf32, #tpu.memory_space<vmem>>, vector<2x8x128xf32>
      tpu.vector_store %arg12[%c0_148, %c0_149, %c0_150], %190 {strides = array<i32>} : memref<2x8x128xf32, #tpu.memory_space<vmem>>, vector<2x8x128xf32>,
    } else {
    }
    %c0 = arith.constant 0 : index
    %c0_1 = arith.constant 0 : index
    %3 = vector.load %arg6[%c0, %c0_1] : memref<1x128xf32, #tpu.memory_space<vmem>>, vector<1x128xf32>
    %4 = vector.shape_cast %3 : vector<1x128xf32> to vector<1x128xf32>
    %5 = vector.broadcast %4 : vector<1x128xf32> to vector<8x128xf32>
    %c0_2 = arith.constant 0 : index
    %c0_3 = arith.constant 0 : index
    %6 = vector.load %arg9[%c0_2, %c0_3] : memref<1x128xf32, #tpu.memory_space<vmem>>, vector<1x128xf32>
    %7 = vector.shape_cast %6 : vector<1x128xf32> to vector<1x128xf32>
    %8 = vector.broadcast %7 : vector<1x128xf32> to vector<8x128xf32>
    %c0_4 = arith.constant 0 : index
    %c0_5 = arith.constant 0 : index
    %c0_6 = arith.constant 0 : index
    %9 = vector.load %arg12[%c0_4, %c0_5, %c0_6] : memref<2x8x128xf32, #tpu.memory_space<vmem>>, vector<1x8x128xf32>
    %10 = vector.shape_cast %9 : vector<1x8x128xf32> to vector<8x128xf32>
    %c1 = arith.constant 1 : index
    %c0_7 = arith.constant 0 : index
    %c0_8 = arith.constant 0 : index
    %11 = vector.load %arg12[%c1, %c0_7, %c0_8] : memref<2x8x128xf32, #tpu.memory_space<vmem>>, vector<1x8x128xf32>
    %12 = vector.shape_cast %11 : vector<1x8x128xf32> to vector<8x128xf32>
    %c0_i32_9 = arith.constant 0 : i32
    %13 = arith.index_cast %c0_i32_9 : i32 to index
    %c0_10 = arith.constant 0 : index
    %c0_11 = arith.constant 0 : index
    %14 = vector.load %arg2[%13, %c0_10, %c0_11] : memref<8x8x128xf32, #tpu.memory_space<vmem>>, vector<1x8x128xf32>
    %15 = vector.shape_cast %14 : vector<1x8x128xf32> to vector<8x128xf32>
    %c0_12 = arith.constant 0 : index
    %c0_13 = arith.constant 0 : index
    %16 = vector.load %arg4[%c0_12, %c0_13] : memref<128x128xf32, #tpu.memory_space<vmem>>, vector<128x128xf32>
    %cst = arith.constant dense<0.000000e+00> : vector<8x128xf32>
    %17 = tpu.matmul %15, %16, %cst {dimension_numbers = #tpu.dot_dimension_numbers<[1], [0], [0], [1], [0, 0, 1, 1], [], []>} : vector<8x128xf32>, vector<128x128xf32>, vector<8x128xf32> -> vector<8x128xf32>
    %c0_14 = arith.constant 0 : index
    %c0_15 = arith.constant 0 : index
    %18 = vector.load %arg5[%c0_14, %c0_15] : memref<128x128xf32, #tpu.memory_space<vmem>>, vector<128x128xf32>
    %cst_16 = arith.constant dense<0.000000e+00> : vector<8x128xf32>
    %19 = tpu.matmul %10, %18, %cst_16 {dimension_numbers = #tpu.dot_dimension_numbers<[1], [0], [0], [1], [0, 0, 1, 1], [], []>} : vector<8x128xf32>, vector<128x128xf32>, vector<8x128xf32> -> vector<8x128xf32>
    %20 = arith.addf %17, %19 : vector<8x128xf32>
    %21 = arith.addf %20, %5 : vector<8x128xf32>
    %22 = math.tanh %21 : vector<8x128xf32>
    %c0_17 = arith.constant 0 : index
    %c0_18 = arith.constant 0 : index
    %23 = vector.load %arg7[%c0_17, %c0_18] : memref<128x128xf32, #tpu.memory_space<vmem>>, vector<128x128xf32>
    %cst_19 = arith.constant dense<0.000000e+00> : vector<8x128xf32>
    %24 = tpu.matmul %22, %23, %cst_19 {dimension_numbers = #tpu.dot_dimension_numbers<[1], [0], [0], [1], [0, 0, 1, 1], [], []>} : vector<8x128xf32>, vector<128x128xf32>, vector<8x128xf32> -> vector<8x128xf32>
    %c0_20 = arith.constant 0 : index
    %c0_21 = arith.constant 0 : index
    %25 = vector.load %arg8[%c0_20, %c0_21] : memref<128x128xf32, #tpu.memory_space<vmem>>, vector<128x128xf32>
    %cst_22 = arith.constant dense<0.000000e+00> : vector<8x128xf32>
    %26 = tpu.matmul %12, %25, %cst_22 {dimension_numbers = #tpu.dot_dimension_numbers<[1], [0], [0], [1], [0, 0, 1, 1], [], []>} : vector<8x128xf32>, vector<128x128xf32>, vector<8x128xf32> -> vector<8x128xf32>
    %27 = arith.addf %24, %26 : vector<8x128xf32>
    %28 = arith.addf %27, %8 : vector<8x128xf32>
    %29 = math.tanh %28 : vector<8x128xf32>
    %30 = arith.index_cast %c0_i32_9 : i32 to index
    %c0_23 = arith.constant 0 : index
    %c0_24 = arith.constant 0 : index
    %31 = vector.load %arg10[%30, %c0_23, %c0_24] : memref<8x8x128xf32, #tpu.memory_space<vmem>>, vector<1x8x128xf32>
    %32 = vector.shape_cast %31 : vector<1x8x128xf32> to vector<8x128xf32>
    %33 = vector.shape_cast %29 : vector<8x128xf32> to vector<1x8x128xf32>
    tpu.vector_store %arg10[%30, %c0_23, %c0_24], %33 {strides = array<i32>} : memref<8x8x128xf32, #tpu.memory_space<vmem>>, vector<1x8x128xf32>,
    %c1_i32 = arith.constant 1 : i32
    %34 = arith.index_cast %c1_i32 : i32 to index
    %c0_25 = arith.constant 0 : index
    %c0_26 = arith.constant 0 : index
    %35 = vector.load %arg2[%34, %c0_25, %c0_26] : memref<8x8x128xf32, #tpu.memory_space<vmem>>, vector<1x8x128xf32>
    %36 = vector.shape_cast %35 : vector<1x8x128xf32> to vector<8x128xf32>
    %c0_27 = arith.constant 0 : index
    %c0_28 = arith.constant 0 : index
    %37 = vector.load %arg4[%c0_27, %c0_28] : memref<128x128xf32, #tpu.memory_space<vmem>>, vector<128x128xf32>
    %cst_29 = arith.constant dense<0.000000e+00> : vector<8x128xf32>
    %38 = tpu.matmul %36, %37, %cst_29 {dimension_numbers = #tpu.dot_dimension_numbers<[1], [0], [0], [1], [0, 0, 1, 1], [], []>} : vector<8x128xf32>, vector<128x128xf32>, vector<8x128xf32> -> vector<8x128xf32>
    %c0_30 = arith.constant 0 : index
    %c0_31 = arith.constant 0 : index
    %39 = vector.load %arg5[%c0_30, %c0_31] : memref<128x128xf32, #tpu.memory_space<vmem>>, vector<128x128xf32>
    %cst_32 = arith.constant dense<0.000000e+00> : vector<8x128xf32>
    %40 = tpu.matmul %22, %39, %cst_32 {dimension_numbers = #tpu.dot_dimension_numbers<[1], [0], [0], [1], [0, 0, 1, 1], [], []>} : vector<8x128xf32>, vector<128x128xf32>, vector<8x128xf32> -> vector<8x128xf32>
    %41 = arith.addf %38, %40 : vector<8x128xf32>
    %42 = arith.addf %41, %5 : vector<8x128xf32>
    %43 = math.tanh %42 : vector<8x128xf32>
    %c0_33 = arith.constant 0 : index
    %c0_34 = arith.constant 0 : index
    %44 = vector.load %arg7[%c0_33, %c0_34] : memref<128x128xf32, #tpu.memory_space<vmem>>, vector<128x128xf32>
    %cst_35 = arith.constant dense<0.000000e+00> : vector<8x128xf32>
    %45 = tpu.matmul %43, %44, %cst_35 {dimension_numbers = #tpu.dot_dimension_numbers<[1], [0], [0], [1], [0, 0, 1, 1], [], []>} : vector<8x128xf32>, vector<128x128xf32>, vector<8x128xf32> -> vector<8x128xf32>
    %c0_36 = arith.constant 0 : index
    %c0_37 = arith.constant 0 : index
    %46 = vector.load %arg8[%c0_36, %c0_37] : memref<128x128xf32, #tpu.memory_space<vmem>>, vector<128x128xf32>
    %cst_38 = arith.constant dense<0.000000e+00> : vector<8x128xf32>
    %47 = tpu.matmul %29, %46, %cst_38 {dimension_numbers = #tpu.dot_dimension_numbers<[1], [0], [0], [1], [0, 0, 1, 1], [], []>} : vector<8x128xf32>, vector<128x128xf32>, vector<8x128xf32> -> vector<8x128xf32>
    %48 = arith.addf %45, %47 : vector<8x128xf32>
    %49 = arith.addf %48, %8 : vector<8x128xf32>
    %50 = math.tanh %49 : vector<8x128xf32>
    %51 = arith.index_cast %c1_i32 : i32 to index
    %c0_39 = arith.constant 0 : index
    %c0_40 = arith.constant 0 : index
    %52 = vector.load %arg10[%51, %c0_39, %c0_40] : memref<8x8x128xf32, #tpu.memory_space<vmem>>, vector<1x8x128xf32>
    %53 = vector.shape_cast %52 : vector<1x8x128xf32> to vector<8x128xf32>
    %54 = vector.shape_cast %50 : vector<8x128xf32> to vector<1x8x128xf32>
    tpu.vector_store %arg10[%51, %c0_39, %c0_40], %54 {strides = array<i32>} : memref<8x8x128xf32, #tpu.memory_space<vmem>>, vector<1x8x128xf32>,
    %c2_i32 = arith.constant 2 : i32
    %55 = arith.index_cast %c2_i32 : i32 to index
    %c0_41 = arith.constant 0 : index
    %c0_42 = arith.constant 0 : index
    %56 = vector.load %arg2[%55, %c0_41, %c0_42] : memref<8x8x128xf32, #tpu.memory_space<vmem>>, vector<1x8x128xf32>
    %57 = vector.shape_cast %56 : vector<1x8x128xf32> to vector<8x128xf32>
    %c0_43 = arith.constant 0 : index
    %c0_44 = arith.constant 0 : index
    %58 = vector.load %arg4[%c0_43, %c0_44] : memref<128x128xf32, #tpu.memory_space<vmem>>, vector<128x128xf32>
    %cst_45 = arith.constant dense<0.000000e+00> : vector<8x128xf32>
    %59 = tpu.matmul %57, %58, %cst_45 {dimension_numbers = #tpu.dot_dimension_numbers<[1], [0], [0], [1], [0, 0, 1, 1], [], []>} : vector<8x128xf32>, vector<128x128xf32>, vector<8x128xf32> -> vector<8x128xf32>
    %c0_46 = arith.constant 0 : index
    %c0_47 = arith.constant 0 : index
    %60 = vector.load %arg5[%c0_46, %c0_47] : memref<128x128xf32, #tpu.memory_space<vmem>>, vector<128x128xf32>
    %cst_48 = arith.constant dense<0.000000e+00> : vector<8x128xf32>
    %61 = tpu.matmul %43, %60, %cst_48 {dimension_numbers = #tpu.dot_dimension_numbers<[1], [0], [0], [1], [0, 0, 1, 1], [], []>} : vector<8x128xf32>, vector<128x128xf32>, vector<8x128xf32> -> vector<8x128xf32>
    %62 = arith.addf %59, %61 : vector<8x128xf32>
    %63 = arith.addf %62, %5 : vector<8x128xf32>
    %64 = math.tanh %63 : vector<8x128xf32>
    %c0_49 = arith.constant 0 : index
    %c0_50 = arith.constant 0 : index
    %65 = vector.load %arg7[%c0_49, %c0_50] : memref<128x128xf32, #tpu.memory_space<vmem>>, vector<128x128xf32>
    %cst_51 = arith.constant dense<0.000000e+00> : vector<8x128xf32>
    %66 = tpu.matmul %64, %65, %cst_51 {dimension_numbers = #tpu.dot_dimension_numbers<[1], [0], [0], [1], [0, 0, 1, 1], [], []>} : vector<8x128xf32>, vector<128x128xf32>, vector<8x128xf32> -> vector<8x128xf32>
    %c0_52 = arith.constant 0 : index
    %c0_53 = arith.constant 0 : index
    %67 = vector.load %arg8[%c0_52, %c0_53] : memref<128x128xf32, #tpu.memory_space<vmem>>, vector<128x128xf32>
    %cst_54 = arith.constant dense<0.000000e+00> : vector<8x128xf32>
    %68 = tpu.matmul %50, %67, %cst_54 {dimension_numbers = #tpu.dot_dimension_numbers<[1], [0], [0], [1], [0, 0, 1, 1], [], []>} : vector<8x128xf32>, vector<128x128xf32>, vector<8x128xf32> -> vector<8x128xf32>
    %69 = arith.addf %66, %68 : vector<8x128xf32>
    %70 = arith.addf %69, %8 : vector<8x128xf32>
    %71 = math.tanh %70 : vector<8x128xf32>
    %72 = arith.index_cast %c2_i32 : i32 to index
    %c0_55 = arith.constant 0 : index
    %c0_56 = arith.constant 0 : index
    %73 = vector.load %arg10[%72, %c0_55, %c0_56] : memref<8x8x128xf32, #tpu.memory_space<vmem>>, vector<1x8x128xf32>
    %74 = vector.shape_cast %73 : vector<1x8x128xf32> to vector<8x128xf32>
    %75 = vector.shape_cast %71 : vector<8x128xf32> to vector<1x8x128xf32>
    tpu.vector_store %arg10[%72, %c0_55, %c0_56], %75 {strides = array<i32>} : memref<8x8x128xf32, #tpu.memory_space<vmem>>, vector<1x8x128xf32>,
    %c3_i32 = arith.constant 3 : i32
    %76 = arith.index_cast %c3_i32 : i32 to index
    %c0_57 = arith.constant 0 : index
    %c0_58 = arith.constant 0 : index
    %77 = vector.load %arg2[%76, %c0_57, %c0_58] : memref<8x8x128xf32, #tpu.memory_space<vmem>>, vector<1x8x128xf32>
    %78 = vector.shape_cast %77 : vector<1x8x128xf32> to vector<8x128xf32>
    %c0_59 = arith.constant 0 : index
    %c0_60 = arith.constant 0 : index
    %79 = vector.load %arg4[%c0_59, %c0_60] : memref<128x128xf32, #tpu.memory_space<vmem>>, vector<128x128xf32>
    %cst_61 = arith.constant dense<0.000000e+00> : vector<8x128xf32>
    %80 = tpu.matmul %78, %79, %cst_61 {dimension_numbers = #tpu.dot_dimension_numbers<[1], [0], [0], [1], [0, 0, 1, 1], [], []>} : vector<8x128xf32>, vector<128x128xf32>, vector<8x128xf32> -> vector<8x128xf32>
    %c0_62 = arith.constant 0 : index
    %c0_63 = arith.constant 0 : index
    %81 = vector.load %arg5[%c0_62, %c0_63] : memref<128x128xf32, #tpu.memory_space<vmem>>, vector<128x128xf32>
    %cst_64 = arith.constant dense<0.000000e+00> : vector<8x128xf32>
    %82 = tpu.matmul %64, %81, %cst_64 {dimension_numbers = #tpu.dot_dimension_numbers<[1], [0], [0], [1], [0, 0, 1, 1], [], []>} : vector<8x128xf32>, vector<128x128xf32>, vector<8x128xf32> -> vector<8x128xf32>
    %83 = arith.addf %80, %82 : vector<8x128xf32>
    %84 = arith.addf %83, %5 : vector<8x128xf32>
    %85 = math.tanh %84 : vector<8x128xf32>
    %c0_65 = arith.constant 0 : index
    %c0_66 = arith.constant 0 : index
    %86 = vector.load %arg7[%c0_65, %c0_66] : memref<128x128xf32, #tpu.memory_space<vmem>>, vector<128x128xf32>
    %cst_67 = arith.constant dense<0.000000e+00> : vector<8x128xf32>
    %87 = tpu.matmul %85, %86, %cst_67 {dimension_numbers = #tpu.dot_dimension_numbers<[1], [0], [0], [1], [0, 0, 1, 1], [], []>} : vector<8x128xf32>, vector<128x128xf32>, vector<8x128xf32> -> vector<8x128xf32>
    %c0_68 = arith.constant 0 : index
    %c0_69 = arith.constant 0 : index
    %88 = vector.load %arg8[%c0_68, %c0_69] : memref<128x128xf32, #tpu.memory_space<vmem>>, vector<128x128xf32>
    %cst_70 = arith.constant dense<0.000000e+00> : vector<8x128xf32>
    %89 = tpu.matmul %71, %88, %cst_70 {dimension_numbers = #tpu.dot_dimension_numbers<[1], [0], [0], [1], [0, 0, 1, 1], [], []>} : vector<8x128xf32>, vector<128x128xf32>, vector<8x128xf32> -> vector<8x128xf32>
    %90 = arith.addf %87, %89 : vector<8x128xf32>
    %91 = arith.addf %90, %8 : vector<8x128xf32>
    %92 = math.tanh %91 : vector<8x128xf32>
    %93 = arith.index_cast %c3_i32 : i32 to index
    %c0_71 = arith.constant 0 : index
    %c0_72 = arith.constant 0 : index
    %94 = vector.load %arg10[%93, %c0_71, %c0_72] : memref<8x8x128xf32, #tpu.memory_space<vmem>>, vector<1x8x128xf32>
    %95 = vector.shape_cast %94 : vector<1x8x128xf32> to vector<8x128xf32>
    %96 = vector.shape_cast %92 : vector<8x128xf32> to vector<1x8x128xf32>
    tpu.vector_store %arg10[%93, %c0_71, %c0_72], %96 {strides = array<i32>} : memref<8x8x128xf32, #tpu.memory_space<vmem>>, vector<1x8x128xf32>,
    %c4_i32 = arith.constant 4 : i32
    %97 = arith.index_cast %c4_i32 : i32 to index
    %c0_73 = arith.constant 0 : index
    %c0_74 = arith.constant 0 : index
    %98 = vector.load %arg2[%97, %c0_73, %c0_74] : memref<8x8x128xf32, #tpu.memory_space<vmem>>, vector<1x8x128xf32>
    %99 = vector.shape_cast %98 : vector<1x8x128xf32> to vector<8x128xf32>
    %c0_75 = arith.constant 0 : index
    %c0_76 = arith.constant 0 : index
    %100 = vector.load %arg4[%c0_75, %c0_76] : memref<128x128xf32, #tpu.memory_space<vmem>>, vector<128x128xf32>
    %cst_77 = arith.constant dense<0.000000e+00> : vector<8x128xf32>
    %101 = tpu.matmul %99, %100, %cst_77 {dimension_numbers = #tpu.dot_dimension_numbers<[1], [0], [0], [1], [0, 0, 1, 1], [], []>} : vector<8x128xf32>, vector<128x128xf32>, vector<8x128xf32> -> vector<8x128xf32>
    %c0_78 = arith.constant 0 : index
    %c0_79 = arith.constant 0 : index
    %102 = vector.load %arg5[%c0_78, %c0_79] : memref<128x128xf32, #tpu.memory_space<vmem>>, vector<128x128xf32>
    %cst_80 = arith.constant dense<0.000000e+00> : vector<8x128xf32>
    %103 = tpu.matmul %85, %102, %cst_80 {dimension_numbers = #tpu.dot_dimension_numbers<[1], [0], [0], [1], [0, 0, 1, 1], [], []>} : vector<8x128xf32>, vector<128x128xf32>, vector<8x128xf32> -> vector<8x128xf32>
    %104 = arith.addf %101, %103 : vector<8x128xf32>
    %105 = arith.addf %104, %5 : vector<8x128xf32>
    %106 = math.tanh %105 : vector<8x128xf32>
    %c0_81 = arith.constant 0 : index
    %c0_82 = arith.constant 0 : index
    %107 = vector.load %arg7[%c0_81, %c0_82] : memref<128x128xf32, #tpu.memory_space<vmem>>, vector<128x128xf32>
    %cst_83 = arith.constant dense<0.000000e+00> : vector<8x128xf32>
    %108 = tpu.matmul %106, %107, %cst_83 {dimension_numbers = #tpu.dot_dimension_numbers<[1], [0], [0], [1], [0, 0, 1, 1], [], []>} : vector<8x128xf32>, vector<128x128xf32>, vector<8x128xf32> -> vector<8x128xf32>
    %c0_84 = arith.constant 0 : index
    %c0_85 = arith.constant 0 : index
    %109 = vector.load %arg8[%c0_84, %c0_85] : memref<128x128xf32, #tpu.memory_space<vmem>>, vector<128x128xf32>
    %cst_86 = arith.constant dense<0.000000e+00> : vector<8x128xf32>
    %110 = tpu.matmul %92, %109, %cst_86 {dimension_numbers = #tpu.dot_dimension_numbers<[1], [0], [0], [1], [0, 0, 1, 1], [], []>} : vector<8x128xf32>, vector<128x128xf32>, vector<8x128xf32> -> vector<8x128xf32>
    %111 = arith.addf %108, %110 : vector<8x128xf32>
    %112 = arith.addf %111, %8 : vector<8x128xf32>
    %113 = math.tanh %112 : vector<8x128xf32>
    %114 = arith.index_cast %c4_i32 : i32 to index
    %c0_87 = arith.constant 0 : index
    %c0_88 = arith.constant 0 : index
    %115 = vector.load %arg10[%114, %c0_87, %c0_88] : memref<8x8x128xf32, #tpu.memory_space<vmem>>, vector<1x8x128xf32>
    %116 = vector.shape_cast %115 : vector<1x8x128xf32> to vector<8x128xf32>
    %117 = vector.shape_cast %113 : vector<8x128xf32> to vector<1x8x128xf32>
    tpu.vector_store %arg10[%114, %c0_87, %c0_88], %117 {strides = array<i32>} : memref<8x8x128xf32, #tpu.memory_space<vmem>>, vector<1x8x128xf32>,
    %c5_i32 = arith.constant 5 : i32
    %118 = arith.index_cast %c5_i32 : i32 to index
    %c0_89 = arith.constant 0 : index
    %c0_90 = arith.constant 0 : index
    %119 = vector.load %arg2[%118, %c0_89, %c0_90] : memref<8x8x128xf32, #tpu.memory_space<vmem>>, vector<1x8x128xf32>
    %120 = vector.shape_cast %119 : vector<1x8x128xf32> to vector<8x128xf32>
    %c0_91 = arith.constant 0 : index
    %c0_92 = arith.constant 0 : index
    %121 = vector.load %arg4[%c0_91, %c0_92] : memref<128x128xf32, #tpu.memory_space<vmem>>, vector<128x128xf32>
    %cst_93 = arith.constant dense<0.000000e+00> : vector<8x128xf32>
    %122 = tpu.matmul %120, %121, %cst_93 {dimension_numbers = #tpu.dot_dimension_numbers<[1], [0], [0], [1], [0, 0, 1, 1], [], []>} : vector<8x128xf32>, vector<128x128xf32>, vector<8x128xf32> -> vector<8x128xf32>
    %c0_94 = arith.constant 0 : index
    %c0_95 = arith.constant 0 : index
    %123 = vector.load %arg5[%c0_94, %c0_95] : memref<128x128xf32, #tpu.memory_space<vmem>>, vector<128x128xf32>
    %cst_96 = arith.constant dense<0.000000e+00> : vector<8x128xf32>
    %124 = tpu.matmul %106, %123, %cst_96 {dimension_numbers = #tpu.dot_dimension_numbers<[1], [0], [0], [1], [0, 0, 1, 1], [], []>} : vector<8x128xf32>, vector<128x128xf32>, vector<8x128xf32> -> vector<8x128xf32>
    %125 = arith.addf %122, %124 : vector<8x128xf32>
    %126 = arith.addf %125, %5 : vector<8x128xf32>
    %127 = math.tanh %126 : vector<8x128xf32>
    %c0_97 = arith.constant 0 : index
    %c0_98 = arith.constant 0 : index
    %128 = vector.load %arg7[%c0_97, %c0_98] : memref<128x128xf32, #tpu.memory_space<vmem>>, vector<128x128xf32>
    %cst_99 = arith.constant dense<0.000000e+00> : vector<8x128xf32>
    %129 = tpu.matmul %127, %128, %cst_99 {dimension_numbers = #tpu.dot_dimension_numbers<[1], [0], [0], [1], [0, 0, 1, 1], [], []>} : vector<8x128xf32>, vector<128x128xf32>, vector<8x128xf32> -> vector<8x128xf32>
    %c0_100 = arith.constant 0 : index
    %c0_101 = arith.constant 0 : index
    %130 = vector.load %arg8[%c0_100, %c0_101] : memref<128x128xf32, #tpu.memory_space<vmem>>, vector<128x128xf32>
    %cst_102 = arith.constant dense<0.000000e+00> : vector<8x128xf32>
    %131 = tpu.matmul %113, %130, %cst_102 {dimension_numbers = #tpu.dot_dimension_numbers<[1], [0], [0], [1], [0, 0, 1, 1], [], []>} : vector<8x128xf32>, vector<128x128xf32>, vector<8x128xf32> -> vector<8x128xf32>
    %132 = arith.addf %129, %131 : vector<8x128xf32>
    %133 = arith.addf %132, %8 : vector<8x128xf32>
    %134 = math.tanh %133 : vector<8x128xf32>
    %135 = arith.index_cast %c5_i32 : i32 to index
    %c0_103 = arith.constant 0 : index
    %c0_104 = arith.constant 0 : index
    %136 = vector.load %arg10[%135, %c0_103, %c0_104] : memref<8x8x128xf32, #tpu.memory_space<vmem>>, vector<1x8x128xf32>
    %137 = vector.shape_cast %136 : vector<1x8x128xf32> to vector<8x128xf32>
    %138 = vector.shape_cast %134 : vector<8x128xf32> to vector<1x8x128xf32>
    tpu.vector_store %arg10[%135, %c0_103, %c0_104], %138 {strides = array<i32>} : memref<8x8x128xf32, #tpu.memory_space<vmem>>, vector<1x8x128xf32>,
    %c6_i32 = arith.constant 6 : i32
    %139 = arith.index_cast %c6_i32 : i32 to index
    %c0_105 = arith.constant 0 : index
    %c0_106 = arith.constant 0 : index
    %140 = vector.load %arg2[%139, %c0_105, %c0_106] : memref<8x8x128xf32, #tpu.memory_space<vmem>>, vector<1x8x128xf32>
    %141 = vector.shape_cast %140 : vector<1x8x128xf32> to vector<8x128xf32>
    %c0_107 = arith.constant 0 : index
    %c0_108 = arith.constant 0 : index
    %142 = vector.load %arg4[%c0_107, %c0_108] : memref<128x128xf32, #tpu.memory_space<vmem>>, vector<128x128xf32>
    %cst_109 = arith.constant dense<0.000000e+00> : vector<8x128xf32>
    %143 = tpu.matmul %141, %142, %cst_109 {dimension_numbers = #tpu.dot_dimension_numbers<[1], [0], [0], [1], [0, 0, 1, 1], [], []>} : vector<8x128xf32>, vector<128x128xf32>, vector<8x128xf32> -> vector<8x128xf32>
    %c0_110 = arith.constant 0 : index
    %c0_111 = arith.constant 0 : index
    %144 = vector.load %arg5[%c0_110, %c0_111] : memref<128x128xf32, #tpu.memory_space<vmem>>, vector<128x128xf32>
    %cst_112 = arith.constant dense<0.000000e+00> : vector<8x128xf32>
    %145 = tpu.matmul %127, %144, %cst_112 {dimension_numbers = #tpu.dot_dimension_numbers<[1], [0], [0], [1], [0, 0, 1, 1], [], []>} : vector<8x128xf32>, vector<128x128xf32>, vector<8x128xf32> -> vector<8x128xf32>
    %146 = arith.addf %143, %145 : vector<8x128xf32>
    %147 = arith.addf %146, %5 : vector<8x128xf32>
    %148 = math.tanh %147 : vector<8x128xf32>
    %c0_113 = arith.constant 0 : index
    %c0_114 = arith.constant 0 : index
    %149 = vector.load %arg7[%c0_113, %c0_114] : memref<128x128xf32, #tpu.memory_space<vmem>>, vector<128x128xf32>
    %cst_115 = arith.constant dense<0.000000e+00> : vector<8x128xf32>
    %150 = tpu.matmul %148, %149, %cst_115 {dimension_numbers = #tpu.dot_dimension_numbers<[1], [0], [0], [1], [0, 0, 1, 1], [], []>} : vector<8x128xf32>, vector<128x128xf32>, vector<8x128xf32> -> vector<8x128xf32>
    %c0_116 = arith.constant 0 : index
    %c0_117 = arith.constant 0 : index
    %151 = vector.load %arg8[%c0_116, %c0_117] : memref<128x128xf32, #tpu.memory_space<vmem>>, vector<128x128xf32>
    %cst_118 = arith.constant dense<0.000000e+00> : vector<8x128xf32>
    %152 = tpu.matmul %134, %151, %cst_118 {dimension_numbers = #tpu.dot_dimension_numbers<[1], [0], [0], [1], [0, 0, 1, 1], [], []>} : vector<8x128xf32>, vector<128x128xf32>, vector<8x128xf32> -> vector<8x128xf32>
    %153 = arith.addf %150, %152 : vector<8x128xf32>
    %154 = arith.addf %153, %8 : vector<8x128xf32>
    %155 = math.tanh %154 : vector<8x128xf32>
    %156 = arith.index_cast %c6_i32 : i32 to index
    %c0_119 = arith.constant 0 : index
    %c0_120 = arith.constant 0 : index
    %157 = vector.load %arg10[%156, %c0_119, %c0_120] : memref<8x8x128xf32, #tpu.memory_space<vmem>>, vector<1x8x128xf32>
    %158 = vector.shape_cast %157 : vector<1x8x128xf32> to vector<8x128xf32>
    %159 = vector.shape_cast %155 : vector<8x128xf32> to vector<1x8x128xf32>
    tpu.vector_store %arg10[%156, %c0_119, %c0_120], %159 {strides = array<i32>} : memref<8x8x128xf32, #tpu.memory_space<vmem>>, vector<1x8x128xf32>,
    %c7_i32 = arith.constant 7 : i32
    %160 = arith.index_cast %c7_i32 : i32 to index
    %c0_121 = arith.constant 0 : index
    %c0_122 = arith.constant 0 : index
    %161 = vector.load %arg2[%160, %c0_121, %c0_122] : memref<8x8x128xf32, #tpu.memory_space<vmem>>, vector<1x8x128xf32>
    %162 = vector.shape_cast %161 : vector<1x8x128xf32> to vector<8x128xf32>
    %c0_123 = arith.constant 0 : index
    %c0_124 = arith.constant 0 : index
    %163 = vector.load %arg4[%c0_123, %c0_124] : memref<128x128xf32, #tpu.memory_space<vmem>>, vector<128x128xf32>
    %cst_125 = arith.constant dense<0.000000e+00> : vector<8x128xf32>
    %164 = tpu.matmul %162, %163, %cst_125 {dimension_numbers = #tpu.dot_dimension_numbers<[1], [0], [0], [1], [0, 0, 1, 1], [], []>} : vector<8x128xf32>, vector<128x128xf32>, vector<8x128xf32> -> vector<8x128xf32>
    %c0_126 = arith.constant 0 : index
    %c0_127 = arith.constant 0 : index
    %165 = vector.load %arg5[%c0_126, %c0_127] : memref<128x128xf32, #tpu.memory_space<vmem>>, vector<128x128xf32>
    %cst_128 = arith.constant dense<0.000000e+00> : vector<8x128xf32>
    %166 = tpu.matmul %148, %165, %cst_128 {dimension_numbers = #tpu.dot_dimension_numbers<[1], [0], [0], [1], [0, 0, 1, 1], [], []>} : vector<8x128xf32>, vector<128x128xf32>, vector<8x128xf32> -> vector<8x128xf32>
    %167 = arith.addf %164, %166 : vector<8x128xf32>
    %168 = arith.addf %167, %5 : vector<8x128xf32>
    %169 = math.tanh %168 : vector<8x128xf32>
    %c0_129 = arith.constant 0 : index
    %c0_130 = arith.constant 0 : index
    %170 = vector.load %arg7[%c0_129, %c0_130] : memref<128x128xf32, #tpu.memory_space<vmem>>, vector<128x128xf32>
    %cst_131 = arith.constant dense<0.000000e+00> : vector<8x128xf32>
    %171 = tpu.matmul %169, %170, %cst_131 {dimension_numbers = #tpu.dot_dimension_numbers<[1], [0], [0], [1], [0, 0, 1, 1], [], []>} : vector<8x128xf32>, vector<128x128xf32>, vector<8x128xf32> -> vector<8x128xf32>
    %c0_132 = arith.constant 0 : index
    %c0_133 = arith.constant 0 : index
    %172 = vector.load %arg8[%c0_132, %c0_133] : memref<128x128xf32, #tpu.memory_space<vmem>>, vector<128x128xf32>
    %cst_134 = arith.constant dense<0.000000e+00> : vector<8x128xf32>
    %173 = tpu.matmul %155, %172, %cst_134 {dimension_numbers = #tpu.dot_dimension_numbers<[1], [0], [0], [1], [0, 0, 1, 1], [], []>} : vector<8x128xf32>, vector<128x128xf32>, vector<8x128xf32> -> vector<8x128xf32>
    %174 = arith.addf %171, %173 : vector<8x128xf32>
    %175 = arith.addf %174, %8 : vector<8x128xf32>
    %176 = math.tanh %175 : vector<8x128xf32>
    %177 = arith.index_cast %c7_i32 : i32 to index
    %c0_135 = arith.constant 0 : index
    %c0_136 = arith.constant 0 : index
    %178 = vector.load %arg10[%177, %c0_135, %c0_136] : memref<8x8x128xf32, #tpu.memory_space<vmem>>, vector<1x8x128xf32>
    %179 = vector.shape_cast %178 : vector<1x8x128xf32> to vector<8x128xf32>
    %180 = vector.shape_cast %176 : vector<8x128xf32> to vector<1x8x128xf32>
    tpu.vector_store %arg10[%177, %c0_135, %c0_136], %180 {strides = array<i32>} : memref<8x8x128xf32, #tpu.memory_space<vmem>>, vector<1x8x128xf32>,
    %c8_i32 = arith.constant 8 : i32
    %c0_137 = arith.constant 0 : index
    %c0_138 = arith.constant 0 : index
    %c0_139 = arith.constant 0 : index
    %181 = vector.load %arg12[%c0_137, %c0_138, %c0_139] : memref<2x8x128xf32, #tpu.memory_space<vmem>>, vector<1x8x128xf32>
    %182 = vector.shape_cast %181 : vector<1x8x128xf32> to vector<8x128xf32>
    %183 = vector.shape_cast %169 : vector<8x128xf32> to vector<1x8x128xf32>
    tpu.vector_store %arg12[%c0_137, %c0_138, %c0_139], %183 {strides = array<i32>} : memref<2x8x128xf32, #tpu.memory_space<vmem>>, vector<1x8x128xf32>,
    %c1_140 = arith.constant 1 : index
    %c0_141 = arith.constant 0 : index
    %c0_142 = arith.constant 0 : index
    %184 = vector.load %arg12[%c1_140, %c0_141, %c0_142] : memref<2x8x128xf32, #tpu.memory_space<vmem>>, vector<1x8x128xf32>
    %185 = vector.shape_cast %184 : vector<1x8x128xf32> to vector<8x128xf32>
    %186 = vector.shape_cast %176 : vector<8x128xf32> to vector<1x8x128xf32>
    tpu.vector_store %arg12[%c1_140, %c0_141, %c0_142], %186 {strides = array<i32>} : memref<2x8x128xf32, #tpu.memory_space<vmem>>, vector<1x8x128xf32>,
    %c0_i32_143 = arith.constant 0 : i32
    %187 = arith.cmpi eq, %arg1, %c0_i32_143 : i32
    %188 = arith.extui %187 : i1 to i32
    %c0_i32_144 = arith.constant 0 : i32
    %189 = arith.cmpi ne, %188, %c0_i32_144 : i32
    scf.if %189 {
      %c0_145 = arith.constant 0 : index
      %c0_146 = arith.constant 0 : index
      %c0_147 = arith.constant 0 : index
      %190 = vector.load %arg12[%c0_145, %c0_146, %c0_147] : memref<2x8x128xf32, #tpu.memory_space<vmem>>, vector<2x8x128xf32>
      %c0_148 = arith.constant 0 : index
      %c0_149 = arith.constant 0 : index
      %c0_150 = arith.constant 0 : index
      %191 = vector.load %arg11[%c0_148, %c0_149, %c0_150] : memref<2x8x128xf32, #tpu.memory_space<vmem>>, vector<2x8x128xf32>
      tpu.vector_store %arg11[%c0_148, %c0_149, %c0_150], %190 {strides = array<i32>} : memref<2x8x128xf32, #tpu.memory_space<vmem>>, vector<2x8x128xf32>,
    } else {
    }
    return
  }
  func.func @transform_0(%arg0: i32, %arg1: i32) -> (i32, i32, i32) {
    %c0_i32 = arith.constant 0 : i32
    %c0_i32_0 = arith.constant 0 : i32
    return %arg1, %arg0, %c0_i32 : i32, i32, i32
  }
  func.func @transform_1(%arg0: i32, %arg1: i32) -> (i32, i32, i32) {
    %c0_i32 = arith.constant 0 : i32
    %c0_i32_0 = arith.constant 0 : i32
    %c0_i32_1 = arith.constant 0 : i32
    return %c0_i32, %arg0, %c0_i32_0 : i32, i32, i32
  }
  func.func @transform_2(%arg0: i32, %arg1: i32) -> (i32, i32) {
    %c0_i32 = arith.constant 0 : i32
    %c0_i32_0 = arith.constant 0 : i32
    %c0_i32_1 = arith.constant 0 : i32
    return %c0_i32, %c0_i32_0 : i32, i32
  }
  func.func @transform_3(%arg0: i32, %arg1: i32) -> (i32, i32) {
    %c0_i32 = arith.constant 0 : i32
    %c0_i32_0 = arith.constant 0 : i32
    %c0_i32_1 = arith.constant 0 : i32
    return %c0_i32, %c0_i32_0 : i32, i32
  }
  func.func @transform_4(%arg0: i32, %arg1: i32) -> (i32, i32) {
    %c0_i32 = arith.constant 0 : i32
    %c0_i32_0 = arith.constant 0 : i32
    %c0_i32_1 = arith.constant 0 : i32
    return %c0_i32, %c0_i32_0 : i32, i32
  }
  func.func @transform_5(%arg0: i32, %arg1: i32) -> (i32, i32) {
    %c0_i32 = arith.constant 0 : i32
    %c0_i32_0 = arith.constant 0 : i32
    %c0_i32_1 = arith.constant 0 : i32
    return %c0_i32, %c0_i32_0 : i32, i32
  }
  func.func @transform_6(%arg0: i32, %arg1: i32) -> (i32, i32) {
    %c0_i32 = arith.constant 0 : i32
    %c0_i32_0 = arith.constant 0 : i32
    %c0_i32_1 = arith.constant 0 : i32
    return %c0_i32, %c0_i32_0 : i32, i32
  }
  func.func @transform_7(%arg0: i32, %arg1: i32) -> (i32, i32) {
    %c0_i32 = arith.constant 0 : i32
    %c0_i32_0 = arith.constant 0 : i32
    %c0_i32_1 = arith.constant 0 : i32
    return %c0_i32, %c0_i32_0 : i32, i32
  }
  func.func @transform_8(%arg0: i32, %arg1: i32) -> (i32, i32, i32) {
    %c0_i32 = arith.constant 0 : i32
    %c0_i32_0 = arith.constant 0 : i32
    return %arg1, %arg0, %c0_i32 : i32, i32, i32
  }
  func.func @transform_9(%arg0: i32, %arg1: i32) -> (i32, i32, i32) {
    %c0_i32 = arith.constant 0 : i32
    %c0_i32_0 = arith.constant 0 : i32
    %c0_i32_1 = arith.constant 0 : i32
    return %c0_i32, %arg0, %c0_i32_0 : i32, i32, i32
  }
}

</mosaic_0001>

<llo_original>
// kernel: rnn_decoder_forward.3
$region0: #{rnn_decoder_forward.3}
  #allocation0 [shape = 'u32[]', space=smem, size = 0x4, offset = 0x4, fixed_abs, tag = 'smem constant byte address 0x4 - core index']
  #allocation1 [shape = 'u32[144,128]{1,0:T(1,128)}', space=vmem, size = 0x12000, scoped, tag = 'internal scratch']
  %s0 = inlined_call_operand.vmem [shape: f32[64,128], index: 0, kind: input, shape index: {}]
  %s1 = inlined_call_operand.vmem [shape: f32[128,128], index: 1, kind: input, shape index: {}]
  %s2 = inlined_call_operand.vmem [shape: f32[1,128], index: 2, kind: input, shape index: {}]
  %s3 = inlined_call_operand.vmem [shape: f32[64,128], index: 3, kind: output, shape index: {}]
  %s4 = sld [smem:[#allocation0]]
  $region22: #{rnn_decoder_forward.3} parent=0
    _
  %s6 = ssub.s32 1, %s4
  %s7 = scalar_select 0, %s6, %s4
  // Predicated region
  $region2: #{rnn_decoder_forward.3} parent=0 // pred_check
    _
  $region3: #{rnn_decoder_forward.3} parent=0 // pred_check_branch
    %9 = sbr.rel (0) target = $region5
  $region4: #{rnn_decoder_forward.3} parent=0 // pred_region
    _
  $region5: #{rnn_decoder_forward.3} parent=0 // pred_fallthru
    _
  // Predicated region
  $region6: #{rnn_decoder_forward.3} parent=0 // pred_check
    _
  $region7: #{rnn_decoder_forward.3} parent=0 // pred_check_branch
    %11 = sbr.rel (0) target = $region9
  $region8: #{rnn_decoder_forward.3} parent=0 // pred_region
    _
  $region9: #{rnn_decoder_forward.3} parent=0 // pred_fallthru
    _
  // Predicated region
  $region10: #{rnn_decoder_forward.3} parent=0 // pred_check
    _
  $region11: #{rnn_decoder_forward.3} parent=0 // pred_check_branch
    %13 = sbr.rel (0) target = $region13
  $region12: #{rnn_decoder_forward.3} parent=0 // pred_region
    _
  $region13: #{rnn_decoder_forward.3} parent=0 // pred_fallthru
    _
  %v14 = vld [vmem:[%s0] sm:$0xff]
  %v15 = vld [vmem:[%s0 + $0x8] sm:$0xff]
  %v16 = vld [vmem:[%s0 + $0x10] sm:$0xff]
  %v17 = vld [vmem:[%s0 + $0x18] sm:$0xff]
  %v18 = vld [vmem:[%s0 + $0x20] sm:$0xff]
  %v19 = vld [vmem:[%s0 + $0x28] sm:$0xff]
  %v20 = vld [vmem:[%s0 + $0x30] sm:$0xff]
  %v21 = vld [vmem:[%s0 + $0x38] sm:$0xff]
  %v22 = vld [vmem:[%s1] sm:$0xff]
  %v23 = vld [vmem:[%s1 + $0x8] sm:$0xff]
  %v24 = vld [vmem:[%s1 + $0x10] sm:$0xff]
  %v25 = vld [vmem:[%s1 + $0x18] sm:$0xff]
  %v26 = vld [vmem:[%s1 + $0x20] sm:$0xff]
  %v27 = vld [vmem:[%s1 + $0x28] sm:$0xff]
  %v28 = vld [vmem:[%s1 + $0x30] sm:$0xff]
  %v29 = vld [vmem:[%s1 + $0x38] sm:$0xff]
  %v30 = vld [vmem:[%s1 + $0x40] sm:$0xff]
  %v31 = vld [vmem:[%s1 + $0x48] sm:$0xff]
  %v32 = vld [vmem:[%s1 + $0x50] sm:$0xff]
  %v33 = vld [vmem:[%s1 + $0x58] sm:$0xff]
  %v34 = vld [vmem:[%s1 + $0x60] sm:$0xff]
  %v35 = vld [vmem:[%s1 + $0x68] sm:$0xff]
  %v36 = vld [vmem:[%s1 + $0x70] sm:$0xff]
  %v37 = vld [vmem:[%s1 + $0x78] sm:$0xff]
  %v38 = vld [vmem:[%s2] sm:$0x1]
  %v40 = vlaneseq
  %v41 = vshrl.u32 %v40, 7
  %v42 = vsub.s32 0, %v41
  %v43 = vrot.slane %v38, %v42
  %45 = vmatprep.subr.mxu0 0.0
  %46 = vmatpush1.msra.mxu0 %v22
  %47 = vmatprep.subr.mxu0 0.0
  %48 = vmatpush1.msra.mxu0 %v23
  %49 = vmatprep.subr.mxu0 0.0
  %50 = vmatpush1.msra.mxu0 %v24
  %51 = vmatprep.subr.mxu0 0.0
  %52 = vmatpush1.msra.mxu0 %v25
  %53 = vmatprep.subr.mxu0 0.0
  %54 = vmatpush1.msra.mxu0 %v26
  %55 = vmatprep.subr.mxu0 0.0
  %56 = vmatpush1.msra.mxu0 %v27
  %57 = vmatprep.subr.mxu0 0.0
  %58 = vmatpush1.msra.mxu0 %v28
  %59 = vmatprep.subr.mxu0 0.0
  %60 = vmatpush1.msra.mxu0 %v29
  %61 = vmatprep.subr.mxu0 0.0
  %62 = vmatpush1.msra.mxu0 %v30
  %63 = vmatprep.subr.mxu0 0.0
  %64 = vmatpush1.msra.mxu0 %v31
  %65 = vmatprep.subr.mxu0 0.0
  %66 = vmatpush1.msra.mxu0 %v32
  %67 = vmatprep.subr.mxu0 0.0
  %68 = vmatpush1.msra.mxu0 %v33
  %69 = vmatprep.subr.mxu0 0.0
  %70 = vmatpush1.msra.mxu0 %v34
  %71 = vmatprep.subr.mxu0 0.0
  %72 = vmatpush1.msra.mxu0 %v35
  %73 = vmatprep.subr.mxu0 0.0
  %74 = vmatpush1.msra.mxu0 %v36
  %75 = vmatprep.subr.mxu0 0.0
  %76 = vmatpush1.msra.mxu0 %v37
  %77 = vmatprep.subr.mxu0 0.0
  %78 = vmatpush1.msra.mxu0 0.0
  %79 = vmatprep.subr.mxu0 0.0
  %80 = vmatpush1.msra.mxu0 0.0
  %81 = vmatprep.subr.mxu0 0.0
  %82 = vmatpush1.msra.mxu0 0.0
  %83 = vmatprep.subr.mxu0 0.0
  %84 = vmatpush1.msra.mxu0 0.0
  %85 = vmatprep.subr.mxu0 0.0
  %86 = vmatpush1.msra.mxu0 0.0
  %87 = vmatprep.subr.mxu0 0.0
  %88 = vmatpush1.msra.mxu0 0.0
  %89 = vmatprep.subr.mxu0 0.0
  %90 = vmatpush1.msra.mxu0 0.0
  %91 = vmatprep.subr.mxu0 0.0
  %92 = vmatpush1.msra.mxu0 0.0
  %93 = vmatprep.subr.mxu0 0.0
  %94 = vmatpush1.msra.mxu0 0.0
  %95 = vmatprep.subr.mxu0 0.0
  %96 = vmatpush1.msra.mxu0 0.0
  %97 = vmatprep.subr.mxu0 0.0
  %98 = vmatpush1.msra.mxu0 0.0
  %99 = vmatprep.subr.mxu0 0.0
  %100 = vmatpush1.msra.mxu0 0.0
  %101 = vmatprep.subr.mxu0 0.0
  %102 = vmatpush1.msra.mxu0 0.0
  %103 = vmatprep.subr.mxu0 0.0
  %104 = vmatpush1.msra.mxu0 0.0
  %105 = vmatprep.subr.mxu0 0.0
  %106 = vmatpush1.msra.mxu0 0.0
  %107 = vmatprep.subr.mxu0 0.0
  %108 = vmatpush1.msra.mxu0 0.0
  %109 = vmatprep.mubr.f32.mxu0 0.0
  %110 = vmatmul.mubr.f32.gmra.mrb[0].mxu0 %v14
  %v111 = vpop.f32.mrb[0].mxu0
  %v112 = vadd.f32 %v43, %v111
  %v113 = vpop.f32.mrb[0].mxu0
  %114 = vmatprep.mubr.f32.mxu0 0.0
  %115 = vmatmul.mubr.f32.gmra.mrb[0].mxu0 %v15
  %v116 = vpop.f32.mrb[0].mxu0
  %v117 = vadd.f32 %v43, %v116
  %v118 = vpop.f32.mrb[0].mxu0
  %119 = vmatprep.mubr.f32.mxu0 0.0
  %120 = vmatmul.mubr.f32.gmra.mrb[0].mxu0 %v16
  %v121 = vpop.f32.mrb[0].mxu0
  %v122 = vadd.f32 %v43, %v121
  %v123 = vpop.f32.mrb[0].mxu0
  %124 = vmatprep.mubr.f32.mxu0 0.0
  %125 = vmatmul.mubr.f32.gmra.mrb[0].mxu0 %v17
  %v126 = vpop.f32.mrb[0].mxu0
  %v127 = vadd.f32 %v43, %v126
  %v128 = vpop.f32.mrb[0].mxu0
  %129 = vmatprep.mubr.f32.mxu0 0.0
  %130 = vmatmul.mubr.f32.gmra.mrb[0].mxu0 %v18
  %v131 = vpop.f32.mrb[0].mxu0
  %v132 = vadd.f32 %v43, %v131
  %v133 = vpop.f32.mrb[0].mxu0
  %134 = vmatprep.mubr.f32.mxu0 0.0
  %135 = vmatmul.mubr.f32.gmra.mrb[0].mxu0 %v19
  %v136 = vpop.f32.mrb[0].mxu0
  %v137 = vadd.f32 %v43, %v136
  %v138 = vpop.f32.mrb[0].mxu0
  %139 = vmatprep.mubr.f32.mxu0 0.0
  %140 = vmatmul.mubr.f32.gmra.mrb[0].mxu0 %v20
  %v141 = vpop.f32.mrb[0].mxu0
  %v142 = vadd.f32 %v43, %v141
  %v143 = vpop.f32.mrb[0].mxu0
  %144 = vmatprep.mubr.f32.mxu0 0.0
  %145 = vmatmul.mubr.f32.gmra.mrb[0].mxu0 %v21
  %v146 = vpop.f32.mrb[0].mxu0
  %v147 = vadd.f32 %v43, %v146
  %v148 = vpop.f32.mrb[0].mxu0
  %149 = vdwg.mxu0
  %150 = vst [vmem:[%s3] sm:$0xff] %v112
  %151 = vst [vmem:[%s3 + $0x8] sm:$0xff] %v117
  %152 = vst [vmem:[%s3 + $0x10] sm:$0xff] %v122
  %153 = vst [vmem:[%s3 + $0x18] sm:$0xff] %v127
  %154 = vst [vmem:[%s3 + $0x20] sm:$0xff] %v132
  %155 = vst [vmem:[%s3 + $0x28] sm:$0xff] %v137
  %156 = vst [vmem:[%s3 + $0x30] sm:$0xff] %v142
  %157 = vst [vmem:[%s3 + $0x38] sm:$0xff] %v147
  // Predicated region
  $region14: #{rnn_decoder_forward.3} parent=0 // pred_check
    _
  $region15: #{rnn_decoder_forward.3} parent=0 // pred_check_branch
    %159 = sbr.rel (0) target = $region17
  $region16: #{rnn_decoder_forward.3} parent=0 // pred_region
    _
  $region17: #{rnn_decoder_forward.3} parent=0 // pred_fallthru
    _
  // Predicated region
  $region18: #{rnn_decoder_forward.3} parent=0 // pred_check
    _
  $region19: #{rnn_decoder_forward.3} parent=0 // pred_check_branch
    %161 = sbr.rel (0) target = $region21
  $region20: #{rnn_decoder_forward.3} parent=0 // pred_region
    _
  $region21: #{rnn_decoder_forward.3} parent=0 // pred_fallthru
    _

// kernel: rnn_decoder_forward.2
$region0: #{rnn_decoder_forward.2}
  #allocation0 [shape = 'u32[]', space=smem, size = 0x4, offset = 0x4, fixed_abs, tag = 'smem constant byte address 0x4 - core index']
  #allocation1 [shape = 'u32[144,128]{1,0:T(1,128)}', space=vmem, size = 0x12000, scoped, tag = 'internal scratch']
  #allocation2 [shape = 'f32[2,8,128]{2,1,0:T(8,128)}', space=vmem, size = 0x2000, scoped, tag = 'scratch operand']
  %s0 = inlined_call_operand.vmem [shape: f32[8,8,128], index: 0, kind: input, shape index: {}]
  %s1 = inlined_call_operand.vmem [shape: f32[2,8,128], index: 1, kind: input, shape index: {}]
  %s2 = inlined_call_operand.vmem [shape: f32[128,128], index: 2, kind: input, shape index: {}]
  %s3 = inlined_call_operand.vmem [shape: f32[128,128], index: 3, kind: input, shape index: {}]
  %s4 = inlined_call_operand.vmem [shape: f32[1,128], index: 4, kind: input, shape index: {}]
  %s5 = inlined_call_operand.vmem [shape: f32[128,128], index: 5, kind: input, shape index: {}]
  %s6 = inlined_call_operand.vmem [shape: f32[128,128], index: 6, kind: input, shape index: {}]
  %s7 = inlined_call_operand.vmem [shape: f32[1,128], index: 7, kind: input, shape index: {}]
  %s8 = inlined_call_operand.vmem [shape: f32[8,8,128], index: 8, kind: output, shape index: {0}]
  %s9 = inlined_call_operand.vmem [shape: f32[2,8,128], index: 9, kind: output, shape index: {1}]
  %10 = xla_tuple %s8, %s9
  %s11 = sld [smem:[#allocation0]]
  $region58: #{rnn_decoder_forward.2} parent=0
    _
  %s13 = ssub.s32 1, %s11
  %s14 = scalar_select 0, %s13, %s11
  // Predicated region
  $region2: #{rnn_decoder_forward.2} parent=0 // pred_check
    _
  $region3: #{rnn_decoder_forward.2} parent=0 // pred_check_branch
    %16 = sbr.rel (0) target = $region5
  $region4: #{rnn_decoder_forward.2} parent=0 // pred_region
    _
  $region5: #{rnn_decoder_forward.2} parent=0 // pred_fallthru
    _
  // Predicated region
  $region6: #{rnn_decoder_forward.2} parent=0 // pred_check
    _
  $region7: #{rnn_decoder_forward.2} parent=0 // pred_check_branch
    %18 = sbr.rel (0) target = $region9
  $region8: #{rnn_decoder_forward.2} parent=0 // pred_region
    _
  $region9: #{rnn_decoder_forward.2} parent=0 // pred_fallthru
    _
  // Predicated region
  $region10: #{rnn_decoder_forward.2} parent=0 // pred_check
    _
  $region11: #{rnn_decoder_forward.2} parent=0 // pred_check_branch
    %20 = sbr.rel (0) target = $region13
  $region12: #{rnn_decoder_forward.2} parent=0 // pred_region
    _
  $region13: #{rnn_decoder_forward.2} parent=0 // pred_fallthru
    _
  // Predicated region
  $region14: #{rnn_decoder_forward.2} parent=0 // pred_check
    _
  $region15: #{rnn_decoder_forward.2} parent=0 // pred_check_branch
    %22 = sbr.rel (0) target = $region17
  $region16: #{rnn_decoder_forward.2} parent=0 // pred_region
    _
  $region17: #{rnn_decoder_forward.2} parent=0 // pred_fallthru
    _
  // Predicated region
  $region18: #{rnn_decoder_forward.2} parent=0 // pred_check
    _
  $region19: #{rnn_decoder_forward.2} parent=0 // pred_check_branch
    %24 = sbr.rel (0) target = $region21
  $region20: #{rnn_decoder_forward.2} parent=0 // pred_region
    _
  $region21: #{rnn_decoder_forward.2} parent=0 // pred_fallthru
    _
  // Predicated region
  $region22: #{rnn_decoder_forward.2} parent=0 // pred_check
    _
  $region23: #{rnn_decoder_forward.2} parent=0 // pred_check_branch
    %26 = sbr.rel (0) target = $region25
  $region24: #{rnn_decoder_forward.2} parent=0 // pred_region
    _
  $region25: #{rnn_decoder_forward.2} parent=0 // pred_fallthru
    _
  // Predicated region
  $region26: #{rnn_decoder_forward.2} parent=0 // pred_check
    _
  $region27: #{rnn_decoder_forward.2} parent=0 // pred_check_branch
    %28 = sbr.rel (0) target = $region29
  $region28: #{rnn_decoder_forward.2} parent=0 // pred_region
    _
  $region29: #{rnn_decoder_forward.2} parent=0 // pred_fallthru
    _
  // Predicated region
  $region30: #{rnn_decoder_forward.2} parent=0 // pred_check
    _
  $region31: #{rnn_decoder_forward.2} parent=0 // pred_check_branch
    %30 = sbr.rel (0) target = $region33
  $region32: #{rnn_decoder_forward.2} parent=0 // pred_region
    _
  $region33: #{rnn_decoder_forward.2} parent=0 // pred_fallthru
    _
  %p31 = scmp.eq.s32.totalorder 0, 0
  // Predicated region
  $region34: #{rnn_decoder_forward.2} parent=0 // pred_check
    %p32 = pneg %p31
  $region35: #{rnn_decoder_forward.2} parent=0 // pred_check_branch
    %34 = sbr.rel (%p32) target = $region37
  $region36: #{rnn_decoder_forward.2} parent=0 // pred_region
    %v35 = vld [vmem:[%s1] sm:$0xff]
    %v36 = vld [vmem:[%s1 + $0x8] sm:$0xff]
    %37 = vst [vmem:[#allocation2] sm:$0xff] %v35
    %38 = vst [vmem:[#allocation2 + $0x8] sm:$0xff] %v36
  $region37: #{rnn_decoder_forward.2} parent=0 // pred_fallthru
    _
  %v39 = vld [vmem:[%s4] sm:$0x1]
  %v41 = vlaneseq
  %v42 = vshrl.u32 %v41, 7
  %v43 = vsub.s32 0, %v42
  %v44 = vrot.slane %v39, %v43
  %v46 = vld [vmem:[%s7] sm:$0x1]
  %v48 = vlaneseq
  %v49 = vshrl.u32 %v48, 7
  %v50 = vsub.s32 0, %v49
  %v51 = vrot.slane %v46, %v50
  %v53 = vld [vmem:[#allocation2] sm:$0xff]
  %s54 = scalar_lea.vmem [#allocation2], 8
  %v55 = vld [vmem:[%s54] sm:$0xff]
  %v56 = vld [vmem:[%s0] sm:$0xff]
  %v57 = vld [vmem:[%s2] sm:$0xff]
  %v58 = vld [vmem:[%s2 + $0x8] sm:$0xff]
  %v59 = vld [vmem:[%s2 + $0x10] sm:$0xff]
  %v60 = vld [vmem:[%s2 + $0x18] sm:$0xff]
  %v61 = vld [vmem:[%s2 + $0x20] sm:$0xff]
  %v62 = vld [vmem:[%s2 + $0x28] sm:$0xff]
  %v63 = vld [vmem:[%s2 + $0x30] sm:$0xff]
  %v64 = vld [vmem:[%s2 + $0x38] sm:$0xff]
  %v65 = vld [vmem:[%s2 + $0x40] sm:$0xff]
  %v66 = vld [vmem:[%s2 + $0x48] sm:$0xff]
  %v67 = vld [vmem:[%s2 + $0x50] sm:$0xff]
  %v68 = vld [vmem:[%s2 + $0x58] sm:$0xff]
  %v69 = vld [vmem:[%s2 + $0x60] sm:$0xff]
  %v70 = vld [vmem:[%s2 + $0x68] sm:$0xff]
  %v71 = vld [vmem:[%s2 + $0x70] sm:$0xff]
  %v72 = vld [vmem:[%s2 + $0x78] sm:$0xff]
  %v73 = vld [vmem:[%s3] sm:$0xff]
  %v74 = vld [vmem:[%s3 + $0x8] sm:$0xff]
  %v75 = vld [vmem:[%s3 + $0x10] sm:$0xff]
  %v76 = vld [vmem:[%s3 + $0x18] sm:$0xff]
  %v77 = vld [vmem:[%s3 + $0x20] sm:$0xff]
  %v78 = vld [vmem:[%s3 + $0x28] sm:$0xff]
  %v79 = vld [vmem:[%s3 + $0x30] sm:$0xff]
  %v80 = vld [vmem:[%s3 + $0x38] sm:$0xff]
  %v81 = vld [vmem:[%s3 + $0x40] sm:$0xff]
  %v82 = vld [vmem:[%s3 + $0x48] sm:$0xff]
  %v83 = vld [vmem:[%s3 + $0x50] sm:$0xff]
  %v84 = vld [vmem:[%s3 + $0x58] sm:$0xff]
  %v85 = vld [vmem:[%s3 + $0x60] sm:$0xff]
  %v86 = vld [vmem:[%s3 + $0x68] sm:$0xff]
  %v87 = vld [vmem:[%s3 + $0x70] sm:$0xff]
  %v88 = vld [vmem:[%s3 + $0x78] sm:$0xff]
  %89 = vmatprep.subr.mxu0 0.0
  %90 = vmatpush1.msra.mxu0 %v73
  %91 = vmatprep.subr.mxu0 0.0
  %92 = vmatpush1.msra.mxu0 %v74
  %93 = vmatprep.subr.mxu0 0.0
  %94 = vmatpush1.msra.mxu0 %v75
  %95 = vmatprep.subr.mxu0 0.0
  %96 = vmatpush1.msra.mxu0 %v76
  %97 = vmatprep.subr.mxu0 0.0
  %98 = vmatpush1.msra.mxu0 %v77
  %99 = vmatprep.subr.mxu0 0.0
  %100 = vmatpush1.msra.mxu0 %v78
  %101 = vmatprep.subr.mxu0 0.0
  %102 = vmatpush1.msra.mxu0 %v79
  %103 = vmatprep.subr.mxu0 0.0
  %104 = vmatpush1.msra.mxu0 %v80
  %105 = vmatprep.subr.mxu0 0.0
  %106 = vmatpush1.msra.mxu0 %v81
  %107 = vmatprep.subr.mxu0 0.0
  %108 = vmatpush1.msra.mxu0 %v82
  %109 = vmatprep.subr.mxu0 0.0
  %110 = vmatpush1.msra.mxu0 %v83
  %111 = vmatprep.subr.mxu0 0.0
  %112 = vmatpush1.msra.mxu0 %v84
  %113 = vmatprep.subr.mxu0 0.0
  %114 = vmatpush1.msra.mxu0 %v85
  %115 = vmatprep.subr.mxu0 0.0
  %116 = vmatpush1.msra.mxu0 %v86
  %117 = vmatprep.subr.mxu0 0.0
  %118 = vmatpush1.msra.mxu0 %v87
  %119 = vmatprep.subr.mxu0 0.0
  %120 = vmatpush1.msra.mxu0 %v88
  %121 = vmatprep.subr.mxu0 0.0
  %122 = vmatpush1.msra.mxu0 0.0
  %123 = vmatprep.subr.mxu0 0.0
  %124 = vmatpush1.msra.mxu0 0.0
  %125 = vmatprep.subr.mxu0 0.0
  %126 = vmatpush1.msra.mxu0 0.0
  %127 = vmatprep.subr.mxu0 0.0
  %128 = vmatpush1.msra.mxu0 0.0
  %129 = vmatprep.subr.mxu0 0.0
  %130 = vmatpush1.msra.mxu0 0.0
  %131 = vmatprep.subr.mxu0 0.0
  %132 = vmatpush1.msra.mxu0 0.0
  %133 = vmatprep.subr.mxu0 0.0
  %134 = vmatpush1.msra.mxu0 0.0
  %135 = vmatprep.subr.mxu0 0.0
  %136 = vmatpush1.msra.mxu0 0.0
  %137 = vmatprep.subr.mxu0 0.0
  %138 = vmatpush1.msra.mxu0 0.0
  %139 = vmatprep.subr.mxu0 0.0
  %140 = vmatpush1.msra.mxu0 0.0
  %141 = vmatprep.subr.mxu0 0.0
  %142 = vmatpush1.msra.mxu0 0.0
  %143 = vmatprep.subr.mxu0 0.0
  %144 = vmatpush1.msra.mxu0 0.0
  %145 = vmatprep.subr.mxu0 0.0
  %146 = vmatpush1.msra.mxu0 0.0
  %147 = vmatprep.subr.mxu0 0.0
  %148 = vmatpush1.msra.mxu0 0.0
  %149 = vmatprep.subr.mxu0 0.0
  %150 = vmatpush1.msra.mxu0 0.0
  %151 = vmatprep.subr.mxu0 0.0
  %152 = vmatpush1.msra.mxu0 0.0
  %153 = vmatprep.mubr.f32.mxu0 0.0
  %154 = vmatmul.mubr.f32.gmra.mrb[0].mxu0 %v53
  %v155 = vpop.f32.mrb[0].mxu0
  %v156 = vadd.f32 0.0, %v155
  %v157 = vpop.f32.mrb[0].mxu0
  %158 = vdwg.mxu0
  %159 = vmatprep.subr.mxu0 0.0
  %160 = vmatpush1.msra.mxu0 %v57
  %161 = vmatprep.subr.mxu0 0.0
  %162 = vmatpush1.msra.mxu0 %v58
  %163 = vmatprep.subr.mxu0 0.0
  %164 = vmatpush1.msra.mxu0 %v59
  %165 = vmatprep.subr.mxu0 0.0
  %166 = vmatpush1.msra.mxu0 %v60
  %167 = vmatprep.subr.mxu0 0.0
  %168 = vmatpush1.msra.mxu0 %v61
  %169 = vmatprep.subr.mxu0 0.0
  %170 = vmatpush1.msra.mxu0 %v62
  %171 = vmatprep.subr.mxu0 0.0
  %172 = vmatpush1.msra.mxu0 %v63
  %173 = vmatprep.subr.mxu0 0.0
  %174 = vmatpush1.msra.mxu0 %v64
  %175 = vmatprep.subr.mxu0 0.0
  %176 = vmatpush1.msra.mxu0 %v65
  %177 = vmatprep.subr.mxu0 0.0
  %178 = vmatpush1.msra.mxu0 %v66
  %179 = vmatprep.subr.mxu0 0.0
  %180 = vmatpush1.msra.mxu0 %v67
  %181 = vmatprep.subr.mxu0 0.0
  %182 = vmatpush1.msra.mxu0 %v68
  %183 = vmatprep.subr.mxu0 0.0
  %184 = vmatpush1.msra.mxu0 %v69
  %185 = vmatprep.subr.mxu0 0.0
  %186 = vmatpush1.msra.mxu0 %v70
  %187 = vmatprep.subr.mxu0 0.0
  %188 = vmatpush1.msra.mxu0 %v71
  %189 = vmatprep.subr.mxu0 0.0
  %190 = vmatpush1.msra.mxu0 %v72
  %191 = vmatprep.subr.mxu0 0.0
  %192 = vmatpush1.msra.mxu0 0.0
  %193 = vmatprep.subr.mxu0 0.0
  %194 = vmatpush1.msra.mxu0 0.0
  %195 = vmatprep.subr.mxu0 0.0
  %196 = vmatpush1.msra.mxu0 0.0
  %197 = vmatprep.subr.mxu0 0.0
  %198 = vmatpush1.msra.mxu0 0.0
  %199 = vmatprep.subr.mxu0 0.0
  %200 = vmatpush1.msra.mxu0 0.0
  %201 = vmatprep.subr.mxu0 0.0
  %202 = vmatpush1.msra.mxu0 0.0
  %203 = vmatprep.subr.mxu0 0.0
  %204 = vmatpush1.msra.mxu0 0.0
  %205 = vmatprep.subr.mxu0 0.0
  %206 = vmatpush1.msra.mxu0 0.0
  %207 = vmatprep.subr.mxu0 0.0
  %208 = vmatpush1.msra.mxu0 0.0
  %209 = vmatprep.subr.mxu0 0.0
  %210 = vmatpush1.msra.mxu0 0.0
  %211 = vmatprep.subr.mxu0 0.0
  %212 = vmatpush1.msra.mxu0 0.0
  %213 = vmatprep.subr.mxu0 0.0
  %214 = vmatpush1.msra.mxu0 0.0
  %215 = vmatprep.subr.mxu0 0.0
  %216 = vmatpush1.msra.mxu0 0.0
  %217 = vmatprep.subr.mxu0 0.0
  %218 = vmatpush1.msra.mxu0 0.0
  %219 = vmatprep.subr.mxu0 0.0
  %220 = vmatpush1.msra.mxu0 0.0
  %221 = vmatprep.subr.mxu0 0.0
  %222 = vmatpush1.msra.mxu0 0.0
  %223 = vmatprep.mubr.f32.mxu0 0.0
  %224 = vmatmul.mubr.f32.gmra.mrb[0].mxu0 %v56
  %v225 = vpop.f32.mrb[0].mxu0
  %v226 = vadd.f32 %v156, %v225
  %v227 = vpop.f32.mrb[0].mxu0
  %228 = vdwg.mxu0
  %v229 = vadd.f32 %v226, %v44
  %v230 = vtanh.pop %v229
  %v231 = vld [vmem:[%s5] sm:$0xff]
  %v232 = vld [vmem:[%s5 + $0x8] sm:$0xff]
  %v233 = vld [vmem:[%s5 + $0x10] sm:$0xff]
  %v234 = vld [vmem:[%s5 + $0x18] sm:$0xff]
  %v235 = vld [vmem:[%s5 + $0x20] sm:$0xff]
  %v236 = vld [vmem:[%s5 + $0x28] sm:$0xff]
  %v237 = vld [vmem:[%s5 + $0x30] sm:$0xff]
  %v238 = vld [vmem:[%s5 + $0x38] sm:$0xff]
  %v239 = vld [vmem:[%s5 + $0x40] sm:$0xff]
  %v240 = vld [vmem:[%s5 + $0x48] sm:$0xff]
  %v241 = vld [vmem:[%s5 + $0x50] sm:$0xff]
  %v242 = vld [vmem:[%s5 + $0x58] sm:$0xff]
  %v243 = vld [vmem:[%s5 + $0x60] sm:$0xff]
  %v244 = vld [vmem:[%s5 + $0x68] sm:$0xff]
  %v245 = vld [vmem:[%s5 + $0x70] sm:$0xff]
  %v246 = vld [vmem:[%s5 + $0x78] sm:$0xff]
  %v247 = vld [vmem:[%s6] sm:$0xff]
  %v248 = vld [vmem:[%s6 + $0x8] sm:$0xff]
  %v249 = vld [vmem:[%s6 + $0x10] sm:$0xff]
  %v250 = vld [vmem:[%s6 + $0x18] sm:$0xff]
  %v251 = vld [vmem:[%s6 + $0x20] sm:$0xff]
  %v252 = vld [vmem:[%s6 + $0x28] sm:$0xff]
  %v253 = vld [vmem:[%s6 + $0x30] sm:$0xff]
  %v254 = vld [vmem:[%s6 + $0x38] sm:$0xff]
  %v255 = vld [vmem:[%s6 + $0x40] sm:$0xff]
  %v256 = vld [vmem:[%s6 + $0x48] sm:$0xff]
  %v257 = vld [vmem:[%s6 + $0x50] sm:$0xff]
  %v258 = vld [vmem:[%s6 + $0x58] sm:$0xff]
  %v259 = vld [vmem:[%s6 + $0x60] sm:$0xff]
  %v260 = vld [vmem:[%s6 + $0x68] sm:$0xff]
  %v261 = vld [vmem:[%s6 + $0x70] sm:$0xff]
  %v262 = vld [vmem:[%s6 + $0x78] sm:$0xff]
  %263 = vmatprep.subr.mxu0 0.0
  %264 = vmatpush1.msra.mxu0 %v247
  %265 = vmatprep.subr.mxu0 0.0
  %266 = vmatpush1.msra.mxu0 %v248
  %267 = vmatprep.subr.mxu0 0.0
  %268 = vmatpush1.msra.mxu0 %v249
  %269 = vmatprep.subr.mxu0 0.0
  %270 = vmatpush1.msra.mxu0 %v250
  %271 = vmatprep.subr.mxu0 0.0
  %272 = vmatpush1.msra.mxu0 %v251
  %273 = vmatprep.subr.mxu0 0.0
  %274 = vmatpush1.msra.mxu0 %v252
  %275 = vmatprep.subr.mxu0 0.0
  %276 = vmatpush1.msra.mxu0 %v253
  %277 = vmatprep.subr.mxu0 0.0
  %278 = vmatpush1.msra.mxu0 %v254
  %279 = vmatprep.subr.mxu0 0.0
  %280 = vmatpush1.msra.mxu0 %v255
  %281 = vmatprep.subr.mxu0 0.0
  %282 = vmatpush1.msra.mxu0 %v256
  %283 = vmatprep.subr.mxu0 0.0
  %284 = vmatpush1.msra.mxu0 %v257
  %285 = vmatprep.subr.mxu0 0.0
  %286 = vmatpush1.msra.mxu0 %v258
  %287 = vmatprep.subr.mxu0 0.0
  %288 = vmatpush1.msra.mxu0 %v259
  %289 = vmatprep.subr.mxu0 0.0
  %290 = vmatpush1.msra.mxu0 %v260
  %291 = vmatprep.subr.mxu0 0.0
  %292 = vmatpush1.msra.mxu0 %v261
  %293 = vmatprep.subr.mxu0 0.0
  %294 = vmatpush1.msra.mxu0 %v262
  %295 = vmatprep.subr.mxu0 0.0
  %296 = vmatpush1.msra.mxu0 0.0
  %297 = vmatprep.subr.mxu0 0.0
  %298 = vmatpush1.msra.mxu0 0.0
  %299 = vmatprep.subr.mxu0 0.0
  %300 = vmatpush1.msra.mxu0 0.0
  %301 = vmatprep.subr.mxu0 0.0
  %302 = vmatpush1.msra.mxu0 0.0
  %303 = vmatprep.subr.mxu0 0.0
  %304 = vmatpush1.msra.mxu0 0.0
  %305 = vmatprep.subr.mxu0 0.0
  %306 = vmatpush1.msra.mxu0 0.0
  %307 = vmatprep.subr.mxu0 0.0
  %308 = vmatpush1.msra.mxu0 0.0
  %309 = vmatprep.subr.mxu0 0.0
  %310 = vmatpush1.msra.mxu0 0.0
  %311 = vmatprep.subr.mxu0 0.0
  %312 = vmatpush1.msra.mxu0 0.0
  %313 = vmatprep.subr.mxu0 0.0
  %314 = vmatpush1.msra.mxu0 0.0
  %315 = vmatprep.subr.mxu0 0.0
  %316 = vmatpush1.msra.mxu0 0.0
  %317 = vmatprep.subr.mxu0 0.0
  %318 = vmatpush1.msra.mxu0 0.0
  %319 = vmatprep.subr.mxu0 0.0
  %320 = vmatpush1.msra.mxu0 0.0
  %321 = vmatprep.subr.mxu0 0.0
  %322 = vmatpush1.msra.mxu0 0.0
  %323 = vmatprep.subr.mxu0 0.0
  %324 = vmatpush1.msra.mxu0 0.0
  %325 = vmatprep.subr.mxu0 0.0
  %326 = vmatpush1.msra.mxu0 0.0
  %327 = vmatprep.mubr.f32.mxu0 0.0
  %328 = vmatmul.mubr.f32.gmra.mrb[0].mxu0 %v55
  %v329 = vpop.f32.mrb[0].mxu0
  %v330 = vadd.f32 0.0, %v329
  %v331 = vpop.f32.mrb[0].mxu0
  %332 = vdwg.mxu0
  %333 = vmatprep.subr.mxu0 0.0
  %334 = vmatpush1.msra.mxu0 %v231
  %335 = vmatprep.subr.mxu0 0.0
  %336 = vmatpush1.msra.mxu0 %v232
  %337 = vmatprep.subr.mxu0 0.0
  %338 = vmatpush1.msra.mxu0 %v233
  %339 = vmatprep.subr.mxu0 0.0
  %340 = vmatpush1.msra.mxu0 %v234
  %341 = vmatprep.subr.mxu0 0.0
  %342 = vmatpush1.msra.mxu0 %v235
  %343 = vmatprep.subr.mxu0 0.0
  %344 = vmatpush1.msra.mxu0 %v236
  %345 = vmatprep.subr.mxu0 0.0
  %346 = vmatpush1.msra.mxu0 %v237
  %347 = vmatprep.subr.mxu0 0.0
  %348 = vmatpush1.msra.mxu0 %v238
  %349 = vmatprep.subr.mxu0 0.0
  %350 = vmatpush1.msra.mxu0 %v239
  %351 = vmatprep.subr.mxu0 0.0
  %352 = vmatpush1.msra.mxu0 %v240
  %353 = vmatprep.subr.mxu0 0.0
  %354 = vmatpush1.msra.mxu0 %v241
  %355 = vmatprep.subr.mxu0 0.0
  %356 = vmatpush1.msra.mxu0 %v242
  %357 = vmatprep.subr.mxu0 0.0
  %358 = vmatpush1.msra.mxu0 %v243
  %359 = vmatprep.subr.mxu0 0.0
  %360 = vmatpush1.msra.mxu0 %v244
  %361 = vmatprep.subr.mxu0 0.0
  %362 = vmatpush1.msra.mxu0 %v245
  %363 = vmatprep.subr.mxu0 0.0
  %364 = vmatpush1.msra.mxu0 %v246
  %365 = vmatprep.subr.mxu0 0.0
  %366 = vmatpush1.msra.mxu0 0.0
  %367 = vmatprep.subr.mxu0 0.0
  %368 = vmatpush1.msra.mxu0 0.0
  %369 = vmatprep.subr.mxu0 0.0
  %370 = vmatpush1.msra.mxu0 0.0
  %371 = vmatprep.subr.mxu0 0.0
  %372 = vmatpush1.msra.mxu0 0.0
  %373 = vmatprep.subr.mxu0 0.0
  %374 = vmatpush1.msra.mxu0 0.0
  %375 = vmatprep.subr.mxu0 0.0
  %376 = vmatpush1.msra.mxu0 0.0
  %377 = vmatprep.subr.mxu0 0.0
  %378 = vmatpush1.msra.mxu0 0.0
  %379 = vmatprep.subr.mxu0 0.0
  %380 = vmatpush1.msra.mxu0 0.0
  %381 = vmatprep.subr.mxu0 0.0
  %382 = vmatpush1.msra.mxu0 0.0
  %383 = vmatprep.subr.mxu0 0.0
  %384 = vmatpush1.msra.mxu0 0.0
  %385 = vmatprep.subr.mxu0 0.0
  %386 = vmatpush1.msra.mxu0 0.0
  %387 = vmatprep.subr.mxu0 0.0
  %388 = vmatpush1.msra.mxu0 0.0
  %389 = vmatprep.subr.mxu0 0.0
  %390 = vmatpush1.msra.mxu0 0.0
  %391 = vmatprep.subr.mxu0 0.0
  %392 = vmatpush1.msra.mxu0 0.0
  %393 = vmatprep.subr.mxu0 0.0
  %394 = vmatpush1.msra.mxu0 0.0
  %395 = vmatprep.subr.mxu0 0.0
  %396 = vmatpush1.msra.mxu0 0.0
  %397 = vmatprep.mubr.f32.mxu0 0.0
  %398 = vmatmul.mubr.f32.gmra.mrb[0].mxu0 %v230
  %v399 = vpop.f32.mrb[0].mxu0
  %v400 = vadd.f32 %v330, %v399
  %v401 = vpop.f32.mrb[0].mxu0
  %402 = vdwg.mxu0
  %v403 = vadd.f32 %v400, %v51
  %v404 = vtanh.pop %v403
  %405 = vst [vmem:[%s8] sm:$0xff] %v404
  %s406 = scalar_lea.vmem %s0, 8
  %v407 = vld [vmem:[%s406] sm:$0xff]
  %v408 = vld [vmem:[%s2] sm:$0xff]
  %v409 = vld [vmem:[%s2 + $0x8] sm:$0xff]
  %v410 = vld [vmem:[%s2 + $0x10] sm:$0xff]
  %v411 = vld [vmem:[%s2 + $0x18] sm:$0xff]
  %v412 = vld [vmem:[%s2 + $0x20] sm:$0xff]
  %v413 = vld [vmem:[%s2 + $0x28] sm:$0xff]
  %v414 = vld [vmem:[%s2 + $0x30] sm:$0xff]
  %v415 = vld [vmem:[%s2 + $0x38] sm:$0xff]
  %v416 = vld [vmem:[%s2 + $0x40] sm:$0xff]
  %v417 = vld [vmem:[%s2 + $0x48] sm:$0xff]
  %v418 = vld [vmem:[%s2 + $0x50] sm:$0xff]
  %v419 = vld [vmem:[%s2 + $0x58] sm:$0xff]
  %v420 = vld [vmem:[%s2 + $0x60] sm:$0xff]
  %v421 = vld [vmem:[%s2 + $0x68] sm:$0xff]
  %v422 = vld [vmem:[%s2 + $0x70] sm:$0xff]
  %v423 = vld [vmem:[%s2 + $0x78] sm:$0xff]
  %v424 = vld [vmem:[%s3] sm:$0xff]
  %v425 = vld [vmem:[%s3 + $0x8] sm:$0xff]
  %v426 = vld [vmem:[%s3 + $0x10] sm:$0xff]
  %v427 = vld [vmem:[%s3 + $0x18] sm:$0xff]
  %v428 = vld [vmem:[%s3 + $0x20] sm:$0xff]
  %v429 = vld [vmem:[%s3 + $0x28] sm:$0xff]
  %v430 = vld [vmem:[%s3 + $0x30] sm:$0xff]
  %v431 = vld [vmem:[%s3 + $0x38] sm:$0xff]
  %v432 = vld [vmem:[%s3 + $0x40] sm:$0xff]
  %v433 = vld [vmem:[%s3 + $0x48] sm:$0xff]
  %v434 = vld [vmem:[%s3 + $0x50] sm:$0xff]
  %v435 = vld [vmem:[%s3 + $0x58] sm:$0xff]
  %v436 = vld [vmem:[%s3 + $0x60] sm:$0xff]
  %v437 = vld [vmem:[%s3 + $0x68] sm:$0xff]
  %v438 = vld [vmem:[%s3 + $0x70] sm:$0xff]
  %v439 = vld [vmem:[%s3 + $0x78] sm:$0xff]
  %440 = vmatprep.subr.mxu0 0.0
  %441 = vmatpush1.msra.mxu0 %v424
  %442 = vmatprep.subr.mxu0 0.0
  %443 = vmatpush1.msra.mxu0 %v425
  %444 = vmatprep.subr.mxu0 0.0
  %445 = vmatpush1.msra.mxu0 %v426
  %446 = vmatprep.subr.mxu0 0.0
  %447 = vmatpush1.msra.mxu0 %v427
  %448 = vmatprep.subr.mxu0 0.0
  %449 = vmatpush1.msra.mxu0 %v428
  %450 = vmatprep.subr.mxu0 0.0
  %451 = vmatpush1.msra.mxu0 %v429
  %452 = vmatprep.subr.mxu0 0.0
  %453 = vmatpush1.msra.mxu0 %v430
  %454 = vmatprep.subr.mxu0 0.0
  %455 = vmatpush1.msra.mxu0 %v431
  %456 = vmatprep.subr.mxu0 0.0
  %457 = vmatpush1.msra.mxu0 %v432
  %458 = vmatprep.subr.mxu0 0.0
  %459 = vmatpush1.msra.mxu0 %v433
  %460 = vmatprep.subr.mxu0 0.0
  %461 = vmatpush1.msra.mxu0 %v434
  %462 = vmatprep.subr.mxu0 0.0
  %463 = vmatpush1.msra.mxu0 %v435
  %464 = vmatprep.subr.mxu0 0.0
  %465 = vmatpush1.msra.mxu0 %v436
  %466 = vmatprep.subr.mxu0 0.0
  %467 = vmatpush1.msra.mxu0 %v437
  %468 = vmatprep.subr.mxu0 0.0
  %469 = vmatpush1.msra.mxu0 %v438
  %470 = vmatprep.subr.mxu0 0.0
  %471 = vmatpush1.msra.mxu0 %v439
  %472 = vmatprep.subr.mxu0 0.0
  %473 = vmatpush1.msra.mxu0 0.0
  %474 = vmatprep.subr.mxu0 0.0
  %475 = vmatpush1.msra.mxu0 0.0
  %476 = vmatprep.subr.mxu0 0.0
  %477 = vmatpush1.msra.mxu0 0.0
  %478 = vmatprep.subr.mxu0 0.0
  %479 = vmatpush1.msra.mxu0 0.0
  %480 = vmatprep.subr.mxu0 0.0
  %481 = vmatpush1.msra.mxu0 0.0
  %482 = vmatprep.subr.mxu0 0.0
  %483 = vmatpush1.msra.mxu0 0.0
  %484 = vmatprep.subr.mxu0 0.0
  %485 = vmatpush1.msra.mxu0 0.0
  %486 = vmatprep.subr.mxu0 0.0
  %487 = vmatpush1.msra.mxu0 0.0
  %488 = vmatprep.subr.mxu0 0.0
  %489 = vmatpush1.msra.mxu0 0.0
  %490 = vmatprep.subr.mxu0 0.0
  %491 = vmatpush1.msra.mxu0 0.0
  %492 = vmatprep.subr.mxu0 0.0
  %493 = vmatpush1.msra.mxu0 0.0
  %494 = vmatprep.subr.mxu0 0.0
  %495 = vmatpush1.msra.mxu0 0.0
  %496 = vmatprep.subr.mxu0 0.0
  %497 = vmatpush1.msra.mxu0 0.0
  %498 = vmatprep.subr.mxu0 0.0
  %499 = vmatpush1.msra.mxu0 0.0
  %500 = vmatprep.subr.mxu0 0.0
  %501 = vmatpush1.msra.mxu0 0.0
  %502 = vmatprep.subr.mxu0 0.0
  %503 = vmatpush1.msra.mxu0 0.0
  %504 = vmatprep.mubr.f32.mxu0 0.0
  %505 = vmatmul.mubr.f32.gmra.mrb[0].mxu0 %v230
  %v506 = vpop.f32.mrb[0].mxu0
  %v507 = vadd.f32 0.0, %v506
  %v508 = vpop.f32.mrb[0].mxu0
  %509 = vdwg.mxu0
  %510 = vmatprep.subr.mxu0 0.0
  %511 = vmatpush1.msra.mxu0 %v408
  %512 = vmatprep.subr.mxu0 0.0
  %513 = vmatpush1.msra.mxu0 %v409
  %514 = vmatprep.subr.mxu0 0.0
  %515 = vmatpush1.msra.mxu0 %v410
  %516 = vmatprep.subr.mxu0 0.0
  %517 = vmatpush1.msra.mxu0 %v411
  %518 = vmatprep.subr.mxu0 0.0
  %519 = vmatpush1.msra.mxu0 %v412
  %520 = vmatprep.subr.mxu0 0.0
  %521 = vmatpush1.msra.mxu0 %v413
  %522 = vmatprep.subr.mxu0 0.0
  %523 = vmatpush1.msra.mxu0 %v414
  %524 = vmatprep.subr.mxu0 0.0
  %525 = vmatpush1.msra.mxu0 %v415
  %526 = vmatprep.subr.mxu0 0.0
  %527 = vmatpush1.msra.mxu0 %v416
  %528 = vmatprep.subr.mxu0 0.0
  %529 = vmatpush1.msra.mxu0 %v417
  %530 = vmatprep.subr.mxu0 0.0
  %531 = vmatpush1.msra.mxu0 %v418
  %532 = vmatprep.subr.mxu0 0.0
  %533 = vmatpush1.msra.mxu0 %v419
  %534 = vmatprep.subr.mxu0 0.0
  %535 = vmatpush1.msra.mxu0 %v420
  %536 = vmatprep.subr.mxu0 0.0
  %537 = vmatpush1.msra.mxu0 %v421
  %538 = vmatprep.subr.mxu0 0.0
  %539 = vmatpush1.msra.mxu0 %v422
  %540 = vmatprep.subr.mxu0 0.0
  %541 = vmatpush1.msra.mxu0 %v423
  %542 = vmatprep.subr.mxu0 0.0
  %543 = vmatpush1.msra.mxu0 0.0
  %544 = vmatprep.subr.mxu0 0.0
  %545 = vmatpush1.msra.mxu0 0.0
  %546 = vmatprep.subr.mxu0 0.0
  %547 = vmatpush1.msra.mxu0 0.0
  %548 = vmatprep.subr.mxu0 0.0
  %549 = vmatpush1.msra.mxu0 0.0
  %550 = vmatprep.subr.mxu0 0.0
  %551 = vmatpush1.msra.mxu0 0.0
  %552 = vmatprep.subr.mxu0 0.0
  %553 = vmatpush1.msra.mxu0 0.0
  %554 = vmatprep.subr.mxu0 0.0
  %555 = vmatpush1.msra.mxu0 0.0
  %556 = vmatprep.subr.mxu0 0.0
  %557 = vmatpush1.msra.mxu0 0.0
  %558 = vmatprep.subr.mxu0 0.0
  %559 = vmatpush1.msra.mxu0 0.0
  %560 = vmatprep.subr.mxu0 0.0
  %561 = vmatpush1.msra.mxu0 0.0
  %562 = vmatprep.subr.mxu0 0.0
  %563 = vmatpush1.msra.mxu0 0.0
  %564 = vmatprep.subr.mxu0 0.0
  %565 = vmatpush1.msra.mxu0 0.0
  %566 = vmatprep.subr.mxu0 0.0
  %567 = vmatpush1.msra.mxu0 0.0
  %568 = vmatprep.subr.mxu0 0.0
  %569 = vmatpush1.msra.mxu0 0.0
  %570 = vmatprep.subr.mxu0 0.0
  %571 = vmatpush1.msra.mxu0 0.0
  %572 = vmatprep.subr.mxu0 0.0
  %573 = vmatpush1.msra.mxu0 0.0
  %574 = vmatprep.mubr.f32.mxu0 0.0
  %575 = vmatmul.mubr.f32.gmra.mrb[0].mxu0 %v407
  %v576 = vpop.f32.mrb[0].mxu0
  %v577 = vadd.f32 %v507, %v576
  %v578 = vpop.f32.mrb[0].mxu0
  %579 = vdwg.mxu0
  %v580 = vadd.f32 %v577, %v44
  %v581 = vtanh.pop %v580
  %v582 = vld [vmem:[%s5] sm:$0xff]
  %v583 = vld [vmem:[%s5 + $0x8] sm:$0xff]
  %v584 = vld [vmem:[%s5 + $0x10] sm:$0xff]
  %v585 = vld [vmem:[%s5 + $0x18] sm:$0xff]
  %v586 = vld [vmem:[%s5 + $0x20] sm:$0xff]
  %v587 = vld [vmem:[%s5 + $0x28] sm:$0xff]
  %v588 = vld [vmem:[%s5 + $0x30] sm:$0xff]
  %v589 = vld [vmem:[%s5 + $0x38] sm:$0xff]
  %v590 = vld [vmem:[%s5 + $0x40] sm:$0xff]
  %v591 = vld [vmem:[%s5 + $0x48] sm:$0xff]
  %v592 = vld [vmem:[%s5 + $0x50] sm:$0xff]
  %v593 = vld [vmem:[%s5 + $0x58] sm:$0xff]
  %v594 = vld [vmem:[%s5 + $0x60] sm:$0xff]
  %v595 = vld [vmem:[%s5 + $0x68] sm:$0xff]
  %v596 = vld [vmem:[%s5 + $0x70] sm:$0xff]
  %v597 = vld [vmem:[%s5 + $0x78] sm:$0xff]
  %v598 = vld [vmem:[%s6] sm:$0xff]
  %v599 = vld [vmem:[%s6 + $0x8] sm:$0xff]
  %v600 = vld [vmem:[%s6 + $0x10] sm:$0xff]
  %v601 = vld [vmem:[%s6 + $0x18] sm:$0xff]
  %v602 = vld [vmem:[%s6 + $0x20] sm:$0xff]
  %v603 = vld [vmem:[%s6 + $0x28] sm:$0xff]
  %v604 = vld [vmem:[%s6 + $0x30] sm:$0xff]
  %v605 = vld [vmem:[%s6 + $0x38] sm:$0xff]
  %v606 = vld [vmem:[%s6 + $0x40] sm:$0xff]
  %v607 = vld [vmem:[%s6 + $0x48] sm:$0xff]
  %v608 = vld [vmem:[%s6 + $0x50] sm:$0xff]
  %v609 = vld [vmem:[%s6 + $0x58] sm:$0xff]
  %v610 = vld [vmem:[%s6 + $0x60] sm:$0xff]
  %v611 = vld [vmem:[%s6 + $0x68] sm:$0xff]
  %v612 = vld [vmem:[%s6 + $0x70] sm:$0xff]
  %v613 = vld [vmem:[%s6 + $0x78] sm:$0xff]
  %614 = vmatprep.subr.mxu0 0.0
  %615 = vmatpush1.msra.mxu0 %v598
  %616 = vmatprep.subr.mxu0 0.0
  %617 = vmatpush1.msra.mxu0 %v599
  %618 = vmatprep.subr.mxu0 0.0
  %619 = vmatpush1.msra.mxu0 %v600
  %620 = vmatprep.subr.mxu0 0.0
  %621 = vmatpush1.msra.mxu0 %v601
  %622 = vmatprep.subr.mxu0 0.0
  %623 = vmatpush1.msra.mxu0 %v602
  %624 = vmatprep.subr.mxu0 0.0
  %625 = vmatpush1.msra.mxu0 %v603
  %626 = vmatprep.subr.mxu0 0.0
  %627 = vmatpush1.msra.mxu0 %v604
  %628 = vmatprep.subr.mxu0 0.0
  %629 = vmatpush1.msra.mxu0 %v605
  %630 = vmatprep.subr.mxu0 0.0
  %631 = vmatpush1.msra.mxu0 %v606
  %632 = vmatprep.subr.mxu0 0.0
  %633 = vmatpush1.msra.mxu0 %v607
  %634 = vmatprep.subr.mxu0 0.0
  %635 = vmatpush1.msra.mxu0 %v608
  %636 = vmatprep.subr.mxu0 0.0
  %637 = vmatpush1.msra.mxu0 %v609
  %638 = vmatprep.subr.mxu0 0.0
  %639 = vmatpush1.msra.mxu0 %v610
  %640 = vmatprep.subr.mxu0 0.0
  %641 = vmatpush1.msra.mxu0 %v611
  %642 = vmatprep.subr.mxu0 0.0
  %643 = vmatpush1.msra.mxu0 %v612
  %644 = vmatprep.subr.mxu0 0.0
  %645 = vmatpush1.msra.mxu0 %v613
  %646 = vmatprep.subr.mxu0 0.0
  %647 = vmatpush1.msra.mxu0 0.0
  %648 = vmatprep.subr.mxu0 0.0
  %649 = vmatpush1.msra.mxu0 0.0
  %650 = vmatprep.subr.mxu0 0.0
  %651 = vmatpush1.msra.mxu0 0.0
  %652 = vmatprep.subr.mxu0 0.0
  %653 = vmatpush1.msra.mxu0 0.0
  %654 = vmatprep.subr.mxu0 0.0
  %655 = vmatpush1.msra.mxu0 0.0
  %656 = vmatprep.subr.mxu0 0.0
  %657 = vmatpush1.msra.mxu0 0.0
  %658 = vmatprep.subr.mxu0 0.0
  %659 = vmatpush1.msra.mxu0 0.0
  %660 = vmatprep.subr.mxu0 0.0
  %661 = vmatpush1.msra.mxu0 0.0
  %662 = vmatprep.subr.mxu0 0.0
  %663 = vmatpush1.msra.mxu0 0.0
  %664 = vmatprep.subr.mxu0 0.0
  %665 = vmatpush1.msra.mxu0 0.0
  %666 = vmatprep.subr.mxu0 0.0
  %667 = vmatpush1.msra.mxu0 0.0
  %668 = vmatprep.subr.mxu0 0.0
  %669 = vmatpush1.msra.mxu0 0.0
  %670 = vmatprep.subr.mxu0 0.0
  %671 = vmatpush1.msra.mxu0 0.0
  %672 = vmatprep.subr.mxu0 0.0
  %673 = vmatpush1.msra.mxu0 0.0
  %674 = vmatprep.subr.mxu0 0.0
  %675 = vmatpush1.msra.mxu0 0.0
  %676 = vmatprep.subr.mxu0 0.0
  %677 = vmatpush1.msra.mxu0 0.0
  %678 = vmatprep.mubr.f32.mxu0 0.0
  %679 = vmatmul.mubr.f32.gmra.mrb[0].mxu0 %v404
  %v680 = vpop.f32.mrb[0].mxu0
  %v681 = vadd.f32 0.0, %v680
  %v682 = vpop.f32.mrb[0].mxu0
  %683 = vdwg.mxu0
  %684 = vmatprep.subr.mxu0 0.0
  %685 = vmatpush1.msra.mxu0 %v582
  %686 = vmatprep.subr.mxu0 0.0
  %687 = vmatpush1.msra.mxu0 %v583
  %688 = vmatprep.subr.mxu0 0.0
  %689 = vmatpush1.msra.mxu0 %v584
  %690 = vmatprep.subr.mxu0 0.0
  %691 = vmatpush1.msra.mxu0 %v585
  %692 = vmatprep.subr.mxu0 0.0
  %693 = vmatpush1.msra.mxu0 %v586
  %694 = vmatprep.subr.mxu0 0.0
  %695 = vmatpush1.msra.mxu0 %v587
  %696 = vmatprep.subr.mxu0 0.0
  %697 = vmatpush1.msra.mxu0 %v588
  %698 = vmatprep.subr.mxu0 0.0
  %699 = vmatpush1.msra.mxu0 %v589
  %700 = vmatprep.subr.mxu0 0.0
  %701 = vmatpush1.msra.mxu0 %v590
  %702 = vmatprep.subr.mxu0 0.0
  %703 = vmatpush1.msra.mxu0 %v591
  %704 = vmatprep.subr.mxu0 0.0
  %705 = vmatpush1.msra.mxu0 %v592
  %706 = vmatprep.subr.mxu0 0.0
  %707 = vmatpush1.msra.mxu0 %v593
  %708 = vmatprep.subr.mxu0 0.0
  %709 = vmatpush1.msra.mxu0 %v594
  %710 = vmatprep.subr.mxu0 0.0
  %711 = vmatpush1.msra.mxu0 %v595
  %712 = vmatprep.subr.mxu0 0.0
  %713 = vmatpush1.msra.mxu0 %v596
  %714 = vmatprep.subr.mxu0 0.0
  %715 = vmatpush1.msra.mxu0 %v597
  %716 = vmatprep.subr.mxu0 0.0
  %717 = vmatpush1.msra.mxu0 0.0
  %718 = vmatprep.subr.mxu0 0.0
  %719 = vmatpush1.msra.mxu0 0.0
  %720 = vmatprep.subr.mxu0 0.0
  %721 = vmatpush1.msra.mxu0 0.0
  %722 = vmatprep.subr.mxu0 0.0
  %723 = vmatpush1.msra.mxu0 0.0
  %724 = vmatprep.subr.mxu0 0.0
  %725 = vmatpush1.msra.mxu0 0.0
  %726 = vmatprep.subr.mxu0 0.0
  %727 = vmatpush1.msra.mxu0 0.0
  %728 = vmatprep.subr.mxu0 0.0
  %729 = vmatpush1.msra.mxu0 0.0
  %730 = vmatprep.subr.mxu0 0.0
  %731 = vmatpush1.msra.mxu0 0.0
  %732 = vmatprep.subr.mxu0 0.0
  %733 = vmatpush1.msra.mxu0 0.0
  %734 = vmatprep.subr.mxu0 0.0
  %735 = vmatpush1.msra.mxu0 0.0
  %736 = vmatprep.subr.mxu0 0.0
  %737 = vmatpush1.msra.mxu0 0.0
  %738 = vmatprep.subr.mxu0 0.0
  %739 = vmatpush1.msra.mxu0 0.0
  %740 = vmatprep.subr.mxu0 0.0
  %741 = vmatpush1.msra.mxu0 0.0
  %742 = vmatprep.subr.mxu0 0.0
  %743 = vmatpush1.msra.mxu0 0.0
  %744 = vmatprep.subr.mxu0 0.0
  %745 = vmatpush1.msra.mxu0 0.0
  %746 = vmatprep.subr.mxu0 0.0
  %747 = vmatpush1.msra.mxu0 0.0
  %748 = vmatprep.mubr.f32.mxu0 0.0
  %749 = vmatmul.mubr.f32.gmra.mrb[0].mxu0 %v581
  %v750 = vpop.f32.mrb[0].mxu0
  %v751 = vadd.f32 %v681, %v750
  %v752 = vpop.f32.mrb[0].mxu0
  %753 = vdwg.mxu0
  %v754 = vadd.f32 %v751, %v51
  %v755 = vtanh.pop %v754
  %s756 = scalar_lea.vmem %s8, 8
  %757 = vst [vmem:[%s756] sm:$0xff] %v755
  %s758 = scalar_lea.vmem %s0, 16
  %v759 = vld [vmem:[%s758] sm:$0xff]
  %v760 = vld [vmem:[%s2] sm:$0xff]
  %v761 = vld [vmem:[%s2 + $0x8] sm:$0xff]
  %v762 = vld [vmem:[%s2 + $0x10] sm:$0xff]
  %v763 = vld [vmem:[%s2 + $0x18] sm:$0xff]
  %v764 = vld [vmem:[%s2 + $0x20] sm:$0xff]
  %v765 = vld [vmem:[%s2 + $0x28] sm:$0xff]
  %v766 = vld [vmem:[%s2 + $0x30] sm:$0xff]
  %v767 = vld [vmem:[%s2 + $0x38] sm:$0xff]
  %v768 = vld [vmem:[%s2 + $0x40] sm:$0xff]
  %v769 = vld [vmem:[%s2 + $0x48] sm:$0xff]
  %v770 = vld [vmem:[%s2 + $0x50] sm:$0xff]
  %v771 = vld [vmem:[%s2 + $0x58] sm:$0xff]
  %v772 = vld [vmem:[%s2 + $0x60] sm:$0xff]
  %v773 = vld [vmem:[%s2 + $0x68] sm:$0xff]
  %v774 = vld [vmem:[%s2 + $0x70] sm:$0xff]
  %v775 = vld [vmem:[%s2 + $0x78] sm:$0xff]
  %v776 = vld [vmem:[%s3] sm:$0xff]
  %v777 = vld [vmem:[%s3 + $0x8] sm:$0xff]
  %v778 = vld [vmem:[%s3 + $0x10] sm:$0xff]
  %v779 = vld [vmem:[%s3 + $0x18] sm:$0xff]
  %v780 = vld [vmem:[%s3 + $0x20] sm:$0xff]
  %v781 = vld [vmem:[%s3 + $0x28] sm:$0xff]
  %v782 = vld [vmem:[%s3 + $0x30] sm:$0xff]
  %v783 = vld [vmem:[%s3 + $0x38] sm:$0xff]
  %v784 = vld [vmem:[%s3 + $0x40] sm:$0xff]
  %v785 = vld [vmem:[%s3 + $0x48] sm:$0xff]
  %v786 = vld [vmem:[%s3 + $0x50] sm:$0xff]
  %v787 = vld [vmem:[%s3 + $0x58] sm:$0xff]
  %v788 = vld [vmem:[%s3 + $0x60] sm:$0xff]
  %v789 = vld [vmem:[%s3 + $0x68] sm:$0xff]
  %v790 = vld [vmem:[%s3 + $0x70] sm:$0xff]
  %v791 = vld [vmem:[%s3 + $0x78] sm:$0xff]
  %792 = vmatprep.subr.mxu0 0.0
  %793 = vmatpush1.msra.mxu0 %v776
  %794 = vmatprep.subr.mxu0 0.0
  %795 = vmatpush1.msra.mxu0 %v777
  %796 = vmatprep.subr.mxu0 0.0
  %797 = vmatpush1.msra.mxu0 %v778
  %798 = vmatprep.subr.mxu0 0.0
  %799 = vmatpush1.msra.mxu0 %v779
  %800 = vmatprep.subr.mxu0 0.0
  %801 = vmatpush1.msra.mxu0 %v780
  %802 = vmatprep.subr.mxu0 0.0
  %803 = vmatpush1.msra.mxu0 %v781
  %804 = vmatprep.subr.mxu0 0.0
  %805 = vmatpush1.msra.mxu0 %v782
  %806 = vmatprep.subr.mxu0 0.0
  %807 = vmatpush1.msra.mxu0 %v783
  %808 = vmatprep.subr.mxu0 0.0
  %809 = vmatpush1.msra.mxu0 %v784
  %810 = vmatprep.subr.mxu0 0.0
  %811 = vmatpush1.msra.mxu0 %v785
  %812 = vmatprep.subr.mxu0 0.0
  %813 = vmatpush1.msra.mxu0 %v786
  %814 = vmatprep.subr.mxu0 0.0
  %815 = vmatpush1.msra.mxu0 %v787
  %816 = vmatprep.subr.mxu0 0.0
  %817 = vmatpush1.msra.mxu0 %v788
  %818 = vmatprep.subr.mxu0 0.0
  %819 = vmatpush1.msra.mxu0 %v789
  %820 = vmatprep.subr.mxu0 0.0
  %821 = vmatpush1.msra.mxu0 %v790
  %822 = vmatprep.subr.mxu0 0.0
  %823 = vmatpush1.msra.mxu0 %v791
  %824 = vmatprep.subr.mxu0 0.0
  %825 = vmatpush1.msra.mxu0 0.0
  %826 = vmatprep.subr.mxu0 0.0
  %827 = vmatpush1.msra.mxu0 0.0
  %828 = vmatprep.subr.mxu0 0.0
  %829 = vmatpush1.msra.mxu0 0.0
  %830 = vmatprep.subr.mxu0 0.0
  %831 = vmatpush1.msra.mxu0 0.0
  %832 = vmatprep.subr.mxu0 0.0
  %833 = vmatpush1.msra.mxu0 0.0
  %834 = vmatprep.subr.mxu0 0.0
  %835 = vmatpush1.msra.mxu0 0.0
  %836 = vmatprep.subr.mxu0 0.0
  %837 = vmatpush1.msra.mxu0 0.0
  %838 = vmatprep.subr.mxu0 0.0
  %839 = vmatpush1.msra.mxu0 0.0
  %840 = vmatprep.subr.mxu0 0.0
  %841 = vmatpush1.msra.mxu0 0.0
  %842 = vmatprep.subr.mxu0 0.0
  %843 = vmatpush1.msra.mxu0 0.0
  %844 = vmatprep.subr.mxu0 0.0
  %845 = vmatpush1.msra.mxu0 0.0
  %846 = vmatprep.subr.mxu0 0.0
  %847 = vmatpush1.msra.mxu0 0.0
  %848 = vmatprep.subr.mxu0 0.0
  %849 = vmatpush1.msra.mxu0 0.0
  %850 = vmatprep.subr.mxu0 0.0
  %851 = vmatpush1.msra.mxu0 0.0
  %852 = vmatprep.subr.mxu0 0.0
  %853 = vmatpush1.msra.mxu0 0.0
  %854 = vmatprep.subr.mxu0 0.0
  %855 = vmatpush1.msra.mxu0 0.0
  %856 = vmatprep.mubr.f32.mxu0 0.0
  %857 = vmatmul.mubr.f32.gmra.mrb[0].mxu0 %v581
  %v858 = vpop.f32.mrb[0].mxu0
  %v859 = vadd.f32 0.0, %v858
  %v860 = vpop.f32.mrb[0].mxu0
  %861 = vdwg.mxu0
  %862 = vmatprep.subr.mxu0 0.0
  %863 = vmatpush1.msra.mxu0 %v760
  %864 = vmatprep.subr.mxu0 0.0
  %865 = vmatpush1.msra.mxu0 %v761
  %866 = vmatprep.subr.mxu0 0.0
  %867 = vmatpush1.msra.mxu0 %v762
  %868 = vmatprep.subr.mxu0 0.0
  %869 = vmatpush1.msra.mxu0 %v763
  %870 = vmatprep.subr.mxu0 0.0
  %871 = vmatpush1.msra.mxu0 %v764
  %872 = vmatprep.subr.mxu0 0.0
  %873 = vmatpush1.msra.mxu0 %v765
  %874 = vmatprep.subr.mxu0 0.0
  %875 = vmatpush1.msra.mxu0 %v766
  %876 = vmatprep.subr.mxu0 0.0
  %877 = vmatpush1.msra.mxu0 %v767
  %878 = vmatprep.subr.mxu0 0.0
  %879 = vmatpush1.msra.mxu0 %v768
  %880 = vmatprep.subr.mxu0 0.0
  %881 = vmatpush1.msra.mxu0 %v769
  %882 = vmatprep.subr.mxu0 0.0
  %883 = vmatpush1.msra.mxu0 %v770
  %884 = vmatprep.subr.mxu0 0.0
  %885 = vmatpush1.msra.mxu0 %v771
  %886 = vmatprep.subr.mxu0 0.0
  %887 = vmatpush1.msra.mxu0 %v772
  %888 = vmatprep.subr.mxu0 0.0
  %889 = vmatpush1.msra.mxu0 %v773
  %890 = vmatprep.subr.mxu0 0.0
  %891 = vmatpush1.msra.mxu0 %v774
  %892 = vmatprep.subr.mxu0 0.0
  %893 = vmatpush1.msra.mxu0 %v775
  %894 = vmatprep.subr.mxu0 0.0
  %895 = vmatpush1.msra.mxu0 0.0
  %896 = vmatprep.subr.mxu0 0.0
  %897 = vmatpush1.msra.mxu0 0.0
  %898 = vmatprep.subr.mxu0 0.0
  %899 = vmatpush1.msra.mxu0 0.0
  %900 = vmatprep.subr.mxu0 0.0
  %901 = vmatpush1.msra.mxu0 0.0
  %902 = vmatprep.subr.mxu0 0.0
  %903 = vmatpush1.msra.mxu0 0.0
  %904 = vmatprep.subr.mxu0 0.0
  %905 = vmatpush1.msra.mxu0 0.0
  %906 = vmatprep.subr.mxu0 0.0
  %907 = vmatpush1.msra.mxu0 0.0
  %908 = vmatprep.subr.mxu0 0.0
  %909 = vmatpush1.msra.mxu0 0.0
  %910 = vmatprep.subr.mxu0 0.0
  %911 = vmatpush1.msra.mxu0 0.0
  %912 = vmatprep.subr.mxu0 0.0
  %913 = vmatpush1.msra.mxu0 0.0
  %914 = vmatprep.subr.mxu0 0.0
  %915 = vmatpush1.msra.mxu0 0.0
  %916 = vmatprep.subr.mxu0 0.0
  %917 = vmatpush1.msra.mxu0 0.0
  %918 = vmatprep.subr.mxu0 0.0
  %919 = vmatpush1.msra.mxu0 0.0
  %920 = vmatprep.subr.mxu0 0.0
  %921 = vmatpush1.msra.mxu0 0.0
  %922 = vmatprep.subr.mxu0 0.0
  %923 = vmatpush1.msra.mxu0 0.0
  %924 = vmatprep.subr.mxu0 0.0
  %925 = vmatpush1.msra.mxu0 0.0
  %926 = vmatprep.mubr.f32.mxu0 0.0
  %927 = vmatmul.mubr.f32.gmra.mrb[0].mxu0 %v759
  %v928 = vpop.f32.mrb[0].mxu0
  %v929 = vadd.f32 %v859, %v928
  %v930 = vpop.f32.mrb[0].mxu0
  %931 = vdwg.mxu0
  %v932 = vadd.f32 %v929, %v44
  %v933 = vtanh.pop %v932
  %v934 = vld [vmem:[%s5] sm:$0xff]
  %v935 = vld [vmem:[%s5 + $0x8] sm:$0xff]
  %v936 = vld [vmem:[%s5 + $0x10] sm:$0xff]
  %v937 = vld [vmem:[%s5 + $0x18] sm:$0xff]
  %v938 = vld [vmem:[%s5 + $0x20] sm:$0xff]
  %v939 = vld [vmem:[%s5 + $0x28] sm:$0xff]
  %v940 = vld [vmem:[%s5 + $0x30] sm:$0xff]
  %v941 = vld [vmem:[%s5 + $0x38] sm:$0xff]
  %v942 = vld [vmem:[%s5 + $0x40] sm:$0xff]
  %v943 = vld [vmem:[%s5 + $0x48] sm:$0xff]
  %v944 = vld [vmem:[%s5 + $0x50] sm:$0xff]
  %v945 = vld [vmem:[%s5 + $0x58] sm:$0xff]
  %v946 = vld [vmem:[%s5 + $0x60] sm:$0xff]
  %v947 = vld [vmem:[%s5 + $0x68] sm:$0xff]
  %v948 = vld [vmem:[%s5 + $0x70] sm:$0xff]
  %v949 = vld [vmem:[%s5 + $0x78] sm:$0xff]
  %v950 = vld [vmem:[%s6] sm:$0xff]
  %v951 = vld [vmem:[%s6 + $0x8] sm:$0xff]
  %v952 = vld [vmem:[%s6 + $0x10] sm:$0xff]
  %v953 = vld [vmem:[%s6 + $0x18] sm:$0xff]
  %v954 = vld [vmem:[%s6 + $0x20] sm:$0xff]
  %v955 = vld [vmem:[%s6 + $0x28] sm:$0xff]
  %v956 = vld [vmem:[%s6 + $0x30] sm:$0xff]
  %v957 = vld [vmem:[%s6 + $0x38] sm:$0xff]
  %v958 = vld [vmem:[%s6 + $0x40] sm:$0xff]
  %v959 = vld [vmem:[%s6 + $0x48] sm:$0xff]
  %v960 = vld [vmem:[%s6 + $0x50] sm:$0xff]
  %v961 = vld [vmem:[%s6 + $0x58] sm:$0xff]
  %v962 = vld [vmem:[%s6 + $0x60] sm:$0xff]
  %v963 = vld [vmem:[%s6 + $0x68] sm:$0xff]
  %v964 = vld [vmem:[%s6 + $0x70] sm:$0xff]
  %v965 = vld [vmem:[%s6 + $0x78] sm:$0xff]
  %966 = vmatprep.subr.mxu0 0.0
  %967 = vmatpush1.msra.mxu0 %v950
  %968 = vmatprep.subr.mxu0 0.0
  %969 = vmatpush1.msra.mxu0 %v951
  %970 = vmatprep.subr.mxu0 0.0
  %971 = vmatpush1.msra.mxu0 %v952
  %972 = vmatprep.subr.mxu0 0.0
  %973 = vmatpush1.msra.mxu0 %v953
  %974 = vmatprep.subr.mxu0 0.0
  %975 = vmatpush1.msra.mxu0 %v954
  %976 = vmatprep.subr.mxu0 0.0
  %977 = vmatpush1.msra.mxu0 %v955
  %978 = vmatprep.subr.mxu0 0.0
  %979 = vmatpush1.msra.mxu0 %v956
  %980 = vmatprep.subr.mxu0 0.0
  %981 = vmatpush1.msra.mxu0 %v957
  %982 = vmatprep.subr.mxu0 0.0
  %983 = vmatpush1.msra.mxu0 %v958
  %984 = vmatprep.subr.mxu0 0.0
  %985 = vmatpush1.msra.mxu0 %v959
  %986 = vmatprep.subr.mxu0 0.0
  %987 = vmatpush1.msra.mxu0 %v960
  %988 = vmatprep.subr.mxu0 0.0
  %989 = vmatpush1.msra.mxu0 %v961
  %990 = vmatprep.subr.mxu0 0.0
  %991 = vmatpush1.msra.mxu0 %v962
  %992 = vmatprep.subr.mxu0 0.0
  %993 = vmatpush1.msra.mxu0 %v963
  %994 = vmatprep.subr.mxu0 0.0
  %995 = vmatpush1.msra.mxu0 %v964
  %996 = vmatprep.subr.mxu0 0.0
  %997 = vmatpush1.msra.mxu0 %v965
  %998 = vmatprep.subr.mxu0 0.0
  %999 = vmatpush1.msra.mxu0 0.0
  %1000 = vmatprep.subr.mxu0 0.0
  %1001 = vmatpush1.msra.mxu0 0.0
  %1002 = vmatprep.subr.mxu0 0.0
  %1003 = vmatpush1.msra.mxu0 0.0
  %1004 = vmatprep.subr.mxu0 0.0
  %1005 = vmatpush1.msra.mxu0 0.0
  %1006 = vmatprep.subr.mxu0 0.0
  %1007 = vmatpush1.msra.mxu0 0.0
  %1008 = vmatprep.subr.mxu0 0.0
  %1009 = vmatpush1.msra.mxu0 0.0
  %1010 = vmatprep.subr.mxu0 0.0
  %1011 = vmatpush1.msra.mxu0 0.0
  %1012 = vmatprep.subr.mxu0 0.0
  %1013 = vmatpush1.msra.mxu0 0.0
  %1014 = vmatprep.subr.mxu0 0.0
  %1015 = vmatpush1.msra.mxu0 0.0
  %1016 = vmatprep.subr.mxu0 0.0
  %1017 = vmatpush1.msra.mxu0 0.0
  %1018 = vmatprep.subr.mxu0 0.0
  %1019 = vmatpush1.msra.mxu0 0.0
  %1020 = vmatprep.subr.mxu0 0.0
  %1021 = vmatpush1.msra.mxu0 0.0
  %1022 = vmatprep.subr.mxu0 0.0
  %1023 = vmatpush1.msra.mxu0 0.0
  %1024 = vmatprep.subr.mxu0 0.0
  %1025 = vmatpush1.msra.mxu0 0.0
  %1026 = vmatprep.subr.mxu0 0.0
  %1027 = vmatpush1.msra.mxu0 0.0
  %1028 = vmatprep.subr.mxu0 0.0
  %1029 = vmatpush1.msra.mxu0 0.0
  %1030 = vmatprep.mubr.f32.mxu0 0.0
  %1031 = vmatmul.mubr.f32.gmra.mrb[0].mxu0 %v755
  %v1032 = vpop.f32.mrb[0].mxu0
  %v1033 = vadd.f32 0.0, %v1032
  %v1034 = vpop.f32.mrb[0].mxu0
  %1035 = vdwg.mxu0
  %1036 = vmatprep.subr.mxu0 0.0
  %1037 = vmatpush1.msra.mxu0 %v934
  %1038 = vmatprep.subr.mxu0 0.0
  %1039 = vmatpush1.msra.mxu0 %v935
  %1040 = vmatprep.subr.mxu0 0.0
  %1041 = vmatpush1.msra.mxu0 %v936
  %1042 = vmatprep.subr.mxu0 0.0
  %1043 = vmatpush1.msra.mxu0 %v937
  %1044 = vmatprep.subr.mxu0 0.0
  %1045 = vmatpush1.msra.mxu0 %v938
  %1046 = vmatprep.subr.mxu0 0.0
  %1047 = vmatpush1.msra.mxu0 %v939
  %1048 = vmatprep.subr.mxu0 0.0
  %1049 = vmatpush1.msra.mxu0 %v940
  %1050 = vmatprep.subr.mxu0 0.0
  %1051 = vmatpush1.msra.mxu0 %v941
  %1052 = vmatprep.subr.mxu0 0.0
  %1053 = vmatpush1.msra.mxu0 %v942
  %1054 = vmatprep.subr.mxu0 0.0
  %1055 = vmatpush1.msra.mxu0 %v943
  %1056 = vmatprep.subr.mxu0 0.0
  %1057 = vmatpush1.msra.mxu0 %v944
  %1058 = vmatprep.subr.mxu0 0.0
  %1059 = vmatpush1.msra.mxu0 %v945
  %1060 = vmatprep.subr.mxu0 0.0
  %1061 = vmatpush1.msra.mxu0 %v946
  %1062 = vmatprep.subr.mxu0 0.0
  %1063 = vmatpush1.msra.mxu0 %v947
  %1064 = vmatprep.subr.mxu0 0.0
  %1065 = vmatpush1.msra.mxu0 %v948
  %1066 = vmatprep.subr.mxu0 0.0
  %1067 = vmatpush1.msra.mxu0 %v949
  %1068 = vmatprep.subr.mxu0 0.0
  %1069 = vmatpush1.msra.mxu0 0.0
  %1070 = vmatprep.subr.mxu0 0.0
  %1071 = vmatpush1.msra.mxu0 0.0
  %1072 = vmatprep.subr.mxu0 0.0
  %1073 = vmatpush1.msra.mxu0 0.0
  %1074 = vmatprep.subr.mxu0 0.0
  %1075 = vmatpush1.msra.mxu0 0.0
  %1076 = vmatprep.subr.mxu0 0.0
  %1077 = vmatpush1.msra.mxu0 0.0
  %1078 = vmatprep.subr.mxu0 0.0
  %1079 = vmatpush1.msra.mxu0 0.0
  %1080 = vmatprep.subr.mxu0 0.0
  %1081 = vmatpush1.msra.mxu0 0.0
  %1082 = vmatprep.subr.mxu0 0.0
  %1083 = vmatpush1.msra.mxu0 0.0
  %1084 = vmatprep.subr.mxu0 0.0
  %1085 = vmatpush1.msra.mxu0 0.0
  %1086 = vmatprep.subr.mxu0 0.0
  %1087 = vmatpush1.msra.mxu0 0.0
  %1088 = vmatprep.subr.mxu0 0.0
  %1089 = vmatpush1.msra.mxu0 0.0
  %1090 = vmatprep.subr.mxu0 0.0
  %1091 = vmatpush1.msra.mxu0 0.0
  %1092 = vmatprep.subr.mxu0 0.0
  %1093 = vmatpush1.msra.mxu0 0.0
  %1094 = vmatprep.subr.mxu0 0.0
  %1095 = vmatpush1.msra.mxu0 0.0
  %1096 = vmatprep.subr.mxu0 0.0
  %1097 = vmatpush1.msra.mxu0 0.0
  %1098 = vmatprep.subr.mxu0 0.0
  %1099 = vmatpush1.msra.mxu0 0.0
  %1100 = vmatprep.mubr.f32.mxu0 0.0
  %1101 = vmatmul.mubr.f32.gmra.mrb[0].mxu0 %v933
  %v1102 = vpop.f32.mrb[0].mxu0
  %v1103 = vadd.f32 %v1033, %v1102
  %v1104 = vpop.f32.mrb[0].mxu0
  %1105 = vdwg.mxu0
  %v1106 = vadd.f32 %v1103, %v51
  %v1107 = vtanh.pop %v1106
  %s1108 = scalar_lea.vmem %s8, 16
  %1109 = vst [vmem:[%s1108] sm:$0xff] %v1107
  %s1110 = scalar_lea.vmem %s0, 24
  %v1111 = vld [vmem:[%s1110] sm:$0xff]
  %v1112 = vld [vmem:[%s2] sm:$0xff]
  %v1113 = vld [vmem:[%s2 + $0x8] sm:$0xff]
  %v1114 = vld [vmem:[%s2 + $0x10] sm:$0xff]
  %v1115 = vld [vmem:[%s2 + $0x18] sm:$0xff]
  %v1116 = vld [vmem:[%s2 + $0x20] sm:$0xff]
  %v1117 = vld [vmem:[%s2 + $0x28] sm:$0xff]
  %v1118 = vld [vmem:[%s2 + $0x30] sm:$0xff]
  %v1119 = vld [vmem:[%s2 + $0x38] sm:$0xff]
  %v1120 = vld [vmem:[%s2 + $0x40] sm:$0xff]
  %v1121 = vld [vmem:[%s2 + $0x48] sm:$0xff]
  %v1122 = vld [vmem:[%s2 + $0x50] sm:$0xff]
  %v1123 = vld [vmem:[%s2 + $0x58] sm:$0xff]
  %v1124 = vld [vmem:[%s2 + $0x60] sm:$0xff]
  %v1125 = vld [vmem:[%s2 + $0x68] sm:$0xff]
  %v1126 = vld [vmem:[%s2 + $0x70] sm:$0xff]
  %v1127 = vld [vmem:[%s2 + $0x78] sm:$0xff]
  %v1128 = vld [vmem:[%s3] sm:$0xff]
  %v1129 = vld [vmem:[%s3 + $0x8] sm:$0xff]
  %v1130 = vld [vmem:[%s3 + $0x10] sm:$0xff]
  %v1131 = vld [vmem:[%s3 + $0x18] sm:$0xff]
  %v1132 = vld [vmem:[%s3 + $0x20] sm:$0xff]
  %v1133 = vld [vmem:[%s3 + $0x28] sm:$0xff]
  %v1134 = vld [vmem:[%s3 + $0x30] sm:$0xff]
  %v1135 = vld [vmem:[%s3 + $0x38] sm:$0xff]
  %v1136 = vld [vmem:[%s3 + $0x40] sm:$0xff]
  %v1137 = vld [vmem:[%s3 + $0x48] sm:$0xff]
  %v1138 = vld [vmem:[%s3 + $0x50] sm:$0xff]
  %v1139 = vld [vmem:[%s3 + $0x58] sm:$0xff]
  %v1140 = vld [vmem:[%s3 + $0x60] sm:$0xff]
  %v1141 = vld [vmem:[%s3 + $0x68] sm:$0xff]
  %v1142 = vld [vmem:[%s3 + $0x70] sm:$0xff]
  %v1143 = vld [vmem:[%s3 + $0x78] sm:$0xff]
  %1144 = vmatprep.subr.mxu0 0.0
  %1145 = vmatpush1.msra.mxu0 %v1128
  %1146 = vmatprep.subr.mxu0 0.0
  %1147 = vmatpush1.msra.mxu0 %v1129
  %1148 = vmatprep.subr.mxu0 0.0
  %1149 = vmatpush1.msra.mxu0 %v1130
  %1150 = vmatprep.subr.mxu0 0.0
  %1151 = vmatpush1.msra.mxu0 %v1131
  %1152 = vmatprep.subr.mxu0 0.0
  %1153 = vmatpush1.msra.mxu0 %v1132
  %1154 = vmatprep.subr.mxu0 0.0
  %1155 = vmatpush1.msra.mxu0 %v1133
  %1156 = vmatprep.subr.mxu0 0.0
  %1157 = vmatpush1.msra.mxu0 %v1134
  %1158 = vmatprep.subr.mxu0 0.0
  %1159 = vmatpush1.msra.mxu0 %v1135
  %1160 = vmatprep.subr.mxu0 0.0
  %1161 = vmatpush1.msra.mxu0 %v1136
  %1162 = vmatprep.subr.mxu0 0.0
  %1163 = vmatpush1.msra.mxu0 %v1137
  %1164 = vmatprep.subr.mxu0 0.0
  %1165 = vmatpush1.msra.mxu0 %v1138
  %1166 = vmatprep.subr.mxu0 0.0
  %1167 = vmatpush1.msra.mxu0 %v1139
  %1168 = vmatprep.subr.mxu0 0.0
  %1169 = vmatpush1.msra.mxu0 %v1140
  %1170 = vmatprep.subr.mxu0 0.0
  %1171 = vmatpush1.msra.mxu0 %v1141
  %1172 = vmatprep.subr.mxu0 0.0
  %1173 = vmatpush1.msra.mxu0 %v1142
  %1174 = vmatprep.subr.mxu0 0.0
  %1175 = vmatpush1.msra.mxu0 %v1143
  %1176 = vmatprep.subr.mxu0 0.0
  %1177 = vmatpush1.msra.mxu0 0.0
  %1178 = vmatprep.subr.mxu0 0.0
  %1179 = vmatpush1.msra.mxu0 0.0
  %1180 = vmatprep.subr.mxu0 0.0
  %1181 = vmatpush1.msra.mxu0 0.0
  %1182 = vmatprep.subr.mxu0 0.0
  %1183 = vmatpush1.msra.mxu0 0.0
  %1184 = vmatprep.subr.mxu0 0.0
  %1185 = vmatpush1.msra.mxu0 0.0
  %1186 = vmatprep.subr.mxu0 0.0
  %1187 = vmatpush1.msra.mxu0 0.0
  %1188 = vmatprep.subr.mxu0 0.0
  %1189 = vmatpush1.msra.mxu0 0.0
  %1190 = vmatprep.subr.mxu0 0.0
  %1191 = vmatpush1.msra.mxu0 0.0
  %1192 = vmatprep.subr.mxu0 0.0
  %1193 = vmatpush1.msra.mxu0 0.0
  %1194 = vmatprep.subr.mxu0 0.0
  %1195 = vmatpush1.msra.mxu0 0.0
  %1196 = vmatprep.subr.mxu0 0.0
  %1197 = vmatpush1.msra.mxu0 0.0
  %1198 = vmatprep.subr.mxu0 0.0
  %1199 = vmatpush1.msra.mxu0 0.0
  %1200 = vmatprep.subr.mxu0 0.0
  %1201 = vmatpush1.msra.mxu0 0.0
  %1202 = vmatprep.subr.mxu0 0.0
  %1203 = vmatpush1.msra.mxu0 0.0
  %1204 = vmatprep.subr.mxu0 0.0
  %1205 = vmatpush1.msra.mxu0 0.0
  %1206 = vmatprep.subr.mxu0 0.0
  %1207 = vmatpush1.msra.mxu0 0.0
  %1208 = vmatprep.mubr.f32.mxu0 0.0
  %1209 = vmatmul.mubr.f32.gmra.mrb[0].mxu0 %v933
  %v1210 = vpop.f32.mrb[0].mxu0
  %v1211 = vadd.f32 0.0, %v1210
  %v1212 = vpop.f32.mrb[0].mxu0
  %1213 = vdwg.mxu0
  %1214 = vmatprep.subr.mxu0 0.0
  %1215 = vmatpush1.msra.mxu0 %v1112
  %1216 = vmatprep.subr.mxu0 0.0
  %1217 = vmatpush1.msra.mxu0 %v1113
  %1218 = vmatprep.subr.mxu0 0.0
  %1219 = vmatpush1.msra.mxu0 %v1114
  %1220 = vmatprep.subr.mxu0 0.0
  %1221 = vmatpush1.msra.mxu0 %v1115
  %1222 = vmatprep.subr.mxu0 0.0
  %1223 = vmatpush1.msra.mxu0 %v1116
  %1224 = vmatprep.subr.mxu0 0.0
  %1225 = vmatpush1.msra.mxu0 %v1117
  %1226 = vmatprep.subr.mxu0 0.0
  %1227 = vmatpush1.msra.mxu0 %v1118
  %1228 = vmatprep.subr.mxu0 0.0
  %1229 = vmatpush1.msra.mxu0 %v1119
  %1230 = vmatprep.subr.mxu0 0.0
  %1231 = vmatpush1.msra.mxu0 %v1120
  %1232 = vmatprep.subr.mxu0 0.0
  %1233 = vmatpush1.msra.mxu0 %v1121
  %1234 = vmatprep.subr.mxu0 0.0
  %1235 = vmatpush1.msra.mxu0 %v1122
  %1236 = vmatprep.subr.mxu0 0.0
  %1237 = vmatpush1.msra.mxu0 %v1123
  %1238 = vmatprep.subr.mxu0 0.0
  %1239 = vmatpush1.msra.mxu0 %v1124
  %1240 = vmatprep.subr.mxu0 0.0
  %1241 = vmatpush1.msra.mxu0 %v1125
  %1242 = vmatprep.subr.mxu0 0.0
  %1243 = vmatpush1.msra.mxu0 %v1126
  %1244 = vmatprep.subr.mxu0 0.0
  %1245 = vmatpush1.msra.mxu0 %v1127
  %1246 = vmatprep.subr.mxu0 0.0
  %1247 = vmatpush1.msra.mxu0 0.0
  %1248 = vmatprep.subr.mxu0 0.0
  %1249 = vmatpush1.msra.mxu0 0.0
  %1250 = vmatprep.subr.mxu0 0.0
  %1251 = vmatpush1.msra.mxu0 0.0
  %1252 = vmatprep.subr.mxu0 0.0
  %1253 = vmatpush1.msra.mxu0 0.0
  %1254 = vmatprep.subr.mxu0 0.0
  %1255 = vmatpush1.msra.mxu0 0.0
  %1256 = vmatprep.subr.mxu0 0.0
  %1257 = vmatpush1.msra.mxu0 0.0
  %1258 = vmatprep.subr.mxu0 0.0
  %1259 = vmatpush1.msra.mxu0 0.0
  %1260 = vmatprep.subr.mxu0 0.0
  %1261 = vmatpush1.msra.mxu0 0.0
  %1262 = vmatprep.subr.mxu0 0.0
  %1263 = vmatpush1.msra.mxu0 0.0
  %1264 = vmatprep.subr.mxu0 0.0
  %1265 = vmatpush1.msra.mxu0 0.0
  %1266 = vmatprep.subr.mxu0 0.0
  %1267 = vmatpush1.msra.mxu0 0.0
  %1268 = vmatprep.subr.mxu0 0.0
  %1269 = vmatpush1.msra.mxu0 0.0
  %1270 = vmatprep.subr.mxu0 0.0
  %1271 = vmatpush1.msra.mxu0 0.0
  %1272 = vmatprep.subr.mxu0 0.0
  %1273 = vmatpush1.msra.mxu0 0.0
  %1274 = vmatprep.subr.mxu0 0.0
  %1275 = vmatpush1.msra.mxu0 0.0
  %1276 = vmatprep.subr.mxu0 0.0
  %1277 = vmatpush1.msra.mxu0 0.0
  %1278 = vmatprep.mubr.f32.mxu0 0.0
  %1279 = vmatmul.mubr.f32.gmra.mrb[0].mxu0 %v1111
  %v1280 = vpop.f32.mrb[0].mxu0
  %v1281 = vadd.f32 %v1211, %v1280
  %v1282 = vpop.f32.mrb[0].mxu0
  %1283 = vdwg.mxu0
  %v1284 = vadd.f32 %v1281, %v44
  %v1285 = vtanh.pop %v1284
  %v1286 = vld [vmem:[%s5] sm:$0xff]
  %v1287 = vld [vmem:[%s5 + $0x8] sm:$0xff]
  %v1288 = vld [vmem:[%s5 + $0x10] sm:$0xff]
  %v1289 = vld [vmem:[%s5 + $0x18] sm:$0xff]
  %v1290 = vld [vmem:[%s5 + $0x20] sm:$0xff]
  %v1291 = vld [vmem:[%s5 + $0x28] sm:$0xff]
  %v1292 = vld [vmem:[%s5 + $0x30] sm:$0xff]
  %v1293 = vld [vmem:[%s5 + $0x38] sm:$0xff]
  %v1294 = vld [vmem:[%s5 + $0x40] sm:$0xff]
  %v1295 = vld [vmem:[%s5 + $0x48] sm:$0xff]
  %v1296 = vld [vmem:[%s5 + $0x50] sm:$0xff]
  %v1297 = vld [vmem:[%s5 + $0x58] sm:$0xff]
  %v1298 = vld [vmem:[%s5 + $0x60] sm:$0xff]
  %v1299 = vld [vmem:[%s5 + $0x68] sm:$0xff]
  %v1300 = vld [vmem:[%s5 + $0x70] sm:$0xff]
  %v1301 = vld [vmem:[%s5 + $0x78] sm:$0xff]
  %v1302 = vld [vmem:[%s6] sm:$0xff]
  %v1303 = vld [vmem:[%s6 + $0x8] sm:$0xff]
  %v1304 = vld [vmem:[%s6 + $0x10] sm:$0xff]
  %v1305 = vld [vmem:[%s6 + $0x18] sm:$0xff]
  %v1306 = vld [vmem:[%s6 + $0x20] sm:$0xff]
  %v1307 = vld [vmem:[%s6 + $0x28] sm:$0xff]
  %v1308 = vld [vmem:[%s6 + $0x30] sm:$0xff]
  %v1309 = vld [vmem:[%s6 + $0x38] sm:$0xff]
  %v1310 = vld [vmem:[%s6 + $0x40] sm:$0xff]
  %v1311 = vld [vmem:[%s6 + $0x48] sm:$0xff]
  %v1312 = vld [vmem:[%s6 + $0x50] sm:$0xff]
  %v1313 = vld [vmem:[%s6 + $0x58] sm:$0xff]
  %v1314 = vld [vmem:[%s6 + $0x60] sm:$0xff]
  %v1315 = vld [vmem:[%s6 + $0x68] sm:$0xff]
  %v1316 = vld [vmem:[%s6 + $0x70] sm:$0xff]
  %v1317 = vld [vmem:[%s6 + $0x78] sm:$0xff]
  %1318 = vmatprep.subr.mxu0 0.0
  %1319 = vmatpush1.msra.mxu0 %v1302
  %1320 = vmatprep.subr.mxu0 0.0
  %1321 = vmatpush1.msra.mxu0 %v1303
  %1322 = vmatprep.subr.mxu0 0.0
  %1323 = vmatpush1.msra.mxu0 %v1304
  %1324 = vmatprep.subr.mxu0 0.0
  %1325 = vmatpush1.msra.mxu0 %v1305
  %1326 = vmatprep.subr.mxu0 0.0
  %1327 = vmatpush1.msra.mxu0 %v1306
  %1328 = vmatprep.subr.mxu0 0.0
  %1329 = vmatpush1.msra.mxu0 %v1307
  %1330 = vmatprep.subr.mxu0 0.0
  %1331 = vmatpush1.msra.mxu0 %v1308
  %1332 = vmatprep.subr.mxu0 0.0
  %1333 = vmatpush1.msra.mxu0 %v1309
  %1334 = vmatprep.subr.mxu0 0.0
  %1335 = vmatpush1.msra.mxu0 %v1310
  %1336 = vmatprep.subr.mxu0 0.0
  %1337 = vmatpush1.msra.mxu0 %v1311
  %1338 = vmatprep.subr.mxu0 0.0
  %1339 = vmatpush1.msra.mxu0 %v1312
  %1340 = vmatprep.subr.mxu0 0.0
  %1341 = vmatpush1.msra.mxu0 %v1313
  %1342 = vmatprep.subr.mxu0 0.0
  %1343 = vmatpush1.msra.mxu0 %v1314
  %1344 = vmatprep.subr.mxu0 0.0
  %1345 = vmatpush1.msra.mxu0 %v1315
  %1346 = vmatprep.subr.mxu0 0.0
  %1347 = vmatpush1.msra.mxu0 %v1316
  %1348 = vmatprep.subr.mxu0 0.0
  %1349 = vmatpush1.msra.mxu0 %v1317
  %1350 = vmatprep.subr.mxu0 0.0
  %1351 = vmatpush1.msra.mxu0 0.0
  %1352 = vmatprep.subr.mxu0 0.0
  %1353 = vmatpush1.msra.mxu0 0.0
  %1354 = vmatprep.subr.mxu0 0.0
  %1355 = vmatpush1.msra.mxu0 0.0
  %1356 = vmatprep.subr.mxu0 0.0
  %1357 = vmatpush1.msra.mxu0 0.0
  %1358 = vmatprep.subr.mxu0 0.0
  %1359 = vmatpush1.msra.mxu0 0.0
  %1360 = vmatprep.subr.mxu0 0.0
  %1361 = vmatpush1.msra.mxu0 0.0
  %1362 = vmatprep.subr.mxu0 0.0
  %1363 = vmatpush1.msra.mxu0 0.0
  %1364 = vmatprep.subr.mxu0 0.0
  %1365 = vmatpush1.msra.mxu0 0.0
  %1366 = vmatprep.subr.mxu0 0.0
  %1367 = vmatpush1.msra.mxu0 0.0
  %1368 = vmatprep.subr.mxu0 0.0
  %1369 = vmatpush1.msra.mxu0 0.0
  %1370 = vmatprep.subr.mxu0 0.0
  %1371 = vmatpush1.msra.mxu0 0.0
  %1372 = vmatprep.subr.mxu0 0.0
  %1373 = vmatpush1.msra.mxu0 0.0
  %1374 = vmatprep.subr.mxu0 0.0
  %1375 = vmatpush1.msra.mxu0 0.0
  %1376 = vmatprep.subr.mxu0 0.0
  %1377 = vmatpush1.msra.mxu0 0.0
  %1378 = vmatprep.subr.mxu0 0.0
  %1379 = vmatpush1.msra.mxu0 0.0
  %1380 = vmatprep.subr.mxu0 0.0
  %1381 = vmatpush1.msra.mxu0 0.0
  %1382 = vmatprep.mubr.f32.mxu0 0.0
  %1383 = vmatmul.mubr.f32.gmra.mrb[0].mxu0 %v1107
  %v1384 = vpop.f32.mrb[0].mxu0
  %v1385 = vadd.f32 0.0, %v1384
  %v1386 = vpop.f32.mrb[0].mxu0
  %1387 = vdwg.mxu0
  %1388 = vmatprep.subr.mxu0 0.0
  %1389 = vmatpush1.msra.mxu0 %v1286
  %1390 = vmatprep.subr.mxu0 0.0
  %1391 = vmatpush1.msra.mxu0 %v1287
  %1392 = vmatprep.subr.mxu0 0.0
  %1393 = vmatpush1.msra.mxu0 %v1288
  %1394 = vmatprep.subr.mxu0 0.0
  %1395 = vmatpush1.msra.mxu0 %v1289
  %1396 = vmatprep.subr.mxu0 0.0
  %1397 = vmatpush1.msra.mxu0 %v1290
  %1398 = vmatprep.subr.mxu0 0.0
  %1399 = vmatpush1.msra.mxu0 %v1291
  %1400 = vmatprep.subr.mxu0 0.0
  %1401 = vmatpush1.msra.mxu0 %v1292
  %1402 = vmatprep.subr.mxu0 0.0
  %1403 = vmatpush1.msra.mxu0 %v1293
  %1404 = vmatprep.subr.mxu0 0.0
  %1405 = vmatpush1.msra.mxu0 %v1294
  %1406 = vmatprep.subr.mxu0 0.0
  %1407 = vmatpush1.msra.mxu0 %v1295
  %1408 = vmatprep.subr.mxu0 0.0
  %1409 = vmatpush1.msra.mxu0 %v1296
  %1410 = vmatprep.subr.mxu0 0.0
  %1411 = vmatpush1.msra.mxu0 %v1297
  %1412 = vmatprep.subr.mxu0 0.0
  %1413 = vmatpush1.msra.mxu0 %v1298
  %1414 = vmatprep.subr.mxu0 0.0
  %1415 = vmatpush1.msra.mxu0 %v1299
  %1416 = vmatprep.subr.mxu0 0.0
  %1417 = vmatpush1.msra.mxu0 %v1300
  %1418 = vmatprep.subr.mxu0 0.0
  %1419 = vmatpush1.msra.mxu0 %v1301
  %1420 = vmatprep.subr.mxu0 0.0
  %1421 = vmatpush1.msra.mxu0 0.0
  %1422 = vmatprep.subr.mxu0 0.0
  %1423 = vmatpush1.msra.mxu0 0.0
  %1424 = vmatprep.subr.mxu0 0.0
  %1425 = vmatpush1.msra.mxu0 0.0
  %1426 = vmatprep.subr.mxu0 0.0
  %1427 = vmatpush1.msra.mxu0 0.0
  %1428 = vmatprep.subr.mxu0 0.0
  %1429 = vmatpush1.msra.mxu0 0.0
  %1430 = vmatprep.subr.mxu0 0.0
  %1431 = vmatpush1.msra.mxu0 0.0
  %1432 = vmatprep.subr.mxu0 0.0
  %1433 = vmatpush1.msra.mxu0 0.0
  %1434 = vmatprep.subr.mxu0 0.0
  %1435 = vmatpush1.msra.mxu0 0.0
  %1436 = vmatprep.subr.mxu0 0.0
  %1437 = vmatpush1.msra.mxu0 0.0
  %1438 = vmatprep.subr.mxu0 0.0
  %1439 = vmatpush1.msra.mxu0 0.0
  %1440 = vmatprep.subr.mxu0 0.0
  %1441 = vmatpush1.msra.mxu0 0.0
  %1442 = vmatprep.subr.mxu0 0.0
  %1443 = vmatpush1.msra.mxu0 0.0
  %1444 = vmatprep.subr.mxu0 0.0
  %1445 = vmatpush1.msra.mxu0 0.0
  %1446 = vmatprep.subr.mxu0 0.0
  %1447 = vmatpush1.msra.mxu0 0.0
  %1448 = vmatprep.subr.mxu0 0.0
  %1449 = vmatpush1.msra.mxu0 0.0
  %1450 = vmatprep.subr.mxu0 0.0
  %1451 = vmatpush1.msra.mxu0 0.0
  %1452 = vmatprep.mubr.f32.mxu0 0.0
  %1453 = vmatmul.mubr.f32.gmra.mrb[0].mxu0 %v1285
  %v1454 = vpop.f32.mrb[0].mxu0
  %v1455 = vadd.f32 %v1385, %v1454
  %v1456 = vpop.f32.mrb[0].mxu0
  %1457 = vdwg.mxu0
  %v1458 = vadd.f32 %v1455, %v51
  %v1459 = vtanh.pop %v1458
  %s1460 = scalar_lea.vmem %s8, 24
  %1461 = vst [vmem:[%s1460] sm:$0xff] %v1459
  %s1462 = scalar_lea.vmem %s0, 32
  %v1463 = vld [vmem:[%s1462] sm:$0xff]
  %v1464 = vld [vmem:[%s2] sm:$0xff]
  %v1465 = vld [vmem:[%s2 + $0x8] sm:$0xff]
  %v1466 = vld [vmem:[%s2 + $0x10] sm:$0xff]
  %v1467 = vld [vmem:[%s2 + $0x18] sm:$0xff]
  %v1468 = vld [vmem:[%s2 + $0x20] sm:$0xff]
  %v1469 = vld [vmem:[%s2 + $0x28] sm:$0xff]
  %v1470 = vld [vmem:[%s2 + $0x30] sm:$0xff]
  %v1471 = vld [vmem:[%s2 + $0x38] sm:$0xff]
  %v1472 = vld [vmem:[%s2 + $0x40] sm:$0xff]
  %v1473 = vld [vmem:[%s2 + $0x48] sm:$0xff]
  %v1474 = vld [vmem:[%s2 + $0x50] sm:$0xff]
  %v1475 = vld [vmem:[%s2 + $0x58] sm:$0xff]
  %v1476 = vld [vmem:[%s2 + $0x60] sm:$0xff]
  %v1477 = vld [vmem:[%s2 + $0x68] sm:$0xff]
  %v1478 = vld [vmem:[%s2 + $0x70] sm:$0xff]
  %v1479 = vld [vmem:[%s2 + $0x78] sm:$0xff]
  %v1480 = vld [vmem:[%s3] sm:$0xff]
  %v1481 = vld [vmem:[%s3 + $0x8] sm:$0xff]
  %v1482 = vld [vmem:[%s3 + $0x10] sm:$0xff]
  %v1483 = vld [vmem:[%s3 + $0x18] sm:$0xff]
  %v1484 = vld [vmem:[%s3 + $0x20] sm:$0xff]
  %v1485 = vld [vmem:[%s3 + $0x28] sm:$0xff]
  %v1486 = vld [vmem:[%s3 + $0x30] sm:$0xff]
  %v1487 = vld [vmem:[%s3 + $0x38] sm:$0xff]
  %v1488 = vld [vmem:[%s3 + $0x40] sm:$0xff]
  %v1489 = vld [vmem:[%s3 + $0x48] sm:$0xff]
  %v1490 = vld [vmem:[%s3 + $0x50] sm:$0xff]
  %v1491 = vld [vmem:[%s3 + $0x58] sm:$0xff]
  %v1492 = vld [vmem:[%s3 + $0x60] sm:$0xff]
  %v1493 = vld [vmem:[%s3 + $0x68] sm:$0xff]
  %v1494 = vld [vmem:[%s3 + $0x70] sm:$0xff]
  %v1495 = vld [vmem:[%s3 + $0x78] sm:$0xff]
  %1496 = vmatprep.subr.mxu0 0.0
  %1497 = vmatpush1.msra.mxu0 %v1480
  %1498 = vmatprep.subr.mxu0 0.0
  %1499 = vmatpush1.msra.mxu0 %v1481
  %1500 = vmatprep.subr.mxu0 0.0
  %1501 = vmatpush1.msra.mxu0 %v1482
  %1502 = vmatprep.subr.mxu0 0.0
  %1503 = vmatpush1.msra.mxu0 %v1483
  %1504 = vmatprep.subr.mxu0 0.0
  %1505 = vmatpush1.msra.mxu0 %v1484
  %1506 = vmatprep.subr.mxu0 0.0
  %1507 = vmatpush1.msra.mxu0 %v1485
  %1508 = vmatprep.subr.mxu0 0.0
  %1509 = vmatpush1.msra.mxu0 %v1486
  %1510 = vmatprep.subr.mxu0 0.0
  %1511 = vmatpush1.msra.mxu0 %v1487
  %1512 = vmatprep.subr.mxu0 0.0
  %1513 = vmatpush1.msra.mxu0 %v1488
  %1514 = vmatprep.subr.mxu0 0.0
  %1515 = vmatpush1.msra.mxu0 %v1489
  %1516 = vmatprep.subr.mxu0 0.0
  %1517 = vmatpush1.msra.mxu0 %v1490
  %1518 = vmatprep.subr.mxu0 0.0
  %1519 = vmatpush1.msra.mxu0 %v1491
  %1520 = vmatprep.subr.mxu0 0.0
  %1521 = vmatpush1.msra.mxu0 %v1492
  %1522 = vmatprep.subr.mxu0 0.0
  %1523 = vmatpush1.msra.mxu0 %v1493
  %1524 = vmatprep.subr.mxu0 0.0
  %1525 = vmatpush1.msra.mxu0 %v1494
  %1526 = vmatprep.subr.mxu0 0.0
  %1527 = vmatpush1.msra.mxu0 %v1495
  %1528 = vmatprep.subr.mxu0 0.0
  %1529 = vmatpush1.msra.mxu0 0.0
  %1530 = vmatprep.subr.mxu0 0.0
  %1531 = vmatpush1.msra.mxu0 0.0
  %1532 = vmatprep.subr.mxu0 0.0
  %1533 = vmatpush1.msra.mxu0 0.0
  %1534 = vmatprep.subr.mxu0 0.0
  %1535 = vmatpush1.msra.mxu0 0.0
  %1536 = vmatprep.subr.mxu0 0.0
  %1537 = vmatpush1.msra.mxu0 0.0
  %1538 = vmatprep.subr.mxu0 0.0
  %1539 = vmatpush1.msra.mxu0 0.0
  %1540 = vmatprep.subr.mxu0 0.0
  %1541 = vmatpush1.msra.mxu0 0.0
  %1542 = vmatprep.subr.mxu0 0.0
  %1543 = vmatpush1.msra.mxu0 0.0
  %1544 = vmatprep.subr.mxu0 0.0
  %1545 = vmatpush1.msra.mxu0 0.0
  %1546 = vmatprep.subr.mxu0 0.0
  %1547 = vmatpush1.msra.mxu0 0.0
  %1548 = vmatprep.subr.mxu0 0.0
  %1549 = vmatpush1.msra.mxu0 0.0
  %1550 = vmatprep.subr.mxu0 0.0
  %1551 = vmatpush1.msra.mxu0 0.0
  %1552 = vmatprep.subr.mxu0 0.0
  %1553 = vmatpush1.msra.mxu0 0.0
  %1554 = vmatprep.subr.mxu0 0.0
  %1555 = vmatpush1.msra.mxu0 0.0
  %1556 = vmatprep.subr.mxu0 0.0
  %1557 = vmatpush1.msra.mxu0 0.0
  %1558 = vmatprep.subr.mxu0 0.0
  %1559 = vmatpush1.msra.mxu0 0.0
  %1560 = vmatprep.mubr.f32.mxu0 0.0
  %1561 = vmatmul.mubr.f32.gmra.mrb[0].mxu0 %v1285
  %v1562 = vpop.f32.mrb[0].mxu0
  %v1563 = vadd.f32 0.0, %v1562
  %v1564 = vpop.f32.mrb[0].mxu0
  %1565 = vdwg.mxu0
  %1566 = vmatprep.subr.mxu0 0.0
  %1567 = vmatpush1.msra.mxu0 %v1464
  %1568 = vmatprep.subr.mxu0 0.0
  %1569 = vmatpush1.msra.mxu0 %v1465
  %1570 = vmatprep.subr.mxu0 0.0
  %1571 = vmatpush1.msra.mxu0 %v1466
  %1572 = vmatprep.subr.mxu0 0.0
  %1573 = vmatpush1.msra.mxu0 %v1467
  %1574 = vmatprep.subr.mxu0 0.0
  %1575 = vmatpush1.msra.mxu0 %v1468
  %1576 = vmatprep.subr.mxu0 0.0
  %1577 = vmatpush1.msra.mxu0 %v1469
  %1578 = vmatprep.subr.mxu0 0.0
  %1579 = vmatpush1.msra.mxu0 %v1470
  %1580 = vmatprep.subr.mxu0 0.0
  %1581 = vmatpush1.msra.mxu0 %v1471
  %1582 = vmatprep.subr.mxu0 0.0
  %1583 = vmatpush1.msra.mxu0 %v1472
  %1584 = vmatprep.subr.mxu0 0.0
  %1585 = vmatpush1.msra.mxu0 %v1473
  %1586 = vmatprep.subr.mxu0 0.0
  %1587 = vmatpush1.msra.mxu0 %v1474
  %1588 = vmatprep.subr.mxu0 0.0
  %1589 = vmatpush1.msra.mxu0 %v1475
  %1590 = vmatprep.subr.mxu0 0.0
  %1591 = vmatpush1.msra.mxu0 %v1476
  %1592 = vmatprep.subr.mxu0 0.0
  %1593 = vmatpush1.msra.mxu0 %v1477
  %1594 = vmatprep.subr.mxu0 0.0
  %1595 = vmatpush1.msra.mxu0 %v1478
  %1596 = vmatprep.subr.mxu0 0.0
  %1597 = vmatpush1.msra.mxu0 %v1479
  %1598 = vmatprep.subr.mxu0 0.0
  %1599 = vmatpush1.msra.mxu0 0.0
  %1600 = vmatprep.subr.mxu0 0.0
  %1601 = vmatpush1.msra.mxu0 0.0
  %1602 = vmatprep.subr.mxu0 0.0
  %1603 = vmatpush1.msra.mxu0 0.0
  %1604 = vmatprep.subr.mxu0 0.0
  %1605 = vmatpush1.msra.mxu0 0.0
  %1606 = vmatprep.subr.mxu0 0.0
  %1607 = vmatpush1.msra.mxu0 0.0
  %1608 = vmatprep.subr.mxu0 0.0
  %1609 = vmatpush1.msra.mxu0 0.0
  %1610 = vmatprep.subr.mxu0 0.0
  %1611 = vmatpush1.msra.mxu0 0.0
  %1612 = vmatprep.subr.mxu0 0.0
  %1613 = vmatpush1.msra.mxu0 0.0
  %1614 = vmatprep.subr.mxu0 0.0
  %1615 = vmatpush1.msra.mxu0 0.0
  %1616 = vmatprep.subr.mxu0 0.0
  %1617 = vmatpush1.msra.mxu0 0.0
  %1618 = vmatprep.subr.mxu0 0.0
  %1619 = vmatpush1.msra.mxu0 0.0
  %1620 = vmatprep.subr.mxu0 0.0
  %1621 = vmatpush1.msra.mxu0 0.0
  %1622 = vmatprep.subr.mxu0 0.0
  %1623 = vmatpush1.msra.mxu0 0.0
  %1624 = vmatprep.subr.mxu0 0.0
  %1625 = vmatpush1.msra.mxu0 0.0
  %1626 = vmatprep.subr.mxu0 0.0
  %1627 = vmatpush1.msra.mxu0 0.0
  %1628 = vmatprep.subr.mxu0 0.0
  %1629 = vmatpush1.msra.mxu0 0.0
  %1630 = vmatprep.mubr.f32.mxu0 0.0
  %1631 = vmatmul.mubr.f32.gmra.mrb[0].mxu0 %v1463
  %v1632 = vpop.f32.mrb[0].mxu0
  %v1633 = vadd.f32 %v1563, %v1632
  %v1634 = vpop.f32.mrb[0].mxu0
  %1635 = vdwg.mxu0
  %v1636 = vadd.f32 %v1633, %v44
  %v1637 = vtanh.pop %v1636
  %v1638 = vld [vmem:[%s5] sm:$0xff]
  %v1639 = vld [vmem:[%s5 + $0x8] sm:$0xff]
  %v1640 = vld [vmem:[%s5 + $0x10] sm:$0xff]
  %v1641 = vld [vmem:[%s5 + $0x18] sm:$0xff]
  %v1642 = vld [vmem:[%s5 + $0x20] sm:$0xff]
  %v1643 = vld [vmem:[%s5 + $0x28] sm:$0xff]
  %v1644 = vld [vmem:[%s5 + $0x30] sm:$0xff]
  %v1645 = vld [vmem:[%s5 + $0x38] sm:$0xff]
  %v1646 = vld [vmem:[%s5 + $0x40] sm:$0xff]
  %v1647 = vld [vmem:[%s5 + $0x48] sm:$0xff]
  %v1648 = vld [vmem:[%s5 + $0x50] sm:$0xff]
  %v1649 = vld [vmem:[%s5 + $0x58] sm:$0xff]
  %v1650 = vld [vmem:[%s5 + $0x60] sm:$0xff]
  %v1651 = vld [vmem:[%s5 + $0x68] sm:$0xff]
  %v1652 = vld [vmem:[%s5 + $0x70] sm:$0xff]
  %v1653 = vld [vmem:[%s5 + $0x78] sm:$0xff]
  %v1654 = vld [vmem:[%s6] sm:$0xff]
  %v1655 = vld [vmem:[%s6 + $0x8] sm:$0xff]
  %v1656 = vld [vmem:[%s6 + $0x10] sm:$0xff]
  %v1657 = vld [vmem:[%s6 + $0x18] sm:$0xff]
  %v1658 = vld [vmem:[%s6 + $0x20] sm:$0xff]
  %v1659 = vld [vmem:[%s6 + $0x28] sm:$0xff]
  %v1660 = vld [vmem:[%s6 + $0x30] sm:$0xff]
  %v1661 = vld [vmem:[%s6 + $0x38] sm:$0xff]
  %v1662 = vld [vmem:[%s6 + $0x40] sm:$0xff]
  %v1663 = vld [vmem:[%s6 + $0x48] sm:$0xff]
  %v1664 = vld [vmem:[%s6 + $0x50] sm:$0xff]
  %v1665 = vld [vmem:[%s6 + $0x58] sm:$0xff]
  %v1666 = vld [vmem:[%s6 + $0x60] sm:$0xff]
  %v1667 = vld [vmem:[%s6 + $0x68] sm:$0xff]
  %v1668 = vld [vmem:[%s6 + $0x70] sm:$0xff]
  %v1669 = vld [vmem:[%s6 + $0x78] sm:$0xff]
  %1670 = vmatprep.subr.mxu0 0.0
  %1671 = vmatpush1.msra.mxu0 %v1654
  %1672 = vmatprep.subr.mxu0 0.0
  %1673 = vmatpush1.msra.mxu0 %v1655
  %1674 = vmatprep.subr.mxu0 0.0
  %1675 = vmatpush1.msra.mxu0 %v1656
  %1676 = vmatprep.subr.mxu0 0.0
  %1677 = vmatpush1.msra.mxu0 %v1657
  %1678 = vmatprep.subr.mxu0 0.0
  %1679 = vmatpush1.msra.mxu0 %v1658
  %1680 = vmatprep.subr.mxu0 0.0
  %1681 = vmatpush1.msra.mxu0 %v1659
  %1682 = vmatprep.subr.mxu0 0.0
  %1683 = vmatpush1.msra.mxu0 %v1660
  %1684 = vmatprep.subr.mxu0 0.0
  %1685 = vmatpush1.msra.mxu0 %v1661
  %1686 = vmatprep.subr.mxu0 0.0
  %1687 = vmatpush1.msra.mxu0 %v1662
  %1688 = vmatprep.subr.mxu0 0.0
  %1689 = vmatpush1.msra.mxu0 %v1663
  %1690 = vmatprep.subr.mxu0 0.0
  %1691 = vmatpush1.msra.mxu0 %v1664
  %1692 = vmatprep.subr.mxu0 0.0
  %1693 = vmatpush1.msra.mxu0 %v1665
  %1694 = vmatprep.subr.mxu0 0.0
  %1695 = vmatpush1.msra.mxu0 %v1666
  %1696 = vmatprep.subr.mxu0 0.0
  %1697 = vmatpush1.msra.mxu0 %v1667
  %1698 = vmatprep.subr.mxu0 0.0
  %1699 = vmatpush1.msra.mxu0 %v1668
  %1700 = vmatprep.subr.mxu0 0.0
  %1701 = vmatpush1.msra.mxu0 %v1669
  %1702 = vmatprep.subr.mxu0 0.0
  %1703 = vmatpush1.msra.mxu0 0.0
  %1704 = vmatprep.subr.mxu0 0.0
  %1705 = vmatpush1.msra.mxu0 0.0
  %1706 = vmatprep.subr.mxu0 0.0
  %1707 = vmatpush1.msra.mxu0 0.0
  %1708 = vmatprep.subr.mxu0 0.0
  %1709 = vmatpush1.msra.mxu0 0.0
  %1710 = vmatprep.subr.mxu0 0.0
  %1711 = vmatpush1.msra.mxu0 0.0
  %1712 = vmatprep.subr.mxu0 0.0
  %1713 = vmatpush1.msra.mxu0 0.0
  %1714 = vmatprep.subr.mxu0 0.0
  %1715 = vmatpush1.msra.mxu0 0.0
  %1716 = vmatprep.subr.mxu0 0.0
  %1717 = vmatpush1.msra.mxu0 0.0
  %1718 = vmatprep.subr.mxu0 0.0
  %1719 = vmatpush1.msra.mxu0 0.0
  %1720 = vmatprep.subr.mxu0 0.0
  %1721 = vmatpush1.msra.mxu0 0.0
  %1722 = vmatprep.subr.mxu0 0.0
  %1723 = vmatpush1.msra.mxu0 0.0
  %1724 = vmatprep.subr.mxu0 0.0
  %1725 = vmatpush1.msra.mxu0 0.0
  %1726 = vmatprep.subr.mxu0 0.0
  %1727 = vmatpush1.msra.mxu0 0.0
  %1728 = vmatprep.subr.mxu0 0.0
  %1729 = vmatpush1.msra.mxu0 0.0
  %1730 = vmatprep.subr.mxu0 0.0
  %1731 = vmatpush1.msra.mxu0 0.0
  %1732 = vmatprep.subr.mxu0 0.0
  %1733 = vmatpush1.msra.mxu0 0.0
  %1734 = vmatprep.mubr.f32.mxu0 0.0
  %1735 = vmatmul.mubr.f32.gmra.mrb[0].mxu0 %v1459
  %v1736 = vpop.f32.mrb[0].mxu0
  %v1737 = vadd.f32 0.0, %v1736
  %v1738 = vpop.f32.mrb[0].mxu0
  %1739 = vdwg.mxu0
  %1740 = vmatprep.subr.mxu0 0.0
  %1741 = vmatpush1.msra.mxu0 %v1638
  %1742 = vmatprep.subr.mxu0 0.0
  %1743 = vmatpush1.msra.mxu0 %v1639
  %1744 = vmatprep.subr.mxu0 0.0
  %1745 = vmatpush1.msra.mxu0 %v1640
  %1746 = vmatprep.subr.mxu0 0.0
  %1747 = vmatpush1.msra.mxu0 %v1641
  %1748 = vmatprep.subr.mxu0 0.0
  %1749 = vmatpush1.msra.mxu0 %v1642
  %1750 = vmatprep.subr.mxu0 0.0
  %1751 = vmatpush1.msra.mxu0 %v1643
  %1752 = vmatprep.subr.mxu0 0.0
  %1753 = vmatpush1.msra.mxu0 %v1644
  %1754 = vmatprep.subr.mxu0 0.0
  %1755 = vmatpush1.msra.mxu0 %v1645
  %1756 = vmatprep.subr.mxu0 0.0
  %1757 = vmatpush1.msra.mxu0 %v1646
  %1758 = vmatprep.subr.mxu0 0.0
  %1759 = vmatpush1.msra.mxu0 %v1647
  %1760 = vmatprep.subr.mxu0 0.0
  %1761 = vmatpush1.msra.mxu0 %v1648
  %1762 = vmatprep.subr.mxu0 0.0
  %1763 = vmatpush1.msra.mxu0 %v1649
  %1764 = vmatprep.subr.mxu0 0.0
  %1765 = vmatpush1.msra.mxu0 %v1650
  %1766 = vmatprep.subr.mxu0 0.0
  %1767 = vmatpush1.msra.mxu0 %v1651
  %1768 = vmatprep.subr.mxu0 0.0
  %1769 = vmatpush1.msra.mxu0 %v1652
  %1770 = vmatprep.subr.mxu0 0.0
  %1771 = vmatpush1.msra.mxu0 %v1653
  %1772 = vmatprep.subr.mxu0 0.0
  %1773 = vmatpush1.msra.mxu0 0.0
  %1774 = vmatprep.subr.mxu0 0.0
  %1775 = vmatpush1.msra.mxu0 0.0
  %1776 = vmatprep.subr.mxu0 0.0
  %1777 = vmatpush1.msra.mxu0 0.0
  %1778 = vmatprep.subr.mxu0 0.0
  %1779 = vmatpush1.msra.mxu0 0.0
  %1780 = vmatprep.subr.mxu0 0.0
  %1781 = vmatpush1.msra.mxu0 0.0
  %1782 = vmatprep.subr.mxu0 0.0
  %1783 = vmatpush1.msra.mxu0 0.0
  %1784 = vmatprep.subr.mxu0 0.0
  %1785 = vmatpush1.msra.mxu0 0.0
  %1786 = vmatprep.subr.mxu0 0.0
  %1787 = vmatpush1.msra.mxu0 0.0
  %1788 = vmatprep.subr.mxu0 0.0
  %1789 = vmatpush1.msra.mxu0 0.0
  %1790 = vmatprep.subr.mxu0 0.0
  %1791 = vmatpush1.msra.mxu0 0.0
  %1792 = vmatprep.subr.mxu0 0.0
  %1793 = vmatpush1.msra.mxu0 0.0
  %1794 = vmatprep.subr.mxu0 0.0
  %1795 = vmatpush1.msra.mxu0 0.0
  %1796 = vmatprep.subr.mxu0 0.0
  %1797 = vmatpush1.msra.mxu0 0.0
  %1798 = vmatprep.subr.mxu0 0.0
  %1799 = vmatpush1.msra.mxu0 0.0
  %1800 = vmatprep.subr.mxu0 0.0
  %1801 = vmatpush1.msra.mxu0 0.0
  %1802 = vmatprep.subr.mxu0 0.0
  %1803 = vmatpush1.msra.mxu0 0.0
  %1804 = vmatprep.mubr.f32.mxu0 0.0
  %1805 = vmatmul.mubr.f32.gmra.mrb[0].mxu0 %v1637
  %v1806 = vpop.f32.mrb[0].mxu0
  %v1807 = vadd.f32 %v1737, %v1806
  %v1808 = vpop.f32.mrb[0].mxu0
  %1809 = vdwg.mxu0
  %v1810 = vadd.f32 %v1807, %v51
  %v1811 = vtanh.pop %v1810
  %s1812 = scalar_lea.vmem %s8, 32
  %1813 = vst [vmem:[%s1812] sm:$0xff] %v1811
  %s1814 = scalar_lea.vmem %s0, 40
  %v1815 = vld [vmem:[%s1814] sm:$0xff]
  %v1816 = vld [vmem:[%s2] sm:$0xff]
  %v1817 = vld [vmem:[%s2 + $0x8] sm:$0xff]
  %v1818 = vld [vmem:[%s2 + $0x10] sm:$0xff]
  %v1819 = vld [vmem:[%s2 + $0x18] sm:$0xff]
  %v1820 = vld [vmem:[%s2 + $0x20] sm:$0xff]
  %v1821 = vld [vmem:[%s2 + $0x28] sm:$0xff]
  %v1822 = vld [vmem:[%s2 + $0x30] sm:$0xff]
  %v1823 = vld [vmem:[%s2 + $0x38] sm:$0xff]
  %v1824 = vld [vmem:[%s2 + $0x40] sm:$0xff]
  %v1825 = vld [vmem:[%s2 + $0x48] sm:$0xff]
  %v1826 = vld [vmem:[%s2 + $0x50] sm:$0xff]
  %v1827 = vld [vmem:[%s2 + $0x58] sm:$0xff]
  %v1828 = vld [vmem:[%s2 + $0x60] sm:$0xff]
  %v1829 = vld [vmem:[%s2 + $0x68] sm:$0xff]
  %v1830 = vld [vmem:[%s2 + $0x70] sm:$0xff]
  %v1831 = vld [vmem:[%s2 + $0x78] sm:$0xff]
  %v1832 = vld [vmem:[%s3] sm:$0xff]
  %v1833 = vld [vmem:[%s3 + $0x8] sm:$0xff]
  %v1834 = vld [vmem:[%s3 + $0x10] sm:$0xff]
  %v1835 = vld [vmem:[%s3 + $0x18] sm:$0xff]
  %v1836 = vld [vmem:[%s3 + $0x20] sm:$0xff]
  %v1837 = vld [vmem:[%s3 + $0x28] sm:$0xff]
  %v1838 = vld [vmem:[%s3 + $0x30] sm:$0xff]
  %v1839 = vld [vmem:[%s3 + $0x38] sm:$0xff]
  %v1840 = vld [vmem:[%s3 + $0x40] sm:$0xff]
  %v1841 = vld [vmem:[%s3 + $0x48] sm:$0xff]
  %v1842 = vld [vmem:[%s3 + $0x50] sm:$0xff]
  %v1843 = vld [vmem:[%s3 + $0x58] sm:$0xff]
  %v1844 = vld [vmem:[%s3 + $0x60] sm:$0xff]
  %v1845 = vld [vmem:[%s3 + $0x68] sm:$0xff]
  %v1846 = vld [vmem:[%s3 + $0x70] sm:$0xff]
  %v1847 = vld [vmem:[%s3 + $0x78] sm:$0xff]
  %1848 = vmatprep.subr.mxu0 0.0
  %1849 = vmatpush1.msra.mxu0 %v1832
  %1850 = vmatprep.subr.mxu0 0.0
  %1851 = vmatpush1.msra.mxu0 %v1833
  %1852 = vmatprep.subr.mxu0 0.0
  %1853 = vmatpush1.msra.mxu0 %v1834
  %1854 = vmatprep.subr.mxu0 0.0
  %1855 = vmatpush1.msra.mxu0 %v1835
  %1856 = vmatprep.subr.mxu0 0.0
  %1857 = vmatpush1.msra.mxu0 %v1836
  %1858 = vmatprep.subr.mxu0 0.0
  %1859 = vmatpush1.msra.mxu0 %v1837
  %1860 = vmatprep.subr.mxu0 0.0
  %1861 = vmatpush1.msra.mxu0 %v1838
  %1862 = vmatprep.subr.mxu0 0.0
  %1863 = vmatpush1.msra.mxu0 %v1839
  %1864 = vmatprep.subr.mxu0 0.0
  %1865 = vmatpush1.msra.mxu0 %v1840
  %1866 = vmatprep.subr.mxu0 0.0
  %1867 = vmatpush1.msra.mxu0 %v1841
  %1868 = vmatprep.subr.mxu0 0.0
  %1869 = vmatpush1.msra.mxu0 %v1842
  %1870 = vmatprep.subr.mxu0 0.0
  %1871 = vmatpush1.msra.mxu0 %v1843
  %1872 = vmatprep.subr.mxu0 0.0
  %1873 = vmatpush1.msra.mxu0 %v1844
  %1874 = vmatprep.subr.mxu0 0.0
  %1875 = vmatpush1.msra.mxu0 %v1845
  %1876 = vmatprep.subr.mxu0 0.0
  %1877 = vmatpush1.msra.mxu0 %v1846
  %1878 = vmatprep.subr.mxu0 0.0
  %1879 = vmatpush1.msra.mxu0 %v1847
  %1880 = vmatprep.subr.mxu0 0.0
  %1881 = vmatpush1.msra.mxu0 0.0
  %1882 = vmatprep.subr.mxu0 0.0
  %1883 = vmatpush1.msra.mxu0 0.0
  %1884 = vmatprep.subr.mxu0 0.0
  %1885 = vmatpush1.msra.mxu0 0.0
  %1886 = vmatprep.subr.mxu0 0.0
  %1887 = vmatpush1.msra.mxu0 0.0
  %1888 = vmatprep.subr.mxu0 0.0
  %1889 = vmatpush1.msra.mxu0 0.0
  %1890 = vmatprep.subr.mxu0 0.0
  %1891 = vmatpush1.msra.mxu0 0.0
  %1892 = vmatprep.subr.mxu0 0.0
  %1893 = vmatpush1.msra.mxu0 0.0
  %1894 = vmatprep.subr.mxu0 0.0
  %1895 = vmatpush1.msra.mxu0 0.0
  %1896 = vmatprep.subr.mxu0 0.0
  %1897 = vmatpush1.msra.mxu0 0.0
  %1898 = vmatprep.subr.mxu0 0.0
  %1899 = vmatpush1.msra.mxu0 0.0
  %1900 = vmatprep.subr.mxu0 0.0
  %1901 = vmatpush1.msra.mxu0 0.0
  %1902 = vmatprep.subr.mxu0 0.0
  %1903 = vmatpush1.msra.mxu0 0.0
  %1904 = vmatprep.subr.mxu0 0.0
  %1905 = vmatpush1.msra.mxu0 0.0
  %1906 = vmatprep.subr.mxu0 0.0
  %1907 = vmatpush1.msra.mxu0 0.0
  %1908 = vmatprep.subr.mxu0 0.0
  %1909 = vmatpush1.msra.mxu0 0.0
  %1910 = vmatprep.subr.mxu0 0.0
  %1911 = vmatpush1.msra.mxu0 0.0
  %1912 = vmatprep.mubr.f32.mxu0 0.0
  %1913 = vmatmul.mubr.f32.gmra.mrb[0].mxu0 %v1637
  %v1914 = vpop.f32.mrb[0].mxu0
  %v1915 = vadd.f32 0.0, %v1914
  %v1916 = vpop.f32.mrb[0].mxu0
  %1917 = vdwg.mxu0
  %1918 = vmatprep.subr.mxu0 0.0
  %1919 = vmatpush1.msra.mxu0 %v1816
  %1920 = vmatprep.subr.mxu0 0.0
  %1921 = vmatpush1.msra.mxu0 %v1817
  %1922 = vmatprep.subr.mxu0 0.0
  %1923 = vmatpush1.msra.mxu0 %v1818
  %1924 = vmatprep.subr.mxu0 0.0
  %1925 = vmatpush1.msra.mxu0 %v1819
  %1926 = vmatprep.subr.mxu0 0.0
  %1927 = vmatpush1.msra.mxu0 %v1820
  %1928 = vmatprep.subr.mxu0 0.0
  %1929 = vmatpush1.msra.mxu0 %v1821
  %1930 = vmatprep.subr.mxu0 0.0
  %1931 = vmatpush1.msra.mxu0 %v1822
  %1932 = vmatprep.subr.mxu0 0.0
  %1933 = vmatpush1.msra.mxu0 %v1823
  %1934 = vmatprep.subr.mxu0 0.0
  %1935 = vmatpush1.msra.mxu0 %v1824
  %1936 = vmatprep.subr.mxu0 0.0
  %1937 = vmatpush1.msra.mxu0 %v1825
  %1938 = vmatprep.subr.mxu0 0.0
  %1939 = vmatpush1.msra.mxu0 %v1826
  %1940 = vmatprep.subr.mxu0 0.0
  %1941 = vmatpush1.msra.mxu0 %v1827
  %1942 = vmatprep.subr.mxu0 0.0
  %1943 = vmatpush1.msra.mxu0 %v1828
  %1944 = vmatprep.subr.mxu0 0.0
  %1945 = vmatpush1.msra.mxu0 %v1829
  %1946 = vmatprep.subr.mxu0 0.0
  %1947 = vmatpush1.msra.mxu0 %v1830
  %1948 = vmatprep.subr.mxu0 0.0
  %1949 = vmatpush1.msra.mxu0 %v1831
  %1950 = vmatprep.subr.mxu0 0.0
  %1951 = vmatpush1.msra.mxu0 0.0
  %1952 = vmatprep.subr.mxu0 0.0
  %1953 = vmatpush1.msra.mxu0 0.0
  %1954 = vmatprep.subr.mxu0 0.0
  %1955 = vmatpush1.msra.mxu0 0.0
  %1956 = vmatprep.subr.mxu0 0.0
  %1957 = vmatpush1.msra.mxu0 0.0
  %1958 = vmatprep.subr.mxu0 0.0
  %1959 = vmatpush1.msra.mxu0 0.0
  %1960 = vmatprep.subr.mxu0 0.0
  %1961 = vmatpush1.msra.mxu0 0.0
  %1962 = vmatprep.subr.mxu0 0.0
  %1963 = vmatpush1.msra.mxu0 0.0
  %1964 = vmatprep.subr.mxu0 0.0
  %1965 = vmatpush1.msra.mxu0 0.0
  %1966 = vmatprep.subr.mxu0 0.0
  %1967 = vmatpush1.msra.mxu0 0.0
  %1968 = vmatprep.subr.mxu0 0.0
  %1969 = vmatpush1.msra.mxu0 0.0
  %1970 = vmatprep.subr.mxu0 0.0
  %1971 = vmatpush1.msra.mxu0 0.0
  %1972 = vmatprep.subr.mxu0 0.0
  %1973 = vmatpush1.msra.mxu0 0.0
  %1974 = vmatprep.subr.mxu0 0.0
  %1975 = vmatpush1.msra.mxu0 0.0
  %1976 = vmatprep.subr.mxu0 0.0
  %1977 = vmatpush1.msra.mxu0 0.0
  %1978 = vmatprep.subr.mxu0 0.0
  %1979 = vmatpush1.msra.mxu0 0.0
  %1980 = vmatprep.subr.mxu0 0.0
  %1981 = vmatpush1.msra.mxu0 0.0
  %1982 = vmatprep.mubr.f32.mxu0 0.0
  %1983 = vmatmul.mubr.f32.gmra.mrb[0].mxu0 %v1815
  %v1984 = vpop.f32.mrb[0].mxu0
  %v1985 = vadd.f32 %v1915, %v1984
  %v1986 = vpop.f32.mrb[0].mxu0
  %1987 = vdwg.mxu0
  %v1988 = vadd.f32 %v1985, %v44
  %v1989 = vtanh.pop %v1988
  %v1990 = vld [vmem:[%s5] sm:$0xff]
  %v1991 = vld [vmem:[%s5 + $0x8] sm:$0xff]
  %v1992 = vld [vmem:[%s5 + $0x10] sm:$0xff]
  %v1993 = vld [vmem:[%s5 + $0x18] sm:$0xff]
  %v1994 = vld [vmem:[%s5 + $0x20] sm:$0xff]
  %v1995 = vld [vmem:[%s5 + $0x28] sm:$0xff]
  %v1996 = vld [vmem:[%s5 + $0x30] sm:$0xff]
  %v1997 = vld [vmem:[%s5 + $0x38] sm:$0xff]
  %v1998 = vld [vmem:[%s5 + $0x40] sm:$0xff]
  %v1999 = vld [vmem:[%s5 + $0x48] sm:$0xff]
  %v2000 = vld [vmem:[%s5 + $0x50] sm:$0xff]
  %v2001 = vld [vmem:[%s5 + $0x58] sm:$0xff]
  %v2002 = vld [vmem:[%s5 + $0x60] sm:$0xff]
  %v2003 = vld [vmem:[%s5 + $0x68] sm:$0xff]
  %v2004 = vld [vmem:[%s5 + $0x70] sm:$0xff]
  %v2005 = vld [vmem:[%s5 + $0x78] sm:$0xff]
  %v2006 = vld [vmem:[%s6] sm:$0xff]
  %v2007 = vld [vmem:[%s6 + $0x8] sm:$0xff]
  %v2008 = vld [vmem:[%s6 + $0x10] sm:$0xff]
  %v2009 = vld [vmem:[%s6 + $0x18] sm:$0xff]
  %v2010 = vld [vmem:[%s6 + $0x20] sm:$0xff]
  %v2011 = vld [vmem:[%s6 + $0x28] sm:$0xff]
  %v2012 = vld [vmem:[%s6 + $0x30] sm:$0xff]
  %v2013 = vld [vmem:[%s6 + $0x38] sm:$0xff]
  %v2014 = vld [vmem:[%s6 + $0x40] sm:$0xff]
  %v2015 = vld [vmem:[%s6 + $0x48] sm:$0xff]
  %v2016 = vld [vmem:[%s6 + $0x50] sm:$0xff]
  %v2017 = vld [vmem:[%s6 + $0x58] sm:$0xff]
  %v2018 = vld [vmem:[%s6 + $0x60] sm:$0xff]
  %v2019 = vld [vmem:[%s6 + $0x68] sm:$0xff]
  %v2020 = vld [vmem:[%s6 + $0x70] sm:$0xff]
  %v2021 = vld [vmem:[%s6 + $0x78] sm:$0xff]
  %2022 = vmatprep.subr.mxu0 0.0
  %2023 = vmatpush1.msra.mxu0 %v2006
  %2024 = vmatprep.subr.mxu0 0.0
  %2025 = vmatpush1.msra.mxu0 %v2007
  %2026 = vmatprep.subr.mxu0 0.0
  %2027 = vmatpush1.msra.mxu0 %v2008
  %2028 = vmatprep.subr.mxu0 0.0
  %2029 = vmatpush1.msra.mxu0 %v2009
  %2030 = vmatprep.subr.mxu0 0.0
  %2031 = vmatpush1.msra.mxu0 %v2010
  %2032 = vmatprep.subr.mxu0 0.0
  %2033 = vmatpush1.msra.mxu0 %v2011
  %2034 = vmatprep.subr.mxu0 0.0
  %2035 = vmatpush1.msra.mxu0 %v2012
  %2036 = vmatprep.subr.mxu0 0.0
  %2037 = vmatpush1.msra.mxu0 %v2013
  %2038 = vmatprep.subr.mxu0 0.0
  %2039 = vmatpush1.msra.mxu0 %v2014
  %2040 = vmatprep.subr.mxu0 0.0
  %2041 = vmatpush1.msra.mxu0 %v2015
  %2042 = vmatprep.subr.mxu0 0.0
  %2043 = vmatpush1.msra.mxu0 %v2016
  %2044 = vmatprep.subr.mxu0 0.0
  %2045 = vmatpush1.msra.mxu0 %v2017
  %2046 = vmatprep.subr.mxu0 0.0
  %2047 = vmatpush1.msra.mxu0 %v2018
  %2048 = vmatprep.subr.mxu0 0.0
  %2049 = vmatpush1.msra.mxu0 %v2019
  %2050 = vmatprep.subr.mxu0 0.0
  %2051 = vmatpush1.msra.mxu0 %v2020
  %2052 = vmatprep.subr.mxu0 0.0
  %2053 = vmatpush1.msra.mxu0 %v2021
  %2054 = vmatprep.subr.mxu0 0.0
  %2055 = vmatpush1.msra.mxu0 0.0
  %2056 = vmatprep.subr.mxu0 0.0
  %2057 = vmatpush1.msra.mxu0 0.0
  %2058 = vmatprep.subr.mxu0 0.0
  %2059 = vmatpush1.msra.mxu0 0.0
  %2060 = vmatprep.subr.mxu0 0.0
  %2061 = vmatpush1.msra.mxu0 0.0
  %2062 = vmatprep.subr.mxu0 0.0
  %2063 = vmatpush1.msra.mxu0 0.0
  %2064 = vmatprep.subr.mxu0 0.0
  %2065 = vmatpush1.msra.mxu0 0.0
  %2066 = vmatprep.subr.mxu0 0.0
  %2067 = vmatpush1.msra.mxu0 0.0
  %2068 = vmatprep.subr.mxu0 0.0
  %2069 = vmatpush1.msra.mxu0 0.0
  %2070 = vmatprep.subr.mxu0 0.0
  %2071 = vmatpush1.msra.mxu0 0.0
  %2072 = vmatprep.subr.mxu0 0.0
  %2073 = vmatpush1.msra.mxu0 0.0
  %2074 = vmatprep.subr.mxu0 0.0
  %2075 = vmatpush1.msra.mxu0 0.0
  %2076 = vmatprep.subr.mxu0 0.0
  %2077 = vmatpush1.msra.mxu0 0.0
  %2078 = vmatprep.subr.mxu0 0.0
  %2079 = vmatpush1.msra.mxu0 0.0
  %2080 = vmatprep.subr.mxu0 0.0
  %2081 = vmatpush1.msra.mxu0 0.0
  %2082 = vmatprep.subr.mxu0 0.0
  %2083 = vmatpush1.msra.mxu0 0.0
  %2084 = vmatprep.subr.mxu0 0.0
  %2085 = vmatpush1.msra.mxu0 0.0
  %2086 = vmatprep.mubr.f32.mxu0 0.0
  %2087 = vmatmul.mubr.f32.gmra.mrb[0].mxu0 %v1811
  %v2088 = vpop.f32.mrb[0].mxu0
  %v2089 = vadd.f32 0.0, %v2088
  %v2090 = vpop.f32.mrb[0].mxu0
  %2091 = vdwg.mxu0
  %2092 = vmatprep.subr.mxu0 0.0
  %2093 = vmatpush1.msra.mxu0 %v1990
  %2094 = vmatprep.subr.mxu0 0.0
  %2095 = vmatpush1.msra.mxu0 %v1991
  %2096 = vmatprep.subr.mxu0 0.0
  %2097 = vmatpush1.msra.mxu0 %v1992
  %2098 = vmatprep.subr.mxu0 0.0
  %2099 = vmatpush1.msra.mxu0 %v1993
  %2100 = vmatprep.subr.mxu0 0.0
  %2101 = vmatpush1.msra.mxu0 %v1994
  %2102 = vmatprep.subr.mxu0 0.0
  %2103 = vmatpush1.msra.mxu0 %v1995
  %2104 = vmatprep.subr.mxu0 0.0
  %2105 = vmatpush1.msra.mxu0 %v1996
  %2106 = vmatprep.subr.mxu0 0.0
  %2107 = vmatpush1.msra.mxu0 %v1997
  %2108 = vmatprep.subr.mxu0 0.0
  %2109 = vmatpush1.msra.mxu0 %v1998
  %2110 = vmatprep.subr.mxu0 0.0
  %2111 = vmatpush1.msra.mxu0 %v1999
  %2112 = vmatprep.subr.mxu0 0.0
  %2113 = vmatpush1.msra.mxu0 %v2000
  %2114 = vmatprep.subr.mxu0 0.0
  %2115 = vmatpush1.msra.mxu0 %v2001
  %2116 = vmatprep.subr.mxu0 0.0
  %2117 = vmatpush1.msra.mxu0 %v2002
  %2118 = vmatprep.subr.mxu0 0.0
  %2119 = vmatpush1.msra.mxu0 %v2003
  %2120 = vmatprep.subr.mxu0 0.0
  %2121 = vmatpush1.msra.mxu0 %v2004
  %2122 = vmatprep.subr.mxu0 0.0
  %2123 = vmatpush1.msra.mxu0 %v2005
  %2124 = vmatprep.subr.mxu0 0.0
  %2125 = vmatpush1.msra.mxu0 0.0
  %2126 = vmatprep.subr.mxu0 0.0
  %2127 = vmatpush1.msra.mxu0 0.0
  %2128 = vmatprep.subr.mxu0 0.0
  %2129 = vmatpush1.msra.mxu0 0.0
  %2130 = vmatprep.subr.mxu0 0.0
  %2131 = vmatpush1.msra.mxu0 0.0
  %2132 = vmatprep.subr.mxu0 0.0
  %2133 = vmatpush1.msra.mxu0 0.0
  %2134 = vmatprep.subr.mxu0 0.0
  %2135 = vmatpush1.msra.mxu0 0.0
  %2136 = vmatprep.subr.mxu0 0.0
  %2137 = vmatpush1.msra.mxu0 0.0
  %2138 = vmatprep.subr.mxu0 0.0
  %2139 = vmatpush1.msra.mxu0 0.0
  %2140 = vmatprep.subr.mxu0 0.0
  %2141 = vmatpush1.msra.mxu0 0.0
  %2142 = vmatprep.subr.mxu0 0.0
  %2143 = vmatpush1.msra.mxu0 0.0
  %2144 = vmatprep.subr.mxu0 0.0
  %2145 = vmatpush1.msra.mxu0 0.0
  %2146 = vmatprep.subr.mxu0 0.0
  %2147 = vmatpush1.msra.mxu0 0.0
  %2148 = vmatprep.subr.mxu0 0.0
  %2149 = vmatpush1.msra.mxu0 0.0
  %2150 = vmatprep.subr.mxu0 0.0
  %2151 = vmatpush1.msra.mxu0 0.0
  %2152 = vmatprep.subr.mxu0 0.0
  %2153 = vmatpush1.msra.mxu0 0.0
  %2154 = vmatprep.subr.mxu0 0.0
  %2155 = vmatpush1.msra.mxu0 0.0
  %2156 = vmatprep.mubr.f32.mxu0 0.0
  %2157 = vmatmul.mubr.f32.gmra.mrb[0].mxu0 %v1989
  %v2158 = vpop.f32.mrb[0].mxu0
  %v2159 = vadd.f32 %v2089, %v2158
  %v2160 = vpop.f32.mrb[0].mxu0
  %2161 = vdwg.mxu0
  %v2162 = vadd.f32 %v2159, %v51
  %v2163 = vtanh.pop %v2162
  %s2164 = scalar_lea.vmem %s8, 40
  %2165 = vst [vmem:[%s2164] sm:$0xff] %v2163
  %s2166 = scalar_lea.vmem %s0, 48
  %v2167 = vld [vmem:[%s2166] sm:$0xff]
  %v2168 = vld [vmem:[%s2] sm:$0xff]
  %v2169 = vld [vmem:[%s2 + $0x8] sm:$0xff]
  %v2170 = vld [vmem:[%s2 + $0x10] sm:$0xff]
  %v2171 = vld [vmem:[%s2 + $0x18] sm:$0xff]
  %v2172 = vld [vmem:[%s2 + $0x20] sm:$0xff]
  %v2173 = vld [vmem:[%s2 + $0x28] sm:$0xff]
  %v2174 = vld [vmem:[%s2 + $0x30] sm:$0xff]
  %v2175 = vld [vmem:[%s2 + $0x38] sm:$0xff]
  %v2176 = vld [vmem:[%s2 + $0x40] sm:$0xff]
  %v2177 = vld [vmem:[%s2 + $0x48] sm:$0xff]
  %v2178 = vld [vmem:[%s2 + $0x50] sm:$0xff]
  %v2179 = vld [vmem:[%s2 + $0x58] sm:$0xff]
  %v2180 = vld [vmem:[%s2 + $0x60] sm:$0xff]
  %v2181 = vld [vmem:[%s2 + $0x68] sm:$0xff]
  %v2182 = vld [vmem:[%s2 + $0x70] sm:$0xff]
  %v2183 = vld [vmem:[%s2 + $0x78] sm:$0xff]
  %v2184 = vld [vmem:[%s3] sm:$0xff]
  %v2185 = vld [vmem:[%s3 + $0x8] sm:$0xff]
  %v2186 = vld [vmem:[%s3 + $0x10] sm:$0xff]
  %v2187 = vld [vmem:[%s3 + $0x18] sm:$0xff]
  %v2188 = vld [vmem:[%s3 + $0x20] sm:$0xff]
  %v2189 = vld [vmem:[%s3 + $0x28] sm:$0xff]
  %v2190 = vld [vmem:[%s3 + $0x30] sm:$0xff]
  %v2191 = vld [vmem:[%s3 + $0x38] sm:$0xff]
  %v2192 = vld [vmem:[%s3 + $0x40] sm:$0xff]
  %v2193 = vld [vmem:[%s3 + $0x48] sm:$0xff]
  %v2194 = vld [vmem:[%s3 + $0x50] sm:$0xff]
  %v2195 = vld [vmem:[%s3 + $0x58] sm:$0xff]
  %v2196 = vld [vmem:[%s3 + $0x60] sm:$0xff]
  %v2197 = vld [vmem:[%s3 + $0x68] sm:$0xff]
  %v2198 = vld [vmem:[%s3 + $0x70] sm:$0xff]
  %v2199 = vld [vmem:[%s3 + $0x78] sm:$0xff]
  %2200 = vmatprep.subr.mxu0 0.0
  %2201 = vmatpush1.msra.mxu0 %v2184
  %2202 = vmatprep.subr.mxu0 0.0
  %2203 = vmatpush1.msra.mxu0 %v2185
  %2204 = vmatprep.subr.mxu0 0.0
  %2205 = vmatpush1.msra.mxu0 %v2186
  %2206 = vmatprep.subr.mxu0 0.0
  %2207 = vmatpush1.msra.mxu0 %v2187
  %2208 = vmatprep.subr.mxu0 0.0
  %2209 = vmatpush1.msra.mxu0 %v2188
  %2210 = vmatprep.subr.mxu0 0.0
  %2211 = vmatpush1.msra.mxu0 %v2189
  %2212 = vmatprep.subr.mxu0 0.0
  %2213 = vmatpush1.msra.mxu0 %v2190
  %2214 = vmatprep.subr.mxu0 0.0
  %2215 = vmatpush1.msra.mxu0 %v2191
  %2216 = vmatprep.subr.mxu0 0.0
  %2217 = vmatpush1.msra.mxu0 %v2192
  %2218 = vmatprep.subr.mxu0 0.0
  %2219 = vmatpush1.msra.mxu0 %v2193
  %2220 = vmatprep.subr.mxu0 0.0
  %2221 = vmatpush1.msra.mxu0 %v2194
  %2222 = vmatprep.subr.mxu0 0.0
  %2223 = vmatpush1.msra.mxu0 %v2195
  %2224 = vmatprep.subr.mxu0 0.0
  %2225 = vmatpush1.msra.mxu0 %v2196
  %2226 = vmatprep.subr.mxu0 0.0
  %2227 = vmatpush1.msra.mxu0 %v2197
  %2228 = vmatprep.subr.mxu0 0.0
  %2229 = vmatpush1.msra.mxu0 %v2198
  %2230 = vmatprep.subr.mxu0 0.0
  %2231 = vmatpush1.msra.mxu0 %v2199
  %2232 = vmatprep.subr.mxu0 0.0
  %2233 = vmatpush1.msra.mxu0 0.0
  %2234 = vmatprep.subr.mxu0 0.0
  %2235 = vmatpush1.msra.mxu0 0.0
  %2236 = vmatprep.subr.mxu0 0.0
  %2237 = vmatpush1.msra.mxu0 0.0
  %2238 = vmatprep.subr.mxu0 0.0
  %2239 = vmatpush1.msra.mxu0 0.0
  %2240 = vmatprep.subr.mxu0 0.0
  %2241 = vmatpush1.msra.mxu0 0.0
  %2242 = vmatprep.subr.mxu0 0.0
  %2243 = vmatpush1.msra.mxu0 0.0
  %2244 = vmatprep.subr.mxu0 0.0
  %2245 = vmatpush1.msra.mxu0 0.0
  %2246 = vmatprep.subr.mxu0 0.0
  %2247 = vmatpush1.msra.mxu0 0.0
  %2248 = vmatprep.subr.mxu0 0.0
  %2249 = vmatpush1.msra.mxu0 0.0
  %2250 = vmatprep.subr.mxu0 0.0
  %2251 = vmatpush1.msra.mxu0 0.0
  %2252 = vmatprep.subr.mxu0 0.0
  %2253 = vmatpush1.msra.mxu0 0.0
  %2254 = vmatprep.subr.mxu0 0.0
  %2255 = vmatpush1.msra.mxu0 0.0
  %2256 = vmatprep.subr.mxu0 0.0
  %2257 = vmatpush1.msra.mxu0 0.0
  %2258 = vmatprep.subr.mxu0 0.0
  %2259 = vmatpush1.msra.mxu0 0.0
  %2260 = vmatprep.subr.mxu0 0.0
  %2261 = vmatpush1.msra.mxu0 0.0
  %2262 = vmatprep.subr.mxu0 0.0
  %2263 = vmatpush1.msra.mxu0 0.0
  %2264 = vmatprep.mubr.f32.mxu0 0.0
  %2265 = vmatmul.mubr.f32.gmra.mrb[0].mxu0 %v1989
  %v2266 = vpop.f32.mrb[0].mxu0
  %v2267 = vadd.f32 0.0, %v2266
  %v2268 = vpop.f32.mrb[0].mxu0
  %2269 = vdwg.mxu0
  %2270 = vmatprep.subr.mxu0 0.0
  %2271 = vmatpush1.msra.mxu0 %v2168
  %2272 = vmatprep.subr.mxu0 0.0
  %2273 = vmatpush1.msra.mxu0 %v2169
  %2274 = vmatprep.subr.mxu0 0.0
  %2275 = vmatpush1.msra.mxu0 %v2170
  %2276 = vmatprep.subr.mxu0 0.0
  %2277 = vmatpush1.msra.mxu0 %v2171
  %2278 = vmatprep.subr.mxu0 0.0
  %2279 = vmatpush1.msra.mxu0 %v2172
  %2280 = vmatprep.subr.mxu0 0.0
  %2281 = vmatpush1.msra.mxu0 %v2173
  %2282 = vmatprep.subr.mxu0 0.0
  %2283 = vmatpush1.msra.mxu0 %v2174
  %2284 = vmatprep.subr.mxu0 0.0
  %2285 = vmatpush1.msra.mxu0 %v2175
  %2286 = vmatprep.subr.mxu0 0.0
  %2287 = vmatpush1.msra.mxu0 %v2176
  %2288 = vmatprep.subr.mxu0 0.0
  %2289 = vmatpush1.msra.mxu0 %v2177
  %2290 = vmatprep.subr.mxu0 0.0
  %2291 = vmatpush1.msra.mxu0 %v2178
  %2292 = vmatprep.subr.mxu0 0.0
  %2293 = vmatpush1.msra.mxu0 %v2179
  %2294 = vmatprep.subr.mxu0 0.0
  %2295 = vmatpush1.msra.mxu0 %v2180
  %2296 = vmatprep.subr.mxu0 0.0
  %2297 = vmatpush1.msra.mxu0 %v2181
  %2298 = vmatprep.subr.mxu0 0.0
  %2299 = vmatpush1.msra.mxu0 %v2182
  %2300 = vmatprep.subr.mxu0 0.0
  %2301 = vmatpush1.msra.mxu0 %v2183
  %2302 = vmatprep.subr.mxu0 0.0
  %2303 = vmatpush1.msra.mxu0 0.0
  %2304 = vmatprep.subr.mxu0 0.0
  %2305 = vmatpush1.msra.mxu0 0.0
  %2306 = vmatprep.subr.mxu0 0.0
  %2307 = vmatpush1.msra.mxu0 0.0
  %2308 = vmatprep.subr.mxu0 0.0
  %2309 = vmatpush1.msra.mxu0 0.0
  %2310 = vmatprep.subr.mxu0 0.0
  %2311 = vmatpush1.msra.mxu0 0.0
  %2312 = vmatprep.subr.mxu0 0.0
  %2313 = vmatpush1.msra.mxu0 0.0
  %2314 = vmatprep.subr.mxu0 0.0
  %2315 = vmatpush1.msra.mxu0 0.0
  %2316 = vmatprep.subr.mxu0 0.0
  %2317 = vmatpush1.msra.mxu0 0.0
  %2318 = vmatprep.subr.mxu0 0.0
  %2319 = vmatpush1.msra.mxu0 0.0
  %2320 = vmatprep.subr.mxu0 0.0
  %2321 = vmatpush1.msra.mxu0 0.0
  %2322 = vmatprep.subr.mxu0 0.0
  %2323 = vmatpush1.msra.mxu0 0.0
  %2324 = vmatprep.subr.mxu0 0.0
  %2325 = vmatpush1.msra.mxu0 0.0
  %2326 = vmatprep.subr.mxu0 0.0
  %2327 = vmatpush1.msra.mxu0 0.0
  %2328 = vmatprep.subr.mxu0 0.0
  %2329 = vmatpush1.msra.mxu0 0.0
  %2330 = vmatprep.subr.mxu0 0.0
  %2331 = vmatpush1.msra.mxu0 0.0
  %2332 = vmatprep.subr.mxu0 0.0
  %2333 = vmatpush1.msra.mxu0 0.0
  %2334 = vmatprep.mubr.f32.mxu0 0.0
  %2335 = vmatmul.mubr.f32.gmra.mrb[0].mxu0 %v2167
  %v2336 = vpop.f32.mrb[0].mxu0
  %v2337 = vadd.f32 %v2267, %v2336
  %v2338 = vpop.f32.mrb[0].mxu0
  %2339 = vdwg.mxu0
  %v2340 = vadd.f32 %v2337, %v44
  %v2341 = vtanh.pop %v2340
  %v2342 = vld [vmem:[%s5] sm:$0xff]
  %v2343 = vld [vmem:[%s5 + $0x8] sm:$0xff]
  %v2344 = vld [vmem:[%s5 + $0x10] sm:$0xff]
  %v2345 = vld [vmem:[%s5 + $0x18] sm:$0xff]
  %v2346 = vld [vmem:[%s5 + $0x20] sm:$0xff]
  %v2347 = vld [vmem:[%s5 + $0x28] sm:$0xff]
  %v2348 = vld [vmem:[%s5 + $0x30] sm:$0xff]
  %v2349 = vld [vmem:[%s5 + $0x38] sm:$0xff]
  %v2350 = vld [vmem:[%s5 + $0x40] sm:$0xff]
  %v2351 = vld [vmem:[%s5 + $0x48] sm:$0xff]
  %v2352 = vld [vmem:[%s5 + $0x50] sm:$0xff]
  %v2353 = vld [vmem:[%s5 + $0x58] sm:$0xff]
  %v2354 = vld [vmem:[%s5 + $0x60] sm:$0xff]
  %v2355 = vld [vmem:[%s5 + $0x68] sm:$0xff]
  %v2356 = vld [vmem:[%s5 + $0x70] sm:$0xff]
  %v2357 = vld [vmem:[%s5 + $0x78] sm:$0xff]
  %v2358 = vld [vmem:[%s6] sm:$0xff]
  %v2359 = vld [vmem:[%s6 + $0x8] sm:$0xff]
  %v2360 = vld [vmem:[%s6 + $0x10] sm:$0xff]
  %v2361 = vld [vmem:[%s6 + $0x18] sm:$0xff]
  %v2362 = vld [vmem:[%s6 + $0x20] sm:$0xff]
  %v2363 = vld [vmem:[%s6 + $0x28] sm:$0xff]
  %v2364 = vld [vmem:[%s6 + $0x30] sm:$0xff]
  %v2365 = vld [vmem:[%s6 + $0x38] sm:$0xff]
  %v2366 = vld [vmem:[%s6 + $0x40] sm:$0xff]
  %v2367 = vld [vmem:[%s6 + $0x48] sm:$0xff]
  %v2368 = vld [vmem:[%s6 + $0x50] sm:$0xff]
  %v2369 = vld [vmem:[%s6 + $0x58] sm:$0xff]
  %v2370 = vld [vmem:[%s6 + $0x60] sm:$0xff]
  %v2371 = vld [vmem:[%s6 + $0x68] sm:$0xff]
  %v2372 = vld [vmem:[%s6 + $0x70] sm:$0xff]
  %v2373 = vld [vmem:[%s6 + $0x78] sm:$0xff]
  %2374 = vmatprep.subr.mxu0 0.0
  %2375 = vmatpush1.msra.mxu0 %v2358
  %2376 = vmatprep.subr.mxu0 0.0
  %2377 = vmatpush1.msra.mxu0 %v2359
  %2378 = vmatprep.subr.mxu0 0.0
  %2379 = vmatpush1.msra.mxu0 %v2360
  %2380 = vmatprep.subr.mxu0 0.0
  %2381 = vmatpush1.msra.mxu0 %v2361
  %2382 = vmatprep.subr.mxu0 0.0
  %2383 = vmatpush1.msra.mxu0 %v2362
  %2384 = vmatprep.subr.mxu0 0.0
  %2385 = vmatpush1.msra.mxu0 %v2363
  %2386 = vmatprep.subr.mxu0 0.0
  %2387 = vmatpush1.msra.mxu0 %v2364
  %2388 = vmatprep.subr.mxu0 0.0
  %2389 = vmatpush1.msra.mxu0 %v2365
  %2390 = vmatprep.subr.mxu0 0.0
  %2391 = vmatpush1.msra.mxu0 %v2366
  %2392 = vmatprep.subr.mxu0 0.0
  %2393 = vmatpush1.msra.mxu0 %v2367
  %2394 = vmatprep.subr.mxu0 0.0
  %2395 = vmatpush1.msra.mxu0 %v2368
  %2396 = vmatprep.subr.mxu0 0.0
  %2397 = vmatpush1.msra.mxu0 %v2369
  %2398 = vmatprep.subr.mxu0 0.0
  %2399 = vmatpush1.msra.mxu0 %v2370
  %2400 = vmatprep.subr.mxu0 0.0
  %2401 = vmatpush1.msra.mxu0 %v2371
  %2402 = vmatprep.subr.mxu0 0.0
  %2403 = vmatpush1.msra.mxu0 %v2372
  %2404 = vmatprep.subr.mxu0 0.0
  %2405 = vmatpush1.msra.mxu0 %v2373
  %2406 = vmatprep.subr.mxu0 0.0
  %2407 = vmatpush1.msra.mxu0 0.0
  %2408 = vmatprep.subr.mxu0 0.0
  %2409 = vmatpush1.msra.mxu0 0.0
  %2410 = vmatprep.subr.mxu0 0.0
  %2411 = vmatpush1.msra.mxu0 0.0
  %2412 = vmatprep.subr.mxu0 0.0
  %2413 = vmatpush1.msra.mxu0 0.0
  %2414 = vmatprep.subr.mxu0 0.0
  %2415 = vmatpush1.msra.mxu0 0.0
  %2416 = vmatprep.subr.mxu0 0.0
  %2417 = vmatpush1.msra.mxu0 0.0
  %2418 = vmatprep.subr.mxu0 0.0
  %2419 = vmatpush1.msra.mxu0 0.0
  %2420 = vmatprep.subr.mxu0 0.0
  %2421 = vmatpush1.msra.mxu0 0.0
  %2422 = vmatprep.subr.mxu0 0.0
  %2423 = vmatpush1.msra.mxu0 0.0
  %2424 = vmatprep.subr.mxu0 0.0
  %2425 = vmatpush1.msra.mxu0 0.0
  %2426 = vmatprep.subr.mxu0 0.0
  %2427 = vmatpush1.msra.mxu0 0.0
  %2428 = vmatprep.subr.mxu0 0.0
  %2429 = vmatpush1.msra.mxu0 0.0
  %2430 = vmatprep.subr.mxu0 0.0
  %2431 = vmatpush1.msra.mxu0 0.0
  %2432 = vmatprep.subr.mxu0 0.0
  %2433 = vmatpush1.msra.mxu0 0.0
  %2434 = vmatprep.subr.mxu0 0.0
  %2435 = vmatpush1.msra.mxu0 0.0
  %2436 = vmatprep.subr.mxu0 0.0
  %2437 = vmatpush1.msra.mxu0 0.0
  %2438 = vmatprep.mubr.f32.mxu0 0.0
  %2439 = vmatmul.mubr.f32.gmra.mrb[0].mxu0 %v2163
  %v2440 = vpop.f32.mrb[0].mxu0
  %v2441 = vadd.f32 0.0, %v2440
  %v2442 = vpop.f32.mrb[0].mxu0
  %2443 = vdwg.mxu0
  %2444 = vmatprep.subr.mxu0 0.0
  %2445 = vmatpush1.msra.mxu0 %v2342
  %2446 = vmatprep.subr.mxu0 0.0
  %2447 = vmatpush1.msra.mxu0 %v2343
  %2448 = vmatprep.subr.mxu0 0.0
  %2449 = vmatpush1.msra.mxu0 %v2344
  %2450 = vmatprep.subr.mxu0 0.0
  %2451 = vmatpush1.msra.mxu0 %v2345
  %2452 = vmatprep.subr.mxu0 0.0
  %2453 = vmatpush1.msra.mxu0 %v2346
  %2454 = vmatprep.subr.mxu0 0.0
  %2455 = vmatpush1.msra.mxu0 %v2347
  %2456 = vmatprep.subr.mxu0 0.0
  %2457 = vmatpush1.msra.mxu0 %v2348
  %2458 = vmatprep.subr.mxu0 0.0
  %2459 = vmatpush1.msra.mxu0 %v2349
  %2460 = vmatprep.subr.mxu0 0.0
  %2461 = vmatpush1.msra.mxu0 %v2350
  %2462 = vmatprep.subr.mxu0 0.0
  %2463 = vmatpush1.msra.mxu0 %v2351
  %2464 = vmatprep.subr.mxu0 0.0
  %2465 = vmatpush1.msra.mxu0 %v2352
  %2466 = vmatprep.subr.mxu0 0.0
  %2467 = vmatpush1.msra.mxu0 %v2353
  %2468 = vmatprep.subr.mxu0 0.0
  %2469 = vmatpush1.msra.mxu0 %v2354
  %2470 = vmatprep.subr.mxu0 0.0
  %2471 = vmatpush1.msra.mxu0 %v2355
  %2472 = vmatprep.subr.mxu0 0.0
  %2473 = vmatpush1.msra.mxu0 %v2356
  %2474 = vmatprep.subr.mxu0 0.0
  %2475 = vmatpush1.msra.mxu0 %v2357
  %2476 = vmatprep.subr.mxu0 0.0
  %2477 = vmatpush1.msra.mxu0 0.0
  %2478 = vmatprep.subr.mxu0 0.0
  %2479 = vmatpush1.msra.mxu0 0.0
  %2480 = vmatprep.subr.mxu0 0.0
  %2481 = vmatpush1.msra.mxu0 0.0
  %2482 = vmatprep.subr.mxu0 0.0
  %2483 = vmatpush1.msra.mxu0 0.0
  %2484 = vmatprep.subr.mxu0 0.0
  %2485 = vmatpush1.msra.mxu0 0.0
  %2486 = vmatprep.subr.mxu0 0.0
  %2487 = vmatpush1.msra.mxu0 0.0
  %2488 = vmatprep.subr.mxu0 0.0
  %2489 = vmatpush1.msra.mxu0 0.0
  %2490 = vmatprep.subr.mxu0 0.0
  %2491 = vmatpush1.msra.mxu0 0.0
  %2492 = vmatprep.subr.mxu0 0.0
  %2493 = vmatpush1.msra.mxu0 0.0
  %2494 = vmatprep.subr.mxu0 0.0
  %2495 = vmatpush1.msra.mxu0 0.0
  %2496 = vmatprep.subr.mxu0 0.0
  %2497 = vmatpush1.msra.mxu0 0.0
  %2498 = vmatprep.subr.mxu0 0.0
  %2499 = vmatpush1.msra.mxu0 0.0
  %2500 = vmatprep.subr.mxu0 0.0
  %2501 = vmatpush1.msra.mxu0 0.0
  %2502 = vmatprep.subr.mxu0 0.0
  %2503 = vmatpush1.msra.mxu0 0.0
  %2504 = vmatprep.subr.mxu0 0.0
  %2505 = vmatpush1.msra.mxu0 0.0
  %2506 = vmatprep.subr.mxu0 0.0
  %2507 = vmatpush1.msra.mxu0 0.0
  %2508 = vmatprep.mubr.f32.mxu0 0.0
  %2509 = vmatmul.mubr.f32.gmra.mrb[0].mxu0 %v2341
  %v2510 = vpop.f32.mrb[0].mxu0
  %v2511 = vadd.f32 %v2441, %v2510
  %v2512 = vpop.f32.mrb[0].mxu0
  %2513 = vdwg.mxu0
  %v2514 = vadd.f32 %v2511, %v51
  %v2515 = vtanh.pop %v2514
  %s2516 = scalar_lea.vmem %s8, 48
  %2517 = vst [vmem:[%s2516] sm:$0xff] %v2515
  %s2518 = scalar_lea.vmem %s0, 56
  %v2519 = vld [vmem:[%s2518] sm:$0xff]
  %v2520 = vld [vmem:[%s2] sm:$0xff]
  %v2521 = vld [vmem:[%s2 + $0x8] sm:$0xff]
  %v2522 = vld [vmem:[%s2 + $0x10] sm:$0xff]
  %v2523 = vld [vmem:[%s2 + $0x18] sm:$0xff]
  %v2524 = vld [vmem:[%s2 + $0x20] sm:$0xff]
  %v2525 = vld [vmem:[%s2 + $0x28] sm:$0xff]
  %v2526 = vld [vmem:[%s2 + $0x30] sm:$0xff]
  %v2527 = vld [vmem:[%s2 + $0x38] sm:$0xff]
  %v2528 = vld [vmem:[%s2 + $0x40] sm:$0xff]
  %v2529 = vld [vmem:[%s2 + $0x48] sm:$0xff]
  %v2530 = vld [vmem:[%s2 + $0x50] sm:$0xff]
  %v2531 = vld [vmem:[%s2 + $0x58] sm:$0xff]
  %v2532 = vld [vmem:[%s2 + $0x60] sm:$0xff]
  %v2533 = vld [vmem:[%s2 + $0x68] sm:$0xff]
  %v2534 = vld [vmem:[%s2 + $0x70] sm:$0xff]
  %v2535 = vld [vmem:[%s2 + $0x78] sm:$0xff]
  %v2536 = vld [vmem:[%s3] sm:$0xff]
  %v2537 = vld [vmem:[%s3 + $0x8] sm:$0xff]
  %v2538 = vld [vmem:[%s3 + $0x10] sm:$0xff]
  %v2539 = vld [vmem:[%s3 + $0x18] sm:$0xff]
  %v2540 = vld [vmem:[%s3 + $0x20] sm:$0xff]
  %v2541 = vld [vmem:[%s3 + $0x28] sm:$0xff]
  %v2542 = vld [vmem:[%s3 + $0x30] sm:$0xff]
  %v2543 = vld [vmem:[%s3 + $0x38] sm:$0xff]
  %v2544 = vld [vmem:[%s3 + $0x40] sm:$0xff]
  %v2545 = vld [vmem:[%s3 + $0x48] sm:$0xff]
  %v2546 = vld [vmem:[%s3 + $0x50] sm:$0xff]
  %v2547 = vld [vmem:[%s3 + $0x58] sm:$0xff]
  %v2548 = vld [vmem:[%s3 + $0x60] sm:$0xff]
  %v2549 = vld [vmem:[%s3 + $0x68] sm:$0xff]
  %v2550 = vld [vmem:[%s3 + $0x70] sm:$0xff]
  %v2551 = vld [vmem:[%s3 + $0x78] sm:$0xff]
  %2552 = vmatprep.subr.mxu0 0.0
  %2553 = vmatpush1.msra.mxu0 %v2536
  %2554 = vmatprep.subr.mxu0 0.0
  %2555 = vmatpush1.msra.mxu0 %v2537
  %2556 = vmatprep.subr.mxu0 0.0
  %2557 = vmatpush1.msra.mxu0 %v2538
  %2558 = vmatprep.subr.mxu0 0.0
  %2559 = vmatpush1.msra.mxu0 %v2539
  %2560 = vmatprep.subr.mxu0 0.0
  %2561 = vmatpush1.msra.mxu0 %v2540
  %2562 = vmatprep.subr.mxu0 0.0
  %2563 = vmatpush1.msra.mxu0 %v2541
  %2564 = vmatprep.subr.mxu0 0.0
  %2565 = vmatpush1.msra.mxu0 %v2542
  %2566 = vmatprep.subr.mxu0 0.0
  %2567 = vmatpush1.msra.mxu0 %v2543
  %2568 = vmatprep.subr.mxu0 0.0
  %2569 = vmatpush1.msra.mxu0 %v2544
  %2570 = vmatprep.subr.mxu0 0.0
  %2571 = vmatpush1.msra.mxu0 %v2545
  %2572 = vmatprep.subr.mxu0 0.0
  %2573 = vmatpush1.msra.mxu0 %v2546
  %2574 = vmatprep.subr.mxu0 0.0
  %2575 = vmatpush1.msra.mxu0 %v2547
  %2576 = vmatprep.subr.mxu0 0.0
  %2577 = vmatpush1.msra.mxu0 %v2548
  %2578 = vmatprep.subr.mxu0 0.0
  %2579 = vmatpush1.msra.mxu0 %v2549
  %2580 = vmatprep.subr.mxu0 0.0
  %2581 = vmatpush1.msra.mxu0 %v2550
  %2582 = vmatprep.subr.mxu0 0.0
  %2583 = vmatpush1.msra.mxu0 %v2551
  %2584 = vmatprep.subr.mxu0 0.0
  %2585 = vmatpush1.msra.mxu0 0.0
  %2586 = vmatprep.subr.mxu0 0.0
  %2587 = vmatpush1.msra.mxu0 0.0
  %2588 = vmatprep.subr.mxu0 0.0
  %2589 = vmatpush1.msra.mxu0 0.0
  %2590 = vmatprep.subr.mxu0 0.0
  %2591 = vmatpush1.msra.mxu0 0.0
  %2592 = vmatprep.subr.mxu0 0.0
  %2593 = vmatpush1.msra.mxu0 0.0
  %2594 = vmatprep.subr.mxu0 0.0
  %2595 = vmatpush1.msra.mxu0 0.0
  %2596 = vmatprep.subr.mxu0 0.0
  %2597 = vmatpush1.msra.mxu0 0.0
  %2598 = vmatprep.subr.mxu0 0.0
  %2599 = vmatpush1.msra.mxu0 0.0
  %2600 = vmatprep.subr.mxu0 0.0
  %2601 = vmatpush1.msra.mxu0 0.0
  %2602 = vmatprep.subr.mxu0 0.0
  %2603 = vmatpush1.msra.mxu0 0.0
  %2604 = vmatprep.subr.mxu0 0.0
  %2605 = vmatpush1.msra.mxu0 0.0
  %2606 = vmatprep.subr.mxu0 0.0
  %2607 = vmatpush1.msra.mxu0 0.0
  %2608 = vmatprep.subr.mxu0 0.0
  %2609 = vmatpush1.msra.mxu0 0.0
  %2610 = vmatprep.subr.mxu0 0.0
  %2611 = vmatpush1.msra.mxu0 0.0
  %2612 = vmatprep.subr.mxu0 0.0
  %2613 = vmatpush1.msra.mxu0 0.0
  %2614 = vmatprep.subr.mxu0 0.0
  %2615 = vmatpush1.msra.mxu0 0.0
  %2616 = vmatprep.mubr.f32.mxu0 0.0
  %2617 = vmatmul.mubr.f32.gmra.mrb[0].mxu0 %v2341
  %v2618 = vpop.f32.mrb[0].mxu0
  %v2619 = vadd.f32 0.0, %v2618
  %v2620 = vpop.f32.mrb[0].mxu0
  %2621 = vdwg.mxu0
  %2622 = vmatprep.subr.mxu0 0.0
  %2623 = vmatpush1.msra.mxu0 %v2520
  %2624 = vmatprep.subr.mxu0 0.0
  %2625 = vmatpush1.msra.mxu0 %v2521
  %2626 = vmatprep.subr.mxu0 0.0
  %2627 = vmatpush1.msra.mxu0 %v2522
  %2628 = vmatprep.subr.mxu0 0.0
  %2629 = vmatpush1.msra.mxu0 %v2523
  %2630 = vmatprep.subr.mxu0 0.0
  %2631 = vmatpush1.msra.mxu0 %v2524
  %2632 = vmatprep.subr.mxu0 0.0
  %2633 = vmatpush1.msra.mxu0 %v2525
  %2634 = vmatprep.subr.mxu0 0.0
  %2635 = vmatpush1.msra.mxu0 %v2526
  %2636 = vmatprep.subr.mxu0 0.0
  %2637 = vmatpush1.msra.mxu0 %v2527
  %2638 = vmatprep.subr.mxu0 0.0
  %2639 = vmatpush1.msra.mxu0 %v2528
  %2640 = vmatprep.subr.mxu0 0.0
  %2641 = vmatpush1.msra.mxu0 %v2529
  %2642 = vmatprep.subr.mxu0 0.0
  %2643 = vmatpush1.msra.mxu0 %v2530
  %2644 = vmatprep.subr.mxu0 0.0
  %2645 = vmatpush1.msra.mxu0 %v2531
  %2646 = vmatprep.subr.mxu0 0.0
  %2647 = vmatpush1.msra.mxu0 %v2532
  %2648 = vmatprep.subr.mxu0 0.0
  %2649 = vmatpush1.msra.mxu0 %v2533
  %2650 = vmatprep.subr.mxu0 0.0
  %2651 = vmatpush1.msra.mxu0 %v2534
  %2652 = vmatprep.subr.mxu0 0.0
  %2653 = vmatpush1.msra.mxu0 %v2535
  %2654 = vmatprep.subr.mxu0 0.0
  %2655 = vmatpush1.msra.mxu0 0.0
  %2656 = vmatprep.subr.mxu0 0.0
  %2657 = vmatpush1.msra.mxu0 0.0
  %2658 = vmatprep.subr.mxu0 0.0
  %2659 = vmatpush1.msra.mxu0 0.0
  %2660 = vmatprep.subr.mxu0 0.0
  %2661 = vmatpush1.msra.mxu0 0.0
  %2662 = vmatprep.subr.mxu0 0.0
  %2663 = vmatpush1.msra.mxu0 0.0
  %2664 = vmatprep.subr.mxu0 0.0
  %2665 = vmatpush1.msra.mxu0 0.0
  %2666 = vmatprep.subr.mxu0 0.0
  %2667 = vmatpush1.msra.mxu0 0.0
  %2668 = vmatprep.subr.mxu0 0.0
  %2669 = vmatpush1.msra.mxu0 0.0
  %2670 = vmatprep.subr.mxu0 0.0
  %2671 = vmatpush1.msra.mxu0 0.0
  %2672 = vmatprep.subr.mxu0 0.0
  %2673 = vmatpush1.msra.mxu0 0.0
  %2674 = vmatprep.subr.mxu0 0.0
  %2675 = vmatpush1.msra.mxu0 0.0
  %2676 = vmatprep.subr.mxu0 0.0
  %2677 = vmatpush1.msra.mxu0 0.0
  %2678 = vmatprep.subr.mxu0 0.0
  %2679 = vmatpush1.msra.mxu0 0.0
  %2680 = vmatprep.subr.mxu0 0.0
  %2681 = vmatpush1.msra.mxu0 0.0
  %2682 = vmatprep.subr.mxu0 0.0
  %2683 = vmatpush1.msra.mxu0 0.0
  %2684 = vmatprep.subr.mxu0 0.0
  %2685 = vmatpush1.msra.mxu0 0.0
  %2686 = vmatprep.mubr.f32.mxu0 0.0
  %2687 = vmatmul.mubr.f32.gmra.mrb[0].mxu0 %v2519
  %v2688 = vpop.f32.mrb[0].mxu0
  %v2689 = vadd.f32 %v2619, %v2688
  %v2690 = vpop.f32.mrb[0].mxu0
  %2691 = vdwg.mxu0
  %v2692 = vadd.f32 %v2689, %v44
  %v2693 = vtanh.pop %v2692
  %v2694 = vld [vmem:[%s5] sm:$0xff]
  %v2695 = vld [vmem:[%s5 + $0x8] sm:$0xff]
  %v2696 = vld [vmem:[%s5 + $0x10] sm:$0xff]
  %v2697 = vld [vmem:[%s5 + $0x18] sm:$0xff]
  %v2698 = vld [vmem:[%s5 + $0x20] sm:$0xff]
  %v2699 = vld [vmem:[%s5 + $0x28] sm:$0xff]
  %v2700 = vld [vmem:[%s5 + $0x30] sm:$0xff]
  %v2701 = vld [vmem:[%s5 + $0x38] sm:$0xff]
  %v2702 = vld [vmem:[%s5 + $0x40] sm:$0xff]
  %v2703 = vld [vmem:[%s5 + $0x48] sm:$0xff]
  %v2704 = vld [vmem:[%s5 + $0x50] sm:$0xff]
  %v2705 = vld [vmem:[%s5 + $0x58] sm:$0xff]
  %v2706 = vld [vmem:[%s5 + $0x60] sm:$0xff]
  %v2707 = vld [vmem:[%s5 + $0x68] sm:$0xff]
  %v2708 = vld [vmem:[%s5 + $0x70] sm:$0xff]
  %v2709 = vld [vmem:[%s5 + $0x78] sm:$0xff]
  %v2710 = vld [vmem:[%s6] sm:$0xff]
  %v2711 = vld [vmem:[%s6 + $0x8] sm:$0xff]
  %v2712 = vld [vmem:[%s6 + $0x10] sm:$0xff]
  %v2713 = vld [vmem:[%s6 + $0x18] sm:$0xff]
  %v2714 = vld [vmem:[%s6 + $0x20] sm:$0xff]
  %v2715 = vld [vmem:[%s6 + $0x28] sm:$0xff]
  %v2716 = vld [vmem:[%s6 + $0x30] sm:$0xff]
  %v2717 = vld [vmem:[%s6 + $0x38] sm:$0xff]
  %v2718 = vld [vmem:[%s6 + $0x40] sm:$0xff]
  %v2719 = vld [vmem:[%s6 + $0x48] sm:$0xff]
  %v2720 = vld [vmem:[%s6 + $0x50] sm:$0xff]
  %v2721 = vld [vmem:[%s6 + $0x58] sm:$0xff]
  %v2722 = vld [vmem:[%s6 + $0x60] sm:$0xff]
  %v2723 = vld [vmem:[%s6 + $0x68] sm:$0xff]
  %v2724 = vld [vmem:[%s6 + $0x70] sm:$0xff]
  %v2725 = vld [vmem:[%s6 + $0x78] sm:$0xff]
  %2726 = vmatprep.subr.mxu0 0.0
  %2727 = vmatpush1.msra.mxu0 %v2710
  %2728 = vmatprep.subr.mxu0 0.0
  %2729 = vmatpush1.msra.mxu0 %v2711
  %2730 = vmatprep.subr.mxu0 0.0
  %2731 = vmatpush1.msra.mxu0 %v2712
  %2732 = vmatprep.subr.mxu0 0.0
  %2733 = vmatpush1.msra.mxu0 %v2713
  %2734 = vmatprep.subr.mxu0 0.0
  %2735 = vmatpush1.msra.mxu0 %v2714
  %2736 = vmatprep.subr.mxu0 0.0
  %2737 = vmatpush1.msra.mxu0 %v2715
  %2738 = vmatprep.subr.mxu0 0.0
  %2739 = vmatpush1.msra.mxu0 %v2716
  %2740 = vmatprep.subr.mxu0 0.0
  %2741 = vmatpush1.msra.mxu0 %v2717
  %2742 = vmatprep.subr.mxu0 0.0
  %2743 = vmatpush1.msra.mxu0 %v2718
  %2744 = vmatprep.subr.mxu0 0.0
  %2745 = vmatpush1.msra.mxu0 %v2719
  %2746 = vmatprep.subr.mxu0 0.0
  %2747 = vmatpush1.msra.mxu0 %v2720
  %2748 = vmatprep.subr.mxu0 0.0
  %2749 = vmatpush1.msra.mxu0 %v2721
  %2750 = vmatprep.subr.mxu0 0.0
  %2751 = vmatpush1.msra.mxu0 %v2722
  %2752 = vmatprep.subr.mxu0 0.0
  %2753 = vmatpush1.msra.mxu0 %v2723
  %2754 = vmatprep.subr.mxu0 0.0
  %2755 = vmatpush1.msra.mxu0 %v2724
  %2756 = vmatprep.subr.mxu0 0.0
  %2757 = vmatpush1.msra.mxu0 %v2725
  %2758 = vmatprep.subr.mxu0 0.0
  %2759 = vmatpush1.msra.mxu0 0.0
  %2760 = vmatprep.subr.mxu0 0.0
  %2761 = vmatpush1.msra.mxu0 0.0
  %2762 = vmatprep.subr.mxu0 0.0
  %2763 = vmatpush1.msra.mxu0 0.0
  %2764 = vmatprep.subr.mxu0 0.0
  %2765 = vmatpush1.msra.mxu0 0.0
  %2766 = vmatprep.subr.mxu0 0.0
  %2767 = vmatpush1.msra.mxu0 0.0
  %2768 = vmatprep.subr.mxu0 0.0
  %2769 = vmatpush1.msra.mxu0 0.0
  %2770 = vmatprep.subr.mxu0 0.0
  %2771 = vmatpush1.msra.mxu0 0.0
  %2772 = vmatprep.subr.mxu0 0.0
  %2773 = vmatpush1.msra.mxu0 0.0
  %2774 = vmatprep.subr.mxu0 0.0
  %2775 = vmatpush1.msra.mxu0 0.0
  %2776 = vmatprep.subr.mxu0 0.0
  %2777 = vmatpush1.msra.mxu0 0.0
  %2778 = vmatprep.subr.mxu0 0.0
  %2779 = vmatpush1.msra.mxu0 0.0
  %2780 = vmatprep.subr.mxu0 0.0
  %2781 = vmatpush1.msra.mxu0 0.0
  %2782 = vmatprep.subr.mxu0 0.0
  %2783 = vmatpush1.msra.mxu0 0.0
  %2784 = vmatprep.subr.mxu0 0.0
  %2785 = vmatpush1.msra.mxu0 0.0
  %2786 = vmatprep.subr.mxu0 0.0
  %2787 = vmatpush1.msra.mxu0 0.0
  %2788 = vmatprep.subr.mxu0 0.0
  %2789 = vmatpush1.msra.mxu0 0.0
  %2790 = vmatprep.mubr.f32.mxu0 0.0
  %2791 = vmatmul.mubr.f32.gmra.mrb[0].mxu0 %v2515
  %v2792 = vpop.f32.mrb[0].mxu0
  %v2793 = vadd.f32 0.0, %v2792
  %v2794 = vpop.f32.mrb[0].mxu0
  %2795 = vdwg.mxu0
  %2796 = vmatprep.subr.mxu0 0.0
  %2797 = vmatpush1.msra.mxu0 %v2694
  %2798 = vmatprep.subr.mxu0 0.0
  %2799 = vmatpush1.msra.mxu0 %v2695
  %2800 = vmatprep.subr.mxu0 0.0
  %2801 = vmatpush1.msra.mxu0 %v2696
  %2802 = vmatprep.subr.mxu0 0.0
  %2803 = vmatpush1.msra.mxu0 %v2697
  %2804 = vmatprep.subr.mxu0 0.0
  %2805 = vmatpush1.msra.mxu0 %v2698
  %2806 = vmatprep.subr.mxu0 0.0
  %2807 = vmatpush1.msra.mxu0 %v2699
  %2808 = vmatprep.subr.mxu0 0.0
  %2809 = vmatpush1.msra.mxu0 %v2700
  %2810 = vmatprep.subr.mxu0 0.0
  %2811 = vmatpush1.msra.mxu0 %v2701
  %2812 = vmatprep.subr.mxu0 0.0
  %2813 = vmatpush1.msra.mxu0 %v2702
  %2814 = vmatprep.subr.mxu0 0.0
  %2815 = vmatpush1.msra.mxu0 %v2703
  %2816 = vmatprep.subr.mxu0 0.0
  %2817 = vmatpush1.msra.mxu0 %v2704
  %2818 = vmatprep.subr.mxu0 0.0
  %2819 = vmatpush1.msra.mxu0 %v2705
  %2820 = vmatprep.subr.mxu0 0.0
  %2821 = vmatpush1.msra.mxu0 %v2706
  %2822 = vmatprep.subr.mxu0 0.0
  %2823 = vmatpush1.msra.mxu0 %v2707
  %2824 = vmatprep.subr.mxu0 0.0
  %2825 = vmatpush1.msra.mxu0 %v2708
  %2826 = vmatprep.subr.mxu0 0.0
  %2827 = vmatpush1.msra.mxu0 %v2709
  %2828 = vmatprep.subr.mxu0 0.0
  %2829 = vmatpush1.msra.mxu0 0.0
  %2830 = vmatprep.subr.mxu0 0.0
  %2831 = vmatpush1.msra.mxu0 0.0
  %2832 = vmatprep.subr.mxu0 0.0
  %2833 = vmatpush1.msra.mxu0 0.0
  %2834 = vmatprep.subr.mxu0 0.0
  %2835 = vmatpush1.msra.mxu0 0.0
  %2836 = vmatprep.subr.mxu0 0.0
  %2837 = vmatpush1.msra.mxu0 0.0
  %2838 = vmatprep.subr.mxu0 0.0
  %2839 = vmatpush1.msra.mxu0 0.0
  %2840 = vmatprep.subr.mxu0 0.0
  %2841 = vmatpush1.msra.mxu0 0.0
  %2842 = vmatprep.subr.mxu0 0.0
  %2843 = vmatpush1.msra.mxu0 0.0
  %2844 = vmatprep.subr.mxu0 0.0
  %2845 = vmatpush1.msra.mxu0 0.0
  %2846 = vmatprep.subr.mxu0 0.0
  %2847 = vmatpush1.msra.mxu0 0.0
  %2848 = vmatprep.subr.mxu0 0.0
  %2849 = vmatpush1.msra.mxu0 0.0
  %2850 = vmatprep.subr.mxu0 0.0
  %2851 = vmatpush1.msra.mxu0 0.0
  %2852 = vmatprep.subr.mxu0 0.0
  %2853 = vmatpush1.msra.mxu0 0.0
  %2854 = vmatprep.subr.mxu0 0.0
  %2855 = vmatpush1.msra.mxu0 0.0
  %2856 = vmatprep.subr.mxu0 0.0
  %2857 = vmatpush1.msra.mxu0 0.0
  %2858 = vmatprep.subr.mxu0 0.0
  %2859 = vmatpush1.msra.mxu0 0.0
  %2860 = vmatprep.mubr.f32.mxu0 0.0
  %2861 = vmatmul.mubr.f32.gmra.mrb[0].mxu0 %v2693
  %v2862 = vpop.f32.mrb[0].mxu0
  %v2863 = vadd.f32 %v2793, %v2862
  %v2864 = vpop.f32.mrb[0].mxu0
  %2865 = vdwg.mxu0
  %v2866 = vadd.f32 %v2863, %v51
  %v2867 = vtanh.pop %v2866
  %s2868 = scalar_lea.vmem %s8, 56
  %2869 = vst [vmem:[%s2868] sm:$0xff] %v2867
  %2870 = vst [vmem:[#allocation2] sm:$0xff] %v2693
  %2871 = vst [vmem:[%s54] sm:$0xff] %v2867
  // Predicated region
  $region38: #{rnn_decoder_forward.2} parent=0 // pred_check
    %p2872 = pneg %p31
  $region39: #{rnn_decoder_forward.2} parent=0 // pred_check_branch
    %2874 = sbr.rel (%p2872) target = $region41
  $region40: #{rnn_decoder_forward.2} parent=0 // pred_region
    %v2875 = vld [vmem:[#allocation2] sm:$0xff]
    %v2876 = vld [vmem:[#allocation2 + $0x8] sm:$0xff]
    %2877 = vst [vmem:[%s9] sm:$0xff] %v2875
    %2878 = vst [vmem:[%s9 + $0x8] sm:$0xff] %v2876
  $region41: #{rnn_decoder_forward.2} parent=0 // pred_fallthru
    _
  // Predicated region
  $region42: #{rnn_decoder_forward.2} parent=0 // pred_check
    _
  $region43: #{rnn_decoder_forward.2} parent=0 // pred_check_branch
    %2880 = sbr.rel (0) target = $region45
  $region44: #{rnn_decoder_forward.2} parent=0 // pred_region
    _
  $region45: #{rnn_decoder_forward.2} parent=0 // pred_fallthru
    _
  // Predicated region
  $region46: #{rnn_decoder_forward.2} parent=0 // pred_check
    _
  $region47: #{rnn_decoder_forward.2} parent=0 // pred_check_branch
    %2882 = sbr.rel (0) target = $region49
  $region48: #{rnn_decoder_forward.2} parent=0 // pred_region
    _
  $region49: #{rnn_decoder_forward.2} parent=0 // pred_fallthru
    _
  // Predicated region
  $region50: #{rnn_decoder_forward.2} parent=0 // pred_check
    _
  $region51: #{rnn_decoder_forward.2} parent=0 // pred_check_branch
    %2884 = sbr.rel (0) target = $region53
  $region52: #{rnn_decoder_forward.2} parent=0 // pred_region
    _
  $region53: #{rnn_decoder_forward.2} parent=0 // pred_fallthru
    _
  // Predicated region
  $region54: #{rnn_decoder_forward.2} parent=0 // pred_check
    _
  $region55: #{rnn_decoder_forward.2} parent=0 // pred_check_branch
    %2886 = sbr.rel (0) target = $region57
  $region56: #{rnn_decoder_forward.2} parent=0 // pred_region
    _
  $region57: #{rnn_decoder_forward.2} parent=0 // pred_fallthru
    _

</llo_original>
